<compile_context>
chip_gen: v7x
topology: tpu7x:2x2x1
jax: 0.10.0
libtpu: 0.0.40
codegen_flags: <defaults>
</compile_context>

<pallas_src>
import math
from functools import partial

import jax
import jax.numpy as jnp
import numpy as np
from jax import lax
from jax.experimental import pallas as pl
from jax.experimental.pallas import tpu as pltpu

NEG_INF = -1e30                     # finite stand-in for float('-inf') masks (f32-safe)
VMEM_LIMIT = 48 * 1024 * 1024       # portable: < v7x 64 MiB physical, > v5e/v6e defaults
ACT_DTYPE = jnp.bfloat16            # inter-kernel activation dtype (halves HBM traffic)


# ----------------------------- helpers -----------------------------

def _ln_f32(x, g, b, eps=1e-5):
    # LayerNorm over the last dim, statistics in f32 (safe on v5e's no-bf16 VPU).
    mu = jnp.mean(x, axis=-1, keepdims=True)
    xc = x - mu
    var = jnp.mean(xc * xc, axis=-1, keepdims=True)
    return xc * lax.rsqrt(var + eps) * g + b


def _whole(arr):
    # BlockSpec loading the whole array at every grid step; Pallas skips the re-DMA
    # when the block index is unchanged.
    # TODO(synk): pipeline_mode=pl.Buffered(1) would halve the VMEM for these invariant
    # weights; left at the default double-buffering for lowering safety.
    nd = arr.ndim
    return pl.BlockSpec(arr.shape, lambda *_, nd=nd: (0,) * nd)


def _pick_batch_block(B, Lq, Lk, E, budget_bytes=6 << 20):
    # Pack several batch elements per attention grid step, bounded by a per-step f32
    # working-set budget, but keep >=2 parallel grid steps when B>=2 (v7x has 2 TCs).
    per = 4 * (6 * Lq * E + 4 * Lk * E + 2 * Lq * Lk)
    bb = max(1, min(B, budget_bytes // max(per, 1)))
    if B >= 2:
        bb = min(bb, B // 2)
    bb = max(bb, 1)
    while B % bb:
        bb -= 1
    return bb


def _pick_row_tile(x2, block_rows):
    # Row-tiling: large lane-dense row blocks, but at least 2 blocks when possible so
    # v7x's 2 TensorCores both get work. Padded rows are sliced away by the caller.
    n = x2.shape[0]
    if n <= 8:
        return n, x2, n
    half = -(-n // 2)
    half = -(-half // 8) * 8            # sublane-aligned
    tm = min(block_rows, half)
    n_pad = -(-n // tm) * tm
    if n_pad != n:
        x2 = jnp.pad(x2, ((0, n_pad - n), (0, 0)))
    return tm, x2, n_pad


# ------------------- fused attention sub-layer kernel -------------------

def _make_attn_block_kernel(nhead, scale, self_attn, has_mask, has_kpm):
    def kernel(*refs):
        it = iter(refs)
        xq_ref = next(it)
        xkv_ref = xq_ref if self_attn else next(it)
        w_in_ref, b_in_ref = next(it), next(it)
        w_out_ref, b_out_ref = next(it), next(it)
        g_ref, beta_ref = next(it), next(it)
        mask_ref = next(it) if has_mask else None
        kpm_ref = next(it) if has_kpm else None
        o_ref = next(it)
        ctx_ref = next(it)                    # VMEM scratch [bb, Lq, E] f32

        xq = xq_ref[...]                      # [bb, Lq, E] bf16
        bb, Lq, E = xq.shape
        Lk = xkv_ref.shape[1]
        Dh = E // nhead
        w_in = w_in_ref[...]                  # [E, 3E] bf16 (pre-fused QKV weight)
        b_in = b_in_ref[...]                  # [1, 3E] f32

        xq2 = xq.reshape(bb * Lq, E)          # leading-dim merge only (cheap)
        if self_attn:
            # fused QKV projection: one MXU pass
            qkv = jnp.dot(xq2, w_in, preferred_element_type=jnp.float32) + b_in
            q2, k2, v2 = qkv[:, :E], qkv[:, E:2 * E], qkv[:, 2 * E:]
        else:
            xkv2 = xkv_ref[...].reshape(bb * Lk, E)
            q2 = jnp.dot(xq2, w_in[:, :E],
                         preferred_element_type=jnp.float32) + b_in[:, :E]
            kv = jnp.dot(xkv2, w_in[:, E:],
                         preferred_element_type=jnp.float32) + b_in[:, E:]
            k2, v2 = kv[:, :E], kv[:, E:]

        # bf16 casts hoisted (one per tensor); 1/sqrt(Dh) folded into Q once.
        q = (q2 * scale).astype(jnp.bfloat16).reshape(bb, Lq, E)
        k = k2.astype(jnp.bfloat16).reshape(bb, Lk, E)
        v = v2.astype(jnp.bfloat16).reshape(bb, Lk, E)

        mask = mask_ref[...] if has_mask else None   # [Lq, Lk] additive f32
        pad = kpm_ref[...] if has_kpm else None      # [bb, 1, Lk] f32 (1.0 = ignore key)

        # Per-head scores/context with batch-block batched matmuls; head outputs are
        # written straight into the [bb, Lq, E] VMEM scratch (no lane concatenate).
        # TODO(synk): a single head-batched dot would need a middle-dim transpose to
        # [H, Lq, Dh], which Mosaic does not lower reliably; the static head loop with
        # hoisted casts keeps lowering safe.
        for h in range(nhead):
            sl = slice(h * Dh, (h + 1) * Dh)
            s = jnp.einsum('bqd,bkd->bqk', q[:, :, sl], k[:, :, sl],
                           preferred_element_type=jnp.float32)
            if has_mask:
                s = s + mask
            if has_kpm:
                s = jnp.where(pad > 0.5, NEG_INF, s)
            s = s - jnp.max(s, axis=-1, keepdims=True)
            p = jnp.exp(s)
            p = p * pl.reciprocal(jnp.sum(p, axis=-1, keepdims=True), approx=True)
            ctx_ref[:, :, sl] = jnp.einsum('bqk,bkd->bqd', p.astype(jnp.bfloat16),
                                           v[:, :, sl],
                                           preferred_element_type=jnp.float32)

        ctx = ctx_ref[...].reshape(bb * Lq, E)
        o = jnp.dot(ctx.astype(jnp.bfloat16), w_out_ref[...],
                    preferred_element_type=jnp.float32) + b_out_ref[...]
        y = _ln_f32(xq2.astype(jnp.float32) + o, g_ref[...], beta_ref[...])
        o_ref[...] = y.reshape(bb, Lq, E).astype(o_ref.dtype)
    return kernel


def attention_block(x_q, x_kv, p, prefix, nhead, attn_mask, key_padding_mask,
                    ln_w, ln_b, self_attn):
    # x_q: [B, Lq, E] bf16, x_kv: [B, Lk, E] bf16; fused MHA + residual + LayerNorm.
    B, Lq, E = x_q.shape
    Lk = Lq if self_attn else x_kv.shape[1]
    scale = 1.0 / math.sqrt(E // nhead)
    has_mask = attn_mask is not None
    has_kpm = key_padding_mask is not None
    bb = _pick_batch_block(B, Lq, Lk, E)

    args = [x_q]
    in_specs = [pl.BlockSpec((bb, Lq, E), lambda b: (b, 0, 0))]
    if not self_attn:
        args.append(x_kv)
        in_specs.append(pl.BlockSpec((bb, Lk, E), lambda b: (b, 0, 0)))
    for arr in (p[prefix + '_in_w'], p[prefix + '_in_b'],
                p[prefix + '_out_w'], p[prefix + '_out_b'], ln_w, ln_b):
        args.append(arr)
        in_specs.append(_whole(arr))
    if has_mask:
        args.append(attn_mask.astype(jnp.float32))
        in_specs.append(_whole(attn_mask))
    if has_kpm:
        kpm = key_padding_mask.astype(jnp.float32).reshape(B, 1, Lk)
        args.append(kpm)
        in_specs.append(pl.BlockSpec((bb, 1, Lk), lambda b: (b, 0, 0)))

    kernel = _make_attn_block_kernel(nhead, scale, self_attn, has_mask, has_kpm)
    return pl.pallas_call(
        kernel,
        out_shape=jax.ShapeDtypeStruct((B, Lq, E), ACT_DTYPE),
        grid=(B // bb,),
        in_specs=in_specs,
        out_specs=pl.BlockSpec((bb, Lq, E), lambda b: (b, 0, 0)),
        scratch_shapes=[pltpu.VMEM((bb, Lq, E), jnp.float32)],
        compiler_params=pltpu.CompilerParams(
            dimension_semantics=("parallel",),
            vmem_limit_bytes=VMEM_LIMIT),
    )(*args)


# ------------------- fused FFN (+ optional final LN) sub-layer kernel -------------------

def _make_ffn_kernel(has_final_ln):
    def kernel(*refs):
        it = iter(refs)
        x_ref = next(it)
        w1_ref, b1_ref = next(it), next(it)
        w2_ref, b2_ref = next(it), next(it)
        g_ref, beta_ref = next(it), next(it)
        g2_ref = beta2_ref = None
        if has_final_ln:
            g2_ref, beta2_ref = next(it), next(it)
        o_ref = next(it)

        x_bf = x_ref[...]                                              # [tm, E] bf16
        h = jnp.dot(x_bf, w1_ref[...],
                    preferred_element_type=jnp.float32) + b1_ref[...]
        h = jnp.maximum(h, 0.0)                                        # ReLU
        y = jnp.dot(h.astype(jnp.bfloat16), w2_ref[...],
                    preferred_element_type=jnp.float32) + b2_ref[...]
        y = _ln_f32(x_bf.astype(jnp.float32) + y, g_ref[...], beta_ref[...])
        if has_final_ln:                       # fused encoder/decoder final LayerNorm
            y = _ln_f32(y, g2_ref[...], beta2_ref[...])
        o_ref[...] = y.astype(o_ref.dtype)
    return kernel


def ffn_ln_block(x, p, ln_w, ln_b, final_ln=None, block_rows=512):
    B, L, E = x.shape
    x2 = x.reshape(B * L, E)
    n = x2.shape[0]
    tm, x2p, n_pad = _pick_row_tile(x2, block_rows)
    weights = [p['lin1_w'], p['lin1_b'], p['lin2_w'], p['lin2_b'], ln_w, ln_b]
    if final_ln is not None:
        weights += [final_ln[0], final_ln[1]]
    out = pl.pallas_call(
        _make_ffn_kernel(final_ln is not None),
        out_shape=jax.ShapeDtypeStruct((n_pad, E), ACT_DTYPE),
        grid=(n_pad // tm,),
        in_specs=[pl.BlockSpec((tm, E), lambda i: (i, 0))]
                 + [_whole(w) for w in weights],
        out_specs=pl.BlockSpec((tm, E), lambda i: (i, 0)),
        compiler_params=pltpu.CompilerParams(
            dimension_semantics=("parallel",),
            vmem_limit_bytes=VMEM_LIMIT),
    )(x2p, *weights)
    return out[:n].reshape(B, L, E)


# ------------------- linear (generator) kernels -------------------

def _linear_small_kernel(x_ref, w_ref, b_ref, o_ref):
    o_ref[...] = (jnp.dot(x_ref[...], w_ref[...],
                          preferred_element_type=jnp.float32) + b_ref[...])


def _linear_tiled_kernel(x_ref, w_ref, b_ref, o_ref):
    o_ref[...] = (jnp.dot(x_ref[...], w_ref[...],
                          preferred_element_type=jnp.float32) + b_ref[...])


def pallas_linear(x, w, b, *, tm=256):
    # x: [N, Din] bf16, w: [Din, Dout] bf16 (pre-transposed; Dout pre-padded to a
    # 128-multiple at init), b: [1, Dout] f32.
    N, Din = x.shape
    Dout = w.shape[1]
    if N <= tm and Dout <= 2048:
        # Small problem: single fused lane-dense block, no tiling overhead.
        return pl.pallas_call(
            _linear_small_kernel,
            out_shape=jax.ShapeDtypeStruct((N, Dout), jnp.float32),
            grid=(1,),
            in_specs=[_whole(x), _whole(w), _whole(b)],
            out_specs=pl.BlockSpec((N, Dout), lambda i: (0, 0)),
            compiler_params=pltpu.CompilerParams(
                dimension_semantics=("arbitrary",),
                vmem_limit_bytes=VMEM_LIMIT),
        )(x, w, b)
    # Vocab-sized generator: 2-D fully-parallel grid (row tiles x vocab tiles); the
    # whole model dim Din is contracted per step -> no K axis and no accumulator.
    # Only the (small) activation rows are padded at runtime; the weight never is.
    # TODO(synk): add a K-tiled accumulating path if Din ever exceeds ~8K.
    tn = 512 if Dout % 512 == 0 else (256 if Dout % 256 == 0 else 128)
    n_pad = pl.cdiv(N, tm) * tm
    xp = x if n_pad == N else jnp.pad(x, ((0, n_pad - N), (0, 0)))
    out = pl.pallas_call(
        _linear_tiled_kernel,
        out_shape=jax.ShapeDtypeStruct((n_pad, Dout), jnp.float32),
        grid=(n_pad // tm, Dout // tn),
        in_specs=[pl.BlockSpec((tm, Din), lambda i, j: (i, 0)),
                  pl.BlockSpec((Din, tn), lambda i, j: (0, j)),
                  pl.BlockSpec((1, tn), lambda i, j: (0, j))],
        out_specs=pl.BlockSpec((tm, tn), lambda i, j: (i, j)),
        compiler_params=pltpu.CompilerParams(
            dimension_semantics=("parallel", "parallel"),
            vmem_limit_bytes=VMEM_LIMIT),
    )(xp, w, b)
    return out[:N]


# ----------------------------- model (JAX glue) -----------------------------

def make_positional_encoding(emb_size, maxlen=5000):
    den = np.exp(-np.arange(0, emb_size, 2) * math.log(10000) / emb_size)
    pos = np.arange(maxlen).reshape(maxlen, 1)
    pe = np.zeros((maxlen, emb_size), dtype=np.float32)
    pe[:, 0::2] = np.sin(pos * den)
    pe[:, 1::2] = np.cos(pos * den)
    return jnp.asarray(pe[:, None, :])  # [maxlen, 1, E]


def token_embed(tokens, table):
    # TODO(synk): nn.Embedding gather stays in XLA glue (no win for a tiny Pallas gather).
    return jnp.take(table, tokens, axis=0) * math.sqrt(table.shape[1])


def seq2seq_forward(params, src, trg, src_mask, tgt_mask,
                    src_padding_mask, tgt_padding_mask, memory_key_padding_mask,
                    nhead, tgt_vocab):
    # TODO(synk): dropout (PositionalEncoding + all Transformer sub-layers) is identity (eval mode).
    pe = params['pos_embedding']
    S, T = src.shape[0], trg.shape[0]
    src_emb = token_embed(src, params['src_emb']) + pe[:S]   # [S, B, E] f32
    tgt_emb = token_embed(trg, params['tgt_emb']) + pe[:T]   # [T, B, E] f32

    # batch-major [B, L, E], bf16 activations between kernels; E stays on the lane axis
    x = jnp.transpose(src_emb, (1, 0, 2)).astype(ACT_DTYPE)
    y = jnp.transpose(tgt_emb, (1, 0, 2)).astype(ACT_DTYPE)

    n_enc = len(params['enc_layers'])
    for li, p in enumerate(params['enc_layers']):
        x = attention_block(x, x, p, 'self', nhead, src_mask, src_padding_mask,
                            p['norm1_w'], p['norm1_b'], self_attn=True)
        fln = ((params['enc_norm_w'], params['enc_norm_b'])
               if li == n_enc - 1 else None)                 # fused final encoder LN
        x = ffn_ln_block(x, p, p['norm2_w'], p['norm2_b'], final_ln=fln)
    memory = x

    n_dec = len(params['dec_layers'])
    for li, p in enumerate(params['dec_layers']):
        y = attention_block(y, y, p, 'self', nhead, tgt_mask, tgt_padding_mask,
                            p['norm1_w'], p['norm1_b'], self_attn=True)
        y = attention_block(y, memory, p, 'cross', nhead, None,
                            memory_key_padding_mask,
                            p['norm2_w'], p['norm2_b'], self_attn=False)
        fln = ((params['dec_norm_w'], params['dec_norm_b'])
               if li == n_dec - 1 else None)                 # fused final decoder LN
        y = ffn_ln_block(y, p, p['norm3_w'], p['norm3_b'], final_ln=fln)

    B, L, E = y.shape
    logits = pallas_linear(y.reshape(B * L, E), params['gen_w'], params['gen_b'])
    logits = logits[:, :tgt_vocab]                           # drop lane padding
    return jnp.transpose(logits.reshape(B, L, tgt_vocab), (1, 0, 2))   # [T, B, V]


# ----------------------------- deterministic init -----------------------------

def init_params(num_encoder_layers, num_decoder_layers, emb_size, nhead,
                src_vocab_size, tgt_vocab_size, dim_feedforward):
    key = jax.random.PRNGKey(0)
    WDT = jnp.bfloat16   # matmul weights MXU-native (bf16); biases/LN params f32

    def nxt(shape, scale=0.02, dtype=jnp.float32):
        nonlocal key
        key, sub = jax.random.split(key)
        return (jax.random.normal(sub, shape, jnp.float32) * scale).astype(dtype)

    def attn_params(prefix):
        return {
            # pre-transposed + fused QKV: x @ in_w == in_proj (PyTorch in_proj_weight.T)
            prefix + '_in_w': nxt((emb_size, 3 * emb_size), dtype=WDT),
            prefix + '_in_b': nxt((1, 3 * emb_size)),
            prefix + '_out_w': nxt((emb_size, emb_size), dtype=WDT),  # out_proj.weight.T
            prefix + '_out_b': nxt((1, emb_size)),
        }

    def enc_layer():
        p = attn_params('self')
        p.update({
            'lin1_w': nxt((emb_size, dim_feedforward), dtype=WDT),    # linear1.weight.T
            'lin1_b': nxt((1, dim_feedforward)),
            'lin2_w': nxt((dim_feedforward, emb_size), dtype=WDT),    # linear2.weight.T
            'lin2_b': nxt((1, emb_size)),
            'norm1_w': jnp.ones((1, emb_size), jnp.float32),
            'norm1_b': jnp.zeros((1, emb_size), jnp.float32),
            'norm2_w': jnp.ones((1, emb_size), jnp.float32),
            'norm2_b': jnp.zeros((1, emb_size), jnp.float32),
        })
        return p

    def dec_layer():
        p = enc_layer()
        p.update(attn_params('cross'))
        p['norm3_w'] = jnp.ones((1, emb_size), jnp.float32)
        p['norm3_b'] = jnp.zeros((1, emb_size), jnp.float32)
        return p

    # Generator weight/bias pre-padded ONCE here to a lane-dense vocab multiple of 128
    # (never re-padded at runtime); padded columns are zero and sliced off the logits.
    v_pad = max(128, ((tgt_vocab_size + 127) // 128) * 128)
    gen_w = nxt((emb_size, tgt_vocab_size))
    gen_w = jnp.pad(gen_w, ((0, 0), (0, v_pad - tgt_vocab_size))).astype(WDT)
    gen_b = jnp.pad(nxt((1, tgt_vocab_size)), ((0, 0), (0, v_pad - tgt_vocab_size)))

    return {
        'src_emb': nxt((src_vocab_size, emb_size), 1.0),
        'tgt_emb': nxt((tgt_vocab_size, emb_size), 1.0),
        'pos_embedding': make_positional_encoding(emb_size),
        'enc_layers': [enc_layer() for _ in range(num_encoder_layers)],
        'dec_layers': [dec_layer() for _ in range(num_decoder_layers)],
        'enc_norm_w': jnp.ones((1, emb_size), jnp.float32),
        'enc_norm_b': jnp.zeros((1, emb_size), jnp.float32),
        'dec_norm_w': jnp.ones((1, emb_size), jnp.float32),
        'dec_norm_b': jnp.zeros((1, emb_size), jnp.float32),
        'gen_w': gen_w,                                               # generator.weight.T (padded)
        'gen_b': gen_b,
    }


# ----------------------------- main -----------------------------

if __name__ == "__main__":
    # TODO(synk): demo E=32 leaves every vreg 75% lane-padding; real configs should use E % 128 == 0.
    EMB, NHEAD, FF = 32, 4, 64
    NENC, NDEC = 2, 2
    SRC_VOCAB, TGT_VOCAB = 50, 60
    S, T, B = 8, 8, 2

    params = init_params(NENC, NDEC, EMB, NHEAD, SRC_VOCAB, TGT_VOCAB, FF)

    key = jax.random.PRNGKey(0)
    k1, k2 = jax.random.split(key)
    src = jax.random.randint(k1, (S, B), 0, SRC_VOCAB)   # [S, B] seq-first tokens
    trg = jax.random.randint(k2, (T, B), 0, TGT_VOCAB)   # [T, B]

    src_mask = jnp.zeros((S, S), jnp.float32)                       # no-op src mask
    tgt_mask = jnp.triu(jnp.full((T, T), NEG_INF, jnp.float32), 1)  # causal mask
    src_padding_mask = jnp.zeros((B, S), bool).at[1, S - 1].set(True)
    tgt_padding_mask = jnp.zeros((B, T), bool).at[1, T - 1].set(True)
    memory_key_padding_mask = src_padding_mask

    fwd = jax.jit(partial(seq2seq_forward, nhead=NHEAD, tgt_vocab=TGT_VOCAB))
    out = fwd(params, src, trg, src_mask, tgt_mask,
              src_padding_mask, tgt_padding_mask, memory_key_padding_mask)
    jax.block_until_ready(out)
    assert out.shape == (T, B, TGT_VOCAB)
    assert bool(jnp.all(jnp.isfinite(out)))
    print("KERNEL_OK")
</pallas_src>

<mosaic_0001>
module attributes {stable_mosaic.version = 11 : i64} {
  func.func @kernel(%arg0: i32, %arg1: memref<8x32xbf16, #tpu.memory_space<vmem>>, %arg2: memref<32x64xbf16, #tpu.memory_space<vmem>>, %arg3: memref<1x64xf32, #tpu.memory_space<vmem>>, %arg4: memref<64x32xbf16, #tpu.memory_space<vmem>>, %arg5: memref<1x32xf32, #tpu.memory_space<vmem>>, %arg6: memref<1x32xf32, #tpu.memory_space<vmem>>, %arg7: memref<1x32xf32, #tpu.memory_space<vmem>>, %arg8: memref<8x32xbf16, #tpu.memory_space<vmem>>) attributes {dimension_semantics = [#tpu.dimension_semantics<parallel>], iteration_bounds = array<i64: 2>, scalar_prefetch = 0 : i64, scratch_operands = 0 : i64, tpu.core_type = #tpu.core_type<tc>, window_params = [{transform_indices = @transform_0, window_bounds = array<i64: 8, 32>}, {pipeline_mode = #tpu.pipeline_mode<synchronous>, transform_indices = @transform_1, window_bounds = array<i64: 32, 64>}, {pipeline_mode = #tpu.pipeline_mode<synchronous>, transform_indices = @transform_2, window_bounds = array<i64: 1, 64>}, {pipeline_mode = #tpu.pipeline_mode<synchronous>, transform_indices = @transform_3, window_bounds = array<i64: 64, 32>}, {pipeline_mode = #tpu.pipeline_mode<synchronous>, transform_indices = @transform_4, window_bounds = array<i64: 1, 32>}, {pipeline_mode = #tpu.pipeline_mode<synchronous>, transform_indices = @transform_5, window_bounds = array<i64: 1, 32>}, {pipeline_mode = #tpu.pipeline_mode<synchronous>, transform_indices = @transform_6, window_bounds = array<i64: 1, 32>}, {transform_indices = @transform_7, window_bounds = array<i64: 8, 32>}]} {
    %c0 = arith.constant 0 : index
    %c0_0 = arith.constant 0 : index
    %0 = vector.load %arg1[%c0, %c0_0] : memref<8x32xbf16, #tpu.memory_space<vmem>>, vector<8x32xbf16>
    %c0_1 = arith.constant 0 : index
    %c0_2 = arith.constant 0 : index
    %1 = vector.load %arg2[%c0_1, %c0_2] : memref<32x64xbf16, #tpu.memory_space<vmem>>, vector<32x64xbf16>
    %cst = arith.constant dense<0.000000e+00> : vector<8x64xf32>
    %2 = tpu.matmul %0, %1, %cst {dimension_numbers = #tpu.dot_dimension_numbers<[1], [0], [0], [1], [0, 0, 1, 1], [], []>} : vector<8x32xbf16>, vector<32x64xbf16>, vector<8x64xf32> -> vector<8x64xf32>
    %c0_3 = arith.constant 0 : index
    %c0_4 = arith.constant 0 : index
    %3 = vector.load %arg3[%c0_3, %c0_4] : memref<1x64xf32, #tpu.memory_space<vmem>>, vector<1x64xf32>
    %4 = vector.broadcast %3 : vector<1x64xf32> to vector<8x64xf32>
    %5 = arith.addf %2, %4 : vector<8x64xf32>
    %cst_5 = arith.constant 0.000000e+00 : f32
    %6 = vector.broadcast %cst_5 : f32 to vector<8x64xf32>
    %7 = arith.maximumf %5, %6 : vector<8x64xf32>
    %8 = arith.truncf %7 : vector<8x64xf32> to vector<8x64xbf16>
    %c0_6 = arith.constant 0 : index
    %c0_7 = arith.constant 0 : index
    %9 = vector.load %arg4[%c0_6, %c0_7] : memref<64x32xbf16, #tpu.memory_space<vmem>>, vector<64x32xbf16>
    %cst_8 = arith.constant dense<0.000000e+00> : vector<8x32xf32>
    %10 = tpu.matmul %8, %9, %cst_8 {dimension_numbers = #tpu.dot_dimension_numbers<[1], [0], [0], [1], [0, 0, 1, 1], [], []>} : vector<8x64xbf16>, vector<64x32xbf16>, vector<8x32xf32> -> vector<8x32xf32>
    %c0_9 = arith.constant 0 : index
    %c0_10 = arith.constant 0 : index
    %11 = vector.load %arg5[%c0_9, %c0_10] : memref<1x32xf32, #tpu.memory_space<vmem>>, vector<1x32xf32>
    %12 = vector.broadcast %11 : vector<1x32xf32> to vector<8x32xf32>
    %13 = arith.addf %10, %12 : vector<8x32xf32>
    %14 = arith.extf %0 : vector<8x32xbf16> to vector<8x32xf32>
    %15 = arith.addf %14, %13 : vector<8x32xf32>
    %c0_11 = arith.constant 0 : index
    %c0_12 = arith.constant 0 : index
    %16 = vector.load %arg6[%c0_11, %c0_12] : memref<1x32xf32, #tpu.memory_space<vmem>>, vector<1x32xf32>
    %c0_13 = arith.constant 0 : index
    %c0_14 = arith.constant 0 : index
    %17 = vector.load %arg7[%c0_13, %c0_14] : memref<1x32xf32, #tpu.memory_space<vmem>>, vector<1x32xf32>
    %cst_15 = arith.constant dense<0.000000e+00> : vector<8xf32>
    %18 = vector.multi_reduction <add>, %15, %cst_15 [1] : vector<8x32xf32> to vector<8xf32>
    %19 = vector.shape_cast %18 : vector<8xf32> to vector<8x1xf32>
    %cst_16 = arith.constant 3.200000e+01 : f32
    %20 = vector.broadcast %cst_16 : f32 to vector<8x1xf32>
    %21 = arith.divf %19, %20 : vector<8x1xf32>
    %22 = vector.broadcast %21 : vector<8x1xf32> to vector<8x32xf32>
    %23 = arith.subf %15, %22 : vector<8x32xf32>
    %24 = arith.mulf %23, %23 : vector<8x32xf32>
    %cst_17 = arith.constant dense<0.000000e+00> : vector<8xf32>
    %25 = vector.multi_reduction <add>, %24, %cst_17 [1] : vector<8x32xf32> to vector<8xf32>
    %26 = vector.shape_cast %25 : vector<8xf32> to vector<8x1xf32>
    %cst_18 = arith.constant 3.200000e+01 : f32
    %27 = vector.broadcast %cst_18 : f32 to vector<8x1xf32>
    %28 = arith.divf %26, %27 : vector<8x1xf32>
    %cst_19 = arith.constant 9.99999974E-6 : f32
    %29 = vector.broadcast %cst_19 : f32 to vector<8x1xf32>
    %30 = arith.addf %28, %29 : vector<8x1xf32>
    %31 = math.rsqrt %30 : vector<8x1xf32>
    %32 = vector.broadcast %31 : vector<8x1xf32> to vector<8x32xf32>
    %33 = arith.mulf %23, %32 : vector<8x32xf32>
    %34 = vector.broadcast %16 : vector<1x32xf32> to vector<8x32xf32>
    %35 = arith.mulf %33, %34 : vector<8x32xf32>
    %36 = vector.broadcast %17 : vector<1x32xf32> to vector<8x32xf32>
    %37 = arith.addf %35, %36 : vector<8x32xf32>
    %38 = arith.truncf %37 : vector<8x32xf32> to vector<8x32xbf16>
    %c0_20 = arith.constant 0 : index
    %c0_21 = arith.constant 0 : index
    %39 = vector.load %arg8[%c0_20, %c0_21] : memref<8x32xbf16, #tpu.memory_space<vmem>>, vector<8x32xbf16>
    tpu.vector_store %arg8[%c0_20, %c0_21], %38 {strides = array<i32>} : memref<8x32xbf16, #tpu.memory_space<vmem>>, vector<8x32xbf16>,
    return
  }
  func.func @transform_0(%arg0: i32) -> (i32, i32) {
    %c0_i32 = arith.constant 0 : i32
    %c0_i32_0 = arith.constant 0 : i32
    return %arg0, %c0_i32 : i32, i32
  }
  func.func @transform_1(%arg0: i32) -> (i32, i32) {
    %c0_i32 = arith.constant 0 : i32
    %c0_i32_0 = arith.constant 0 : i32
    %c0_i32_1 = arith.constant 0 : i32
    return %c0_i32, %c0_i32_0 : i32, i32
  }
  func.func @transform_2(%arg0: i32) -> (i32, i32) {
    %c0_i32 = arith.constant 0 : i32
    %c0_i32_0 = arith.constant 0 : i32
    %c0_i32_1 = arith.constant 0 : i32
    return %c0_i32, %c0_i32_0 : i32, i32
  }
  func.func @transform_3(%arg0: i32) -> (i32, i32) {
    %c0_i32 = arith.constant 0 : i32
    %c0_i32_0 = arith.constant 0 : i32
    %c0_i32_1 = arith.constant 0 : i32
    return %c0_i32, %c0_i32_0 : i32, i32
  }
  func.func @transform_4(%arg0: i32) -> (i32, i32) {
    %c0_i32 = arith.constant 0 : i32
    %c0_i32_0 = arith.constant 0 : i32
    %c0_i32_1 = arith.constant 0 : i32
    return %c0_i32, %c0_i32_0 : i32, i32
  }
  func.func @transform_5(%arg0: i32) -> (i32, i32) {
    %c0_i32 = arith.constant 0 : i32
    %c0_i32_0 = arith.constant 0 : i32
    %c0_i32_1 = arith.constant 0 : i32
    return %c0_i32, %c0_i32_0 : i32, i32
  }
  func.func @transform_6(%arg0: i32) -> (i32, i32) {
    %c0_i32 = arith.constant 0 : i32
    %c0_i32_0 = arith.constant 0 : i32
    %c0_i32_1 = arith.constant 0 : i32
    return %c0_i32, %c0_i32_0 : i32, i32
  }
  func.func @transform_7(%arg0: i32) -> (i32, i32) {
    %c0_i32 = arith.constant 0 : i32
    %c0_i32_0 = arith.constant 0 : i32
    return %arg0, %c0_i32 : i32, i32
  }
}

module attributes {stable_mosaic.version = 11 : i64} {
  func.func @kernel(%arg0: i32, %arg1: memref<8x32xbf16, #tpu.memory_space<vmem>>, %arg2: memref<32x64xbf16, #tpu.memory_space<vmem>>, %arg3: memref<1x64xf32, #tpu.memory_space<vmem>>, %arg4: memref<64x32xbf16, #tpu.memory_space<vmem>>, %arg5: memref<1x32xf32, #tpu.memory_space<vmem>>, %arg6: memref<1x32xf32, #tpu.memory_space<vmem>>, %arg7: memref<1x32xf32, #tpu.memory_space<vmem>>, %arg8: memref<1x32xf32, #tpu.memory_space<vmem>>, %arg9: memref<1x32xf32, #tpu.memory_space<vmem>>, %arg10: memref<8x32xbf16, #tpu.memory_space<vmem>>) attributes {dimension_semantics = [#tpu.dimension_semantics<parallel>], iteration_bounds = array<i64: 2>, scalar_prefetch = 0 : i64, scratch_operands = 0 : i64, tpu.core_type = #tpu.core_type<tc>, window_params = [{transform_indices = @transform_0, window_bounds = array<i64: 8, 32>}, {pipeline_mode = #tpu.pipeline_mode<synchronous>, transform_indices = @transform_1, window_bounds = array<i64: 32, 64>}, {pipeline_mode = #tpu.pipeline_mode<synchronous>, transform_indices = @transform_2, window_bounds = array<i64: 1, 64>}, {pipeline_mode = #tpu.pipeline_mode<synchronous>, transform_indices = @transform_3, window_bounds = array<i64: 64, 32>}, {pipeline_mode = #tpu.pipeline_mode<synchronous>, transform_indices = @transform_4, window_bounds = array<i64: 1, 32>}, {pipeline_mode = #tpu.pipeline_mode<synchronous>, transform_indices = @transform_5, window_bounds = array<i64: 1, 32>}, {pipeline_mode = #tpu.pipeline_mode<synchronous>, transform_indices = @transform_6, window_bounds = array<i64: 1, 32>}, {pipeline_mode = #tpu.pipeline_mode<synchronous>, transform_indices = @transform_7, window_bounds = array<i64: 1, 32>}, {pipeline_mode = #tpu.pipeline_mode<synchronous>, transform_indices = @transform_8, window_bounds = array<i64: 1, 32>}, {transform_indices = @transform_9, window_bounds = array<i64: 8, 32>}]} {
    %c0 = arith.constant 0 : index
    %c0_0 = arith.constant 0 : index
    %0 = vector.load %arg1[%c0, %c0_0] : memref<8x32xbf16, #tpu.memory_space<vmem>>, vector<8x32xbf16>
    %c0_1 = arith.constant 0 : index
    %c0_2 = arith.constant 0 : index
    %1 = vector.load %arg2[%c0_1, %c0_2] : memref<32x64xbf16, #tpu.memory_space<vmem>>, vector<32x64xbf16>
    %cst = arith.constant dense<0.000000e+00> : vector<8x64xf32>
    %2 = tpu.matmul %0, %1, %cst {dimension_numbers = #tpu.dot_dimension_numbers<[1], [0], [0], [1], [0, 0, 1, 1], [], []>} : vector<8x32xbf16>, vector<32x64xbf16>, vector<8x64xf32> -> vector<8x64xf32>
    %c0_3 = arith.constant 0 : index
    %c0_4 = arith.constant 0 : index
    %3 = vector.load %arg3[%c0_3, %c0_4] : memref<1x64xf32, #tpu.memory_space<vmem>>, vector<1x64xf32>
    %4 = vector.broadcast %3 : vector<1x64xf32> to vector<8x64xf32>
    %5 = arith.addf %2, %4 : vector<8x64xf32>
    %cst_5 = arith.constant 0.000000e+00 : f32
    %6 = vector.broadcast %cst_5 : f32 to vector<8x64xf32>
    %7 = arith.maximumf %5, %6 : vector<8x64xf32>
    %8 = arith.truncf %7 : vector<8x64xf32> to vector<8x64xbf16>
    %c0_6 = arith.constant 0 : index
    %c0_7 = arith.constant 0 : index
    %9 = vector.load %arg4[%c0_6, %c0_7] : memref<64x32xbf16, #tpu.memory_space<vmem>>, vector<64x32xbf16>
    %cst_8 = arith.constant dense<0.000000e+00> : vector<8x32xf32>
    %10 = tpu.matmul %8, %9, %cst_8 {dimension_numbers = #tpu.dot_dimension_numbers<[1], [0], [0], [1], [0, 0, 1, 1], [], []>} : vector<8x64xbf16>, vector<64x32xbf16>, vector<8x32xf32> -> vector<8x32xf32>
    %c0_9 = arith.constant 0 : index
    %c0_10 = arith.constant 0 : index
    %11 = vector.load %arg5[%c0_9, %c0_10] : memref<1x32xf32, #tpu.memory_space<vmem>>, vector<1x32xf32>
    %12 = vector.broadcast %11 : vector<1x32xf32> to vector<8x32xf32>
    %13 = arith.addf %10, %12 : vector<8x32xf32>
    %14 = arith.extf %0 : vector<8x32xbf16> to vector<8x32xf32>
    %15 = arith.addf %14, %13 : vector<8x32xf32>
    %c0_11 = arith.constant 0 : index
    %c0_12 = arith.constant 0 : index
    %16 = vector.load %arg6[%c0_11, %c0_12] : memref<1x32xf32, #tpu.memory_space<vmem>>, vector<1x32xf32>
    %c0_13 = arith.constant 0 : index
    %c0_14 = arith.constant 0 : index
    %17 = vector.load %arg7[%c0_13, %c0_14] : memref<1x32xf32, #tpu.memory_space<vmem>>, vector<1x32xf32>
    %cst_15 = arith.constant dense<0.000000e+00> : vector<8xf32>
    %18 = vector.multi_reduction <add>, %15, %cst_15 [1] : vector<8x32xf32> to vector<8xf32>
    %19 = vector.shape_cast %18 : vector<8xf32> to vector<8x1xf32>
    %cst_16 = arith.constant 3.200000e+01 : f32
    %20 = vector.broadcast %cst_16 : f32 to vector<8x1xf32>
    %21 = arith.divf %19, %20 : vector<8x1xf32>
    %22 = vector.broadcast %21 : vector<8x1xf32> to vector<8x32xf32>
    %23 = arith.subf %15, %22 : vector<8x32xf32>
    %24 = arith.mulf %23, %23 : vector<8x32xf32>
    %cst_17 = arith.constant dense<0.000000e+00> : vector<8xf32>
    %25 = vector.multi_reduction <add>, %24, %cst_17 [1] : vector<8x32xf32> to vector<8xf32>
    %26 = vector.shape_cast %25 : vector<8xf32> to vector<8x1xf32>
    %cst_18 = arith.constant 3.200000e+01 : f32
    %27 = vector.broadcast %cst_18 : f32 to vector<8x1xf32>
    %28 = arith.divf %26, %27 : vector<8x1xf32>
    %cst_19 = arith.constant 9.99999974E-6 : f32
    %29 = vector.broadcast %cst_19 : f32 to vector<8x1xf32>
    %30 = arith.addf %28, %29 : vector<8x1xf32>
    %31 = math.rsqrt %30 : vector<8x1xf32>
    %32 = vector.broadcast %31 : vector<8x1xf32> to vector<8x32xf32>
    %33 = arith.mulf %23, %32 : vector<8x32xf32>
    %34 = vector.broadcast %16 : vector<1x32xf32> to vector<8x32xf32>
    %35 = arith.mulf %33, %34 : vector<8x32xf32>
    %36 = vector.broadcast %17 : vector<1x32xf32> to vector<8x32xf32>
    %37 = arith.addf %35, %36 : vector<8x32xf32>
    %c0_20 = arith.constant 0 : index
    %c0_21 = arith.constant 0 : index
    %38 = vector.load %arg8[%c0_20, %c0_21] : memref<1x32xf32, #tpu.memory_space<vmem>>, vector<1x32xf32>
    %c0_22 = arith.constant 0 : index
    %c0_23 = arith.constant 0 : index
    %39 = vector.load %arg9[%c0_22, %c0_23] : memref<1x32xf32, #tpu.memory_space<vmem>>, vector<1x32xf32>
    %cst_24 = arith.constant dense<0.000000e+00> : vector<8xf32>
    %40 = vector.multi_reduction <add>, %37, %cst_24 [1] : vector<8x32xf32> to vector<8xf32>
    %41 = vector.shape_cast %40 : vector<8xf32> to vector<8x1xf32>
    %cst_25 = arith.constant 3.200000e+01 : f32
    %42 = vector.broadcast %cst_25 : f32 to vector<8x1xf32>
    %43 = arith.divf %41, %42 : vector<8x1xf32>
    %44 = vector.broadcast %43 : vector<8x1xf32> to vector<8x32xf32>
    %45 = arith.subf %37, %44 : vector<8x32xf32>
    %46 = arith.mulf %45, %45 : vector<8x32xf32>
    %cst_26 = arith.constant dense<0.000000e+00> : vector<8xf32>
    %47 = vector.multi_reduction <add>, %46, %cst_26 [1] : vector<8x32xf32> to vector<8xf32>
    %48 = vector.shape_cast %47 : vector<8xf32> to vector<8x1xf32>
    %cst_27 = arith.constant 3.200000e+01 : f32
    %49 = vector.broadcast %cst_27 : f32 to vector<8x1xf32>
    %50 = arith.divf %48, %49 : vector<8x1xf32>
    %cst_28 = arith.constant 9.99999974E-6 : f32
    %51 = vector.broadcast %cst_28 : f32 to vector<8x1xf32>
    %52 = arith.addf %50, %51 : vector<8x1xf32>
    %53 = math.rsqrt %52 : vector<8x1xf32>
    %54 = vector.broadcast %53 : vector<8x1xf32> to vector<8x32xf32>
    %55 = arith.mulf %45, %54 : vector<8x32xf32>
    %56 = vector.broadcast %38 : vector<1x32xf32> to vector<8x32xf32>
    %57 = arith.mulf %55, %56 : vector<8x32xf32>
    %58 = vector.broadcast %39 : vector<1x32xf32> to vector<8x32xf32>
    %59 = arith.addf %57, %58 : vector<8x32xf32>
    %60 = arith.truncf %59 : vector<8x32xf32> to vector<8x32xbf16>
    %c0_29 = arith.constant 0 : index
    %c0_30 = arith.constant 0 : index
    %61 = vector.load %arg10[%c0_29, %c0_30] : memref<8x32xbf16, #tpu.memory_space<vmem>>, vector<8x32xbf16>
    tpu.vector_store %arg10[%c0_29, %c0_30], %60 {strides = array<i32>} : memref<8x32xbf16, #tpu.memory_space<vmem>>, vector<8x32xbf16>,
    return
  }
  func.func @transform_0(%arg0: i32) -> (i32, i32) {
    %c0_i32 = arith.constant 0 : i32
    %c0_i32_0 = arith.constant 0 : i32
    return %arg0, %c0_i32 : i32, i32
  }
  func.func @transform_1(%arg0: i32) -> (i32, i32) {
    %c0_i32 = arith.constant 0 : i32
    %c0_i32_0 = arith.constant 0 : i32
    %c0_i32_1 = arith.constant 0 : i32
    return %c0_i32, %c0_i32_0 : i32, i32
  }
  func.func @transform_2(%arg0: i32) -> (i32, i32) {
    %c0_i32 = arith.constant 0 : i32
    %c0_i32_0 = arith.constant 0 : i32
    %c0_i32_1 = arith.constant 0 : i32
    return %c0_i32, %c0_i32_0 : i32, i32
  }
  func.func @transform_3(%arg0: i32) -> (i32, i32) {
    %c0_i32 = arith.constant 0 : i32
    %c0_i32_0 = arith.constant 0 : i32
    %c0_i32_1 = arith.constant 0 : i32
    return %c0_i32, %c0_i32_0 : i32, i32
  }
  func.func @transform_4(%arg0: i32) -> (i32, i32) {
    %c0_i32 = arith.constant 0 : i32
    %c0_i32_0 = arith.constant 0 : i32
    %c0_i32_1 = arith.constant 0 : i32
    return %c0_i32, %c0_i32_0 : i32, i32
  }
  func.func @transform_5(%arg0: i32) -> (i32, i32) {
    %c0_i32 = arith.constant 0 : i32
    %c0_i32_0 = arith.constant 0 : i32
    %c0_i32_1 = arith.constant 0 : i32
    return %c0_i32, %c0_i32_0 : i32, i32
  }
  func.func @transform_6(%arg0: i32) -> (i32, i32) {
    %c0_i32 = arith.constant 0 : i32
    %c0_i32_0 = arith.constant 0 : i32
    %c0_i32_1 = arith.constant 0 : i32
    return %c0_i32, %c0_i32_0 : i32, i32
  }
  func.func @transform_7(%arg0: i32) -> (i32, i32) {
    %c0_i32 = arith.constant 0 : i32
    %c0_i32_0 = arith.constant 0 : i32
    %c0_i32_1 = arith.constant 0 : i32
    return %c0_i32, %c0_i32_0 : i32, i32
  }
  func.func @transform_8(%arg0: i32) -> (i32, i32) {
    %c0_i32 = arith.constant 0 : i32
    %c0_i32_0 = arith.constant 0 : i32
    %c0_i32_1 = arith.constant 0 : i32
    return %c0_i32, %c0_i32_0 : i32, i32
  }
  func.func @transform_9(%arg0: i32) -> (i32, i32) {
    %c0_i32 = arith.constant 0 : i32
    %c0_i32_0 = arith.constant 0 : i32
    return %arg0, %c0_i32 : i32, i32
  }
}

module attributes {stable_mosaic.version = 11 : i64} {
  func.func @kernel(%arg0: i32, %arg1: memref<1x8x32xbf16, #tpu.memory_space<vmem>>, %arg2: memref<32x96xbf16, #tpu.memory_space<vmem>>, %arg3: memref<1x96xf32, #tpu.memory_space<vmem>>, %arg4: memref<32x32xbf16, #tpu.memory_space<vmem>>, %arg5: memref<1x32xf32, #tpu.memory_space<vmem>>, %arg6: memref<1x32xf32, #tpu.memory_space<vmem>>, %arg7: memref<1x32xf32, #tpu.memory_space<vmem>>, %arg8: memref<8x8xf32, #tpu.memory_space<vmem>>, %arg9: memref<1x1x8xf32, #tpu.memory_space<vmem>>, %arg10: memref<1x8x32xbf16, #tpu.memory_space<vmem>>, %arg11: memref<1x8x32xf32, #tpu.memory_space<vmem>>) attributes {dimension_semantics = [#tpu.dimension_semantics<parallel>], iteration_bounds = array<i64: 2>, scalar_prefetch = 0 : i64, scratch_operands = 1 : i64, tpu.core_type = #tpu.core_type<tc>, window_params = [{transform_indices = @transform_0, window_bounds = array<i64: 1, 8, 32>}, {pipeline_mode = #tpu.pipeline_mode<synchronous>, transform_indices = @transform_1, window_bounds = array<i64: 32, 96>}, {pipeline_mode = #tpu.pipeline_mode<synchronous>, transform_indices = @transform_2, window_bounds = array<i64: 1, 96>}, {pipeline_mode = #tpu.pipeline_mode<synchronous>, transform_indices = @transform_3, window_bounds = array<i64: 32, 32>}, {pipeline_mode = #tpu.pipeline_mode<synchronous>, transform_indices = @transform_4, window_bounds = array<i64: 1, 32>}, {pipeline_mode = #tpu.pipeline_mode<synchronous>, transform_indices = @transform_5, window_bounds = array<i64: 1, 32>}, {pipeline_mode = #tpu.pipeline_mode<synchronous>, transform_indices = @transform_6, window_bounds = array<i64: 1, 32>}, {pipeline_mode = #tpu.pipeline_mode<synchronous>, transform_indices = @transform_7, window_bounds = array<i64: 8, 8>}, {transform_indices = @transform_8, window_bounds = array<i64: 1, 1, 8>}, {transform_indices = @transform_9, window_bounds = array<i64: 1, 8, 32>}]} {
    %c0 = arith.constant 0 : index
    %c0_0 = arith.constant 0 : index
    %c0_1 = arith.constant 0 : index
    %0 = vector.load %arg1[%c0, %c0_0, %c0_1] : memref<1x8x32xbf16, #tpu.memory_space<vmem>>, vector<1x8x32xbf16>
    %c0_2 = arith.constant 0 : index
    %c0_3 = arith.constant 0 : index
    %1 = vector.load %arg2[%c0_2, %c0_3] : memref<32x96xbf16, #tpu.memory_space<vmem>>, vector<32x96xbf16>
    %c0_4 = arith.constant 0 : index
    %c0_5 = arith.constant 0 : index
    %2 = vector.load %arg3[%c0_4, %c0_5] : memref<1x96xf32, #tpu.memory_space<vmem>>, vector<1x96xf32>
    %3 = vector.shape_cast %0 : vector<1x8x32xbf16> to vector<8x32xbf16>
    %cst = arith.constant dense<0.000000e+00> : vector<8x96xf32>
    %4 = tpu.matmul %3, %1, %cst {dimension_numbers = #tpu.dot_dimension_numbers<[1], [0], [0], [1], [0, 0, 1, 1], [], []>} : vector<8x32xbf16>, vector<32x96xbf16>, vector<8x96xf32> -> vector<8x96xf32>
    %5 = vector.broadcast %2 : vector<1x96xf32> to vector<8x96xf32>
    %6 = arith.addf %4, %5 : vector<8x96xf32>
    %7 = vector.extract_strided_slice %6 {offsets = [0, 0], sizes = [8, 32], strides = [1, 1]} : vector<8x96xf32> to vector<8x32xf32>
    %8 = vector.extract_strided_slice %6 {offsets = [0, 32], sizes = [8, 32], strides = [1, 1]} : vector<8x96xf32> to vector<8x32xf32>
    %9 = vector.extract_strided_slice %6 {offsets = [0, 64], sizes = [8, 32], strides = [1, 1]} : vector<8x96xf32> to vector<8x32xf32>
    %cst_6 = arith.constant 0.353553385 : f32
    %10 = vector.broadcast %cst_6 : f32 to vector<8x32xf32>
    %11 = arith.mulf %7, %10 : vector<8x32xf32>
    %12 = arith.truncf %11 : vector<8x32xf32> to vector<8x32xbf16>
    %13 = vector.shape_cast %12 : vector<8x32xbf16> to vector<1x8x32xbf16>
    %14 = arith.truncf %8 : vector<8x32xf32> to vector<8x32xbf16>
    %15 = vector.shape_cast %14 : vector<8x32xbf16> to vector<1x8x32xbf16>
    %16 = arith.truncf %9 : vector<8x32xf32> to vector<8x32xbf16>
    %17 = vector.shape_cast %16 : vector<8x32xbf16> to vector<1x8x32xbf16>
    %c0_7 = arith.constant 0 : index
    %c0_8 = arith.constant 0 : index
    %18 = vector.load %arg8[%c0_7, %c0_8] : memref<8x8xf32, #tpu.memory_space<vmem>>, vector<8x8xf32>
    %c0_9 = arith.constant 0 : index
    %c0_10 = arith.constant 0 : index
    %c0_11 = arith.constant 0 : index
    %19 = vector.load %arg9[%c0_9, %c0_10, %c0_11] : memref<1x1x8xf32, #tpu.memory_space<vmem>>, vector<1x1x8xf32>
    %20 = vector.extract_strided_slice %13 {offsets = [0, 0, 0], sizes = [1, 8, 8], strides = [1, 1, 1]} : vector<1x8x32xbf16> to vector<1x8x8xbf16>
    %21 = vector.extract_strided_slice %15 {offsets = [0, 0, 0], sizes = [1, 8, 8], strides = [1, 1, 1]} : vector<1x8x32xbf16> to vector<1x8x8xbf16>
    "tpu.trace_start"() <{level = 10 : i32, message = "bqd,bkd->bqk"}> : () -> ()
    %cst_12 = arith.constant dense<0.000000e+00> : vector<1x8x8xf32>
    %22 = tpu.matmul %20, %21, %cst_12 {dimension_numbers = #tpu.dot_dimension_numbers<[2], [2], [1], [1], [0, 0, 0, 1, 1, 1], [0], [0]>} : vector<1x8x8xbf16>, vector<1x8x8xbf16>, vector<1x8x8xf32> -> vector<1x8x8xf32>
    "tpu.trace_stop"() : () -> ()
    %23 = vector.shape_cast %18 : vector<8x8xf32> to vector<1x8x8xf32>
    %24 = arith.addf %22, %23 : vector<1x8x8xf32>
    %cst_13 = arith.constant 5.000000e-01 : f32
    %25 = vector.broadcast %cst_13 : f32 to vector<1x1x8xf32>
    %26 = arith.cmpf ogt, %19, %25 : vector<1x1x8xf32>
    %cst_14 = arith.constant -1.000000e+30 : f32
    %27 = vector.shape_cast %26 : vector<1x1x8xi1> to vector<1x1x8xi1>
    %28 = vector.broadcast %27 : vector<1x1x8xi1> to vector<1x8x8xi1>
    %29 = vector.broadcast %cst_14 : f32 to vector<1x8x8xf32>
    %30 = arith.select %28, %29, %24 : vector<1x8x8xi1>, vector<1x8x8xf32>
    %cst_15 = arith.constant dense<0xFF800000> : vector<1x8xf32>
    %31 = vector.multi_reduction <maximumf>, %30, %cst_15 [2] : vector<1x8x8xf32> to vector<1x8xf32>
    %32 = vector.shape_cast %31 : vector<1x8xf32> to vector<1x8x1xf32>
    %33 = vector.broadcast %32 : vector<1x8x1xf32> to vector<1x8x8xf32>
    %34 = arith.subf %30, %33 : vector<1x8x8xf32>
    %35 = math.exp %34 : vector<1x8x8xf32>
    %cst_16 = arith.constant dense<0.000000e+00> : vector<1x8xf32>
    %36 = vector.multi_reduction <add>, %35, %cst_16 [2] : vector<1x8x8xf32> to vector<1x8xf32>
    %37 = vector.shape_cast %36 : vector<1x8xf32> to vector<1x8x1xf32>
    %38 = tpu.reciprocal %37 {approx = true} : vector<1x8x1xf32> -> vector<1x8x1xf32>
    %39 = vector.broadcast %38 : vector<1x8x1xf32> to vector<1x8x8xf32>
    %40 = arith.mulf %35, %39 : vector<1x8x8xf32>
    %41 = arith.truncf %40 : vector<1x8x8xf32> to vector<1x8x8xbf16>
    %42 = vector.extract_strided_slice %17 {offsets = [0, 0, 0], sizes = [1, 8, 8], strides = [1, 1, 1]} : vector<1x8x32xbf16> to vector<1x8x8xbf16>
    "tpu.trace_start"() <{level = 10 : i32, message = "bqk,bkd->bqd"}> : () -> ()
    %cst_17 = arith.constant dense<0.000000e+00> : vector<1x8x8xf32>
    %43 = tpu.matmul %41, %42, %cst_17 {dimension_numbers = #tpu.dot_dimension_numbers<[2], [1], [1], [2], [0, 0, 0, 1, 1, 2], [0], [0]>} : vector<1x8x8xbf16>, vector<1x8x8xbf16>, vector<1x8x8xf32> -> vector<1x8x8xf32>
    "tpu.trace_stop"() : () -> ()
    %c0_18 = arith.constant 0 : index
    %c0_19 = arith.constant 0 : index
    %c0_20 = arith.constant 0 : index
    %44 = vector.load %arg11[%c0_18, %c0_19, %c0_20] : memref<1x8x32xf32, #tpu.memory_space<vmem>>, vector<1x8x8xf32>
    tpu.vector_store %arg11[%c0_18, %c0_19, %c0_20], %43 {strides = array<i32>} : memref<1x8x32xf32, #tpu.memory_space<vmem>>, vector<1x8x8xf32>,
    %45 = vector.extract_strided_slice %13 {offsets = [0, 0, 8], sizes = [1, 8, 8], strides = [1, 1, 1]} : vector<1x8x32xbf16> to vector<1x8x8xbf16>
    %46 = vector.extract_strided_slice %15 {offsets = [0, 0, 8], sizes = [1, 8, 8], strides = [1, 1, 1]} : vector<1x8x32xbf16> to vector<1x8x8xbf16>
    "tpu.trace_start"() <{level = 10 : i32, message = "bqd,bkd->bqk"}> : () -> ()
    %cst_21 = arith.constant dense<0.000000e+00> : vector<1x8x8xf32>
    %47 = tpu.matmul %45, %46, %cst_21 {dimension_numbers = #tpu.dot_dimension_numbers<[2], [2], [1], [1], [0, 0, 0, 1, 1, 1], [0], [0]>} : vector<1x8x8xbf16>, vector<1x8x8xbf16>, vector<1x8x8xf32> -> vector<1x8x8xf32>
    "tpu.trace_stop"() : () -> ()
    %48 = vector.shape_cast %18 : vector<8x8xf32> to vector<1x8x8xf32>
    %49 = arith.addf %47, %48 : vector<1x8x8xf32>
    %cst_22 = arith.constant 5.000000e-01 : f32
    %50 = vector.broadcast %cst_22 : f32 to vector<1x1x8xf32>
    %51 = arith.cmpf ogt, %19, %50 : vector<1x1x8xf32>
    %cst_23 = arith.constant -1.000000e+30 : f32
    %52 = vector.shape_cast %51 : vector<1x1x8xi1> to vector<1x1x8xi1>
    %53 = vector.broadcast %52 : vector<1x1x8xi1> to vector<1x8x8xi1>
    %54 = vector.broadcast %cst_23 : f32 to vector<1x8x8xf32>
    %55 = arith.select %53, %54, %49 : vector<1x8x8xi1>, vector<1x8x8xf32>
    %cst_24 = arith.constant dense<0xFF800000> : vector<1x8xf32>
    %56 = vector.multi_reduction <maximumf>, %55, %cst_24 [2] : vector<1x8x8xf32> to vector<1x8xf32>
    %57 = vector.shape_cast %56 : vector<1x8xf32> to vector<1x8x1xf32>
    %58 = vector.broadcast %57 : vector<1x8x1xf32> to vector<1x8x8xf32>
    %59 = arith.subf %55, %58 : vector<1x8x8xf32>
    %60 = math.exp %59 : vector<1x8x8xf32>
    %cst_25 = arith.constant dense<0.000000e+00> : vector<1x8xf32>
    %61 = vector.multi_reduction <add>, %60, %cst_25 [2] : vector<1x8x8xf32> to vector<1x8xf32>
    %62 = vector.shape_cast %61 : vector<1x8xf32> to vector<1x8x1xf32>
    %63 = tpu.reciprocal %62 {approx = true} : vector<1x8x1xf32> -> vector<1x8x1xf32>
    %64 = vector.broadcast %63 : vector<1x8x1xf32> to vector<1x8x8xf32>
    %65 = arith.mulf %60, %64 : vector<1x8x8xf32>
    %66 = arith.truncf %65 : vector<1x8x8xf32> to vector<1x8x8xbf16>
    %67 = vector.extract_strided_slice %17 {offsets = [0, 0, 8], sizes = [1, 8, 8], strides = [1, 1, 1]} : vector<1x8x32xbf16> to vector<1x8x8xbf16>
    "tpu.trace_start"() <{level = 10 : i32, message = "bqk,bkd->bqd"}> : () -> ()
    %cst_26 = arith.constant dense<0.000000e+00> : vector<1x8x8xf32>
    %68 = tpu.matmul %66, %67, %cst_26 {dimension_numbers = #tpu.dot_dimension_numbers<[2], [1], [1], [2], [0, 0, 0, 1, 1, 2], [0], [0]>} : vector<1x8x8xbf16>, vector<1x8x8xbf16>, vector<1x8x8xf32> -> vector<1x8x8xf32>
    "tpu.trace_stop"() : () -> ()
    %c0_27 = arith.constant 0 : index
    %c0_28 = arith.constant 0 : index
    %c8 = arith.constant 8 : index
    %69 = vector.load %arg11[%c0_27, %c0_28, %c8] : memref<1x8x32xf32, #tpu.memory_space<vmem>>, vector<1x8x8xf32>
    tpu.vector_store %arg11[%c0_27, %c0_28, %c8], %68 {strides = array<i32>} : memref<1x8x32xf32, #tpu.memory_space<vmem>>, vector<1x8x8xf32>,
    %70 = vector.extract_strided_slice %13 {offsets = [0, 0, 16], sizes = [1, 8, 8], strides = [1, 1, 1]} : vector<1x8x32xbf16> to vector<1x8x8xbf16>
    %71 = vector.extract_strided_slice %15 {offsets = [0, 0, 16], sizes = [1, 8, 8], strides = [1, 1, 1]} : vector<1x8x32xbf16> to vector<1x8x8xbf16>
    "tpu.trace_start"() <{level = 10 : i32, message = "bqd,bkd->bqk"}> : () -> ()
    %cst_29 = arith.constant dense<0.000000e+00> : vector<1x8x8xf32>
    %72 = tpu.matmul %70, %71, %cst_29 {dimension_numbers = #tpu.dot_dimension_numbers<[2], [2], [1], [1], [0, 0, 0, 1, 1, 1], [0], [0]>} : vector<1x8x8xbf16>, vector<1x8x8xbf16>, vector<1x8x8xf32> -> vector<1x8x8xf32>
    "tpu.trace_stop"() : () -> ()
    %73 = vector.shape_cast %18 : vector<8x8xf32> to vector<1x8x8xf32>
    %74 = arith.addf %72, %73 : vector<1x8x8xf32>
    %cst_30 = arith.constant 5.000000e-01 : f32
    %75 = vector.broadcast %cst_30 : f32 to vector<1x1x8xf32>
    %76 = arith.cmpf ogt, %19, %75 : vector<1x1x8xf32>
    %cst_31 = arith.constant -1.000000e+30 : f32
    %77 = vector.shape_cast %76 : vector<1x1x8xi1> to vector<1x1x8xi1>
    %78 = vector.broadcast %77 : vector<1x1x8xi1> to vector<1x8x8xi1>
    %79 = vector.broadcast %cst_31 : f32 to vector<1x8x8xf32>
    %80 = arith.select %78, %79, %74 : vector<1x8x8xi1>, vector<1x8x8xf32>
    %cst_32 = arith.constant dense<0xFF800000> : vector<1x8xf32>
    %81 = vector.multi_reduction <maximumf>, %80, %cst_32 [2] : vector<1x8x8xf32> to vector<1x8xf32>
    %82 = vector.shape_cast %81 : vector<1x8xf32> to vector<1x8x1xf32>
    %83 = vector.broadcast %82 : vector<1x8x1xf32> to vector<1x8x8xf32>
    %84 = arith.subf %80, %83 : vector<1x8x8xf32>
    %85 = math.exp %84 : vector<1x8x8xf32>
    %cst_33 = arith.constant dense<0.000000e+00> : vector<1x8xf32>
    %86 = vector.multi_reduction <add>, %85, %cst_33 [2] : vector<1x8x8xf32> to vector<1x8xf32>
    %87 = vector.shape_cast %86 : vector<1x8xf32> to vector<1x8x1xf32>
    %88 = tpu.reciprocal %87 {approx = true} : vector<1x8x1xf32> -> vector<1x8x1xf32>
    %89 = vector.broadcast %88 : vector<1x8x1xf32> to vector<1x8x8xf32>
    %90 = arith.mulf %85, %89 : vector<1x8x8xf32>
    %91 = arith.truncf %90 : vector<1x8x8xf32> to vector<1x8x8xbf16>
    %92 = vector.extract_strided_slice %17 {offsets = [0, 0, 16], sizes = [1, 8, 8], strides = [1, 1, 1]} : vector<1x8x32xbf16> to vector<1x8x8xbf16>
    "tpu.trace_start"() <{level = 10 : i32, message = "bqk,bkd->bqd"}> : () -> ()
    %cst_34 = arith.constant dense<0.000000e+00> : vector<1x8x8xf32>
    %93 = tpu.matmul %91, %92, %cst_34 {dimension_numbers = #tpu.dot_dimension_numbers<[2], [1], [1], [2], [0, 0, 0, 1, 1, 2], [0], [0]>} : vector<1x8x8xbf16>, vector<1x8x8xbf16>, vector<1x8x8xf32> -> vector<1x8x8xf32>
    "tpu.trace_stop"() : () -> ()
    %c0_35 = arith.constant 0 : index
    %c0_36 = arith.constant 0 : index
    %c16 = arith.constant 16 : index
    %94 = vector.load %arg11[%c0_35, %c0_36, %c16] : memref<1x8x32xf32, #tpu.memory_space<vmem>>, vector<1x8x8xf32>
    tpu.vector_store %arg11[%c0_35, %c0_36, %c16], %93 {strides = array<i32>} : memref<1x8x32xf32, #tpu.memory_space<vmem>>, vector<1x8x8xf32>,
    %95 = vector.extract_strided_slice %13 {offsets = [0, 0, 24], sizes = [1, 8, 8], strides = [1, 1, 1]} : vector<1x8x32xbf16> to vector<1x8x8xbf16>
    %96 = vector.extract_strided_slice %15 {offsets = [0, 0, 24], sizes = [1, 8, 8], strides = [1, 1, 1]} : vector<1x8x32xbf16> to vector<1x8x8xbf16>
    "tpu.trace_start"() <{level = 10 : i32, message = "bqd,bkd->bqk"}> : () -> ()
    %cst_37 = arith.constant dense<0.000000e+00> : vector<1x8x8xf32>
    %97 = tpu.matmul %95, %96, %cst_37 {dimension_numbers = #tpu.dot_dimension_numbers<[2], [2], [1], [1], [0, 0, 0, 1, 1, 1], [0], [0]>} : vector<1x8x8xbf16>, vector<1x8x8xbf16>, vector<1x8x8xf32> -> vector<1x8x8xf32>
    "tpu.trace_stop"() : () -> ()
    %98 = vector.shape_cast %18 : vector<8x8xf32> to vector<1x8x8xf32>
    %99 = arith.addf %97, %98 : vector<1x8x8xf32>
    %cst_38 = arith.constant 5.000000e-01 : f32
    %100 = vector.broadcast %cst_38 : f32 to vector<1x1x8xf32>
    %101 = arith.cmpf ogt, %19, %100 : vector<1x1x8xf32>
    %cst_39 = arith.constant -1.000000e+30 : f32
    %102 = vector.shape_cast %101 : vector<1x1x8xi1> to vector<1x1x8xi1>
    %103 = vector.broadcast %102 : vector<1x1x8xi1> to vector<1x8x8xi1>
    %104 = vector.broadcast %cst_39 : f32 to vector<1x8x8xf32>
    %105 = arith.select %103, %104, %99 : vector<1x8x8xi1>, vector<1x8x8xf32>
    %cst_40 = arith.constant dense<0xFF800000> : vector<1x8xf32>
    %106 = vector.multi_reduction <maximumf>, %105, %cst_40 [2] : vector<1x8x8xf32> to vector<1x8xf32>
    %107 = vector.shape_cast %106 : vector<1x8xf32> to vector<1x8x1xf32>
    %108 = vector.broadcast %107 : vector<1x8x1xf32> to vector<1x8x8xf32>
    %109 = arith.subf %105, %108 : vector<1x8x8xf32>
    %110 = math.exp %109 : vector<1x8x8xf32>
    %cst_41 = arith.constant dense<0.000000e+00> : vector<1x8xf32>
    %111 = vector.multi_reduction <add>, %110, %cst_41 [2] : vector<1x8x8xf32> to vector<1x8xf32>
    %112 = vector.shape_cast %111 : vector<1x8xf32> to vector<1x8x1xf32>
    %113 = tpu.reciprocal %112 {approx = true} : vector<1x8x1xf32> -> vector<1x8x1xf32>
    %114 = vector.broadcast %113 : vector<1x8x1xf32> to vector<1x8x8xf32>
    %115 = arith.mulf %110, %114 : vector<1x8x8xf32>
    %116 = arith.truncf %115 : vector<1x8x8xf32> to vector<1x8x8xbf16>
    %117 = vector.extract_strided_slice %17 {offsets = [0, 0, 24], sizes = [1, 8, 8], strides = [1, 1, 1]} : vector<1x8x32xbf16> to vector<1x8x8xbf16>
    "tpu.trace_start"() <{level = 10 : i32, message = "bqk,bkd->bqd"}> : () -> ()
    %cst_42 = arith.constant dense<0.000000e+00> : vector<1x8x8xf32>
    %118 = tpu.matmul %116, %117, %cst_42 {dimension_numbers = #tpu.dot_dimension_numbers<[2], [1], [1], [2], [0, 0, 0, 1, 1, 2], [0], [0]>} : vector<1x8x8xbf16>, vector<1x8x8xbf16>, vector<1x8x8xf32> -> vector<1x8x8xf32>
    "tpu.trace_stop"() : () -> ()
    %c0_43 = arith.constant 0 : index
    %c0_44 = arith.constant 0 : index
    %c24 = arith.constant 24 : index
    %119 = vector.load %arg11[%c0_43, %c0_44, %c24] : memref<1x8x32xf32, #tpu.memory_space<vmem>>, vector<1x8x8xf32>
    tpu.vector_store %arg11[%c0_43, %c0_44, %c24], %118 {strides = array<i32>} : memref<1x8x32xf32, #tpu.memory_space<vmem>>, vector<1x8x8xf32>,
    %c0_45 = arith.constant 0 : index
    %c0_46 = arith.constant 0 : index
    %c0_47 = arith.constant 0 : index
    %120 = vector.load %arg11[%c0_45, %c0_46, %c0_47] : memref<1x8x32xf32, #tpu.memory_space<vmem>>, vector<1x8x32xf32>
    %121 = vector.shape_cast %120 : vector<1x8x32xf32> to vector<8x32xf32>
    %122 = arith.truncf %121 : vector<8x32xf32> to vector<8x32xbf16>
    %c0_48 = arith.constant 0 : index
    %c0_49 = arith.constant 0 : index
    %123 = vector.load %arg4[%c0_48, %c0_49] : memref<32x32xbf16, #tpu.memory_space<vmem>>, vector<32x32xbf16>
    %cst_50 = arith.constant dense<0.000000e+00> : vector<8x32xf32>
    %124 = tpu.matmul %122, %123, %cst_50 {dimension_numbers = #tpu.dot_dimension_numbers<[1], [0], [0], [1], [0, 0, 1, 1], [], []>} : vector<8x32xbf16>, vector<32x32xbf16>, vector<8x32xf32> -> vector<8x32xf32>
    %c0_51 = arith.constant 0 : index
    %c0_52 = arith.constant 0 : index
    %125 = vector.load %arg5[%c0_51, %c0_52] : memref<1x32xf32, #tpu.memory_space<vmem>>, vector<1x32xf32>
    %126 = vector.broadcast %125 : vector<1x32xf32> to vector<8x32xf32>
    %127 = arith.addf %124, %126 : vector<8x32xf32>
    %128 = arith.extf %3 : vector<8x32xbf16> to vector<8x32xf32>
    %129 = arith.addf %128, %127 : vector<8x32xf32>
    %c0_53 = arith.constant 0 : index
    %c0_54 = arith.constant 0 : index
    %130 = vector.load %arg6[%c0_53, %c0_54] : memref<1x32xf32, #tpu.memory_space<vmem>>, vector<1x32xf32>
    %c0_55 = arith.constant 0 : index
    %c0_56 = arith.constant 0 : index
    %131 = vector.load %arg7[%c0_55, %c0_56] : memref<1x32xf32, #tpu.memory_space<vmem>>, vector<1x32xf32>
    %cst_57 = arith.constant dense<0.000000e+00> : vector<8xf32>
    %132 = vector.multi_reduction <add>, %129, %cst_57 [1] : vector<8x32xf32> to vector<8xf32>
    %133 = vector.shape_cast %132 : vector<8xf32> to vector<8x1xf32>
    %cst_58 = arith.constant 3.200000e+01 : f32
    %134 = vector.broadcast %cst_58 : f32 to vector<8x1xf32>
    %135 = arith.divf %133, %134 : vector<8x1xf32>
    %136 = vector.broadcast %135 : vector<8x1xf32> to vector<8x32xf32>
    %137 = arith.subf %129, %136 : vector<8x32xf32>
    %138 = arith.mulf %137, %137 : vector<8x32xf32>
    %cst_59 = arith.constant dense<0.000000e+00> : vector<8xf32>
    %139 = vector.multi_reduction <add>, %138, %cst_59 [1] : vector<8x32xf32> to vector<8xf32>
    %140 = vector.shape_cast %139 : vector<8xf32> to vector<8x1xf32>
    %cst_60 = arith.constant 3.200000e+01 : f32
    %141 = vector.broadcast %cst_60 : f32 to vector<8x1xf32>
    %142 = arith.divf %140, %141 : vector<8x1xf32>
    %cst_61 = arith.constant 9.99999974E-6 : f32
    %143 = vector.broadcast %cst_61 : f32 to vector<8x1xf32>
    %144 = arith.addf %142, %143 : vector<8x1xf32>
    %145 = math.rsqrt %144 : vector<8x1xf32>
    %146 = vector.broadcast %145 : vector<8x1xf32> to vector<8x32xf32>
    %147 = arith.mulf %137, %146 : vector<8x32xf32>
    %148 = vector.broadcast %130 : vector<1x32xf32> to vector<8x32xf32>
    %149 = arith.mulf %147, %148 : vector<8x32xf32>
    %150 = vector.broadcast %131 : vector<1x32xf32> to vector<8x32xf32>
    %151 = arith.addf %149, %150 : vector<8x32xf32>
    %152 = vector.shape_cast %151 : vector<8x32xf32> to vector<1x8x32xf32>
    %153 = arith.truncf %152 : vector<1x8x32xf32> to vector<1x8x32xbf16>
    %c0_62 = arith.constant 0 : index
    %c0_63 = arith.constant 0 : index
    %c0_64 = arith.constant 0 : index
    %154 = vector.load %arg10[%c0_62, %c0_63, %c0_64] : memref<1x8x32xbf16, #tpu.memory_space<vmem>>, vector<1x8x32xbf16>
    tpu.vector_store %arg10[%c0_62, %c0_63, %c0_64], %153 {strides = array<i32>} : memref<1x8x32xbf16, #tpu.memory_space<vmem>>, vector<1x8x32xbf16>,
    return
  }
  func.func @transform_0(%arg0: i32) -> (i32, i32, i32) {
    %c0_i32 = arith.constant 0 : i32
    %c0_i32_0 = arith.constant 0 : i32
    %c0_i32_1 = arith.constant 0 : i32
    return %arg0, %c0_i32, %c0_i32_0 : i32, i32, i32
  }
  func.func @transform_1(%arg0: i32) -> (i32, i32) {
    %c0_i32 = arith.constant 0 : i32
    %c0_i32_0 = arith.constant 0 : i32
    %c0_i32_1 = arith.constant 0 : i32
    return %c0_i32, %c0_i32_0 : i32, i32
  }
  func.func @transform_2(%arg0: i32) -> (i32, i32) {
    %c0_i32 = arith.constant 0 : i32
    %c0_i32_0 = arith.constant 0 : i32
    %c0_i32_1 = arith.constant 0 : i32
    return %c0_i32, %c0_i32_0 : i32, i32
  }
  func.func @transform_3(%arg0: i32) -> (i32, i32) {
    %c0_i32 = arith.constant 0 : i32
    %c0_i32_0 = arith.constant 0 : i32
    %c0_i32_1 = arith.constant 0 : i32
    return %c0_i32, %c0_i32_0 : i32, i32
  }
  func.func @transform_4(%arg0: i32) -> (i32, i32) {
    %c0_i32 = arith.constant 0 : i32
    %c0_i32_0 = arith.constant 0 : i32
    %c0_i32_1 = arith.constant 0 : i32
    return %c0_i32, %c0_i32_0 : i32, i32
  }
  func.func @transform_5(%arg0: i32) -> (i32, i32) {
    %c0_i32 = arith.constant 0 : i32
    %c0_i32_0 = arith.constant 0 : i32
    %c0_i32_1 = arith.constant 0 : i32
    return %c0_i32, %c0_i32_0 : i32, i32
  }
  func.func @transform_6(%arg0: i32) -> (i32, i32) {
    %c0_i32 = arith.constant 0 : i32
    %c0_i32_0 = arith.constant 0 : i32
    %c0_i32_1 = arith.constant 0 : i32
    return %c0_i32, %c0_i32_0 : i32, i32
  }
  func.func @transform_7(%arg0: i32) -> (i32, i32) {
    %c0_i32 = arith.constant 0 : i32
    %c0_i32_0 = arith.constant 0 : i32
    %c0_i32_1 = arith.constant 0 : i32
    return %c0_i32, %c0_i32_0 : i32, i32
  }
  func.func @transform_8(%arg0: i32) -> (i32, i32, i32) {
    %c0_i32 = arith.constant 0 : i32
    %c0_i32_0 = arith.constant 0 : i32
    %c0_i32_1 = arith.constant 0 : i32
    return %arg0, %c0_i32, %c0_i32_0 : i32, i32, i32
  }
  func.func @transform_9(%arg0: i32) -> (i32, i32, i32) {
    %c0_i32 = arith.constant 0 : i32
    %c0_i32_0 = arith.constant 0 : i32
    %c0_i32_1 = arith.constant 0 : i32
    return %arg0, %c0_i32, %c0_i32_0 : i32, i32, i32
  }
}

module attributes {stable_mosaic.version = 11 : i64} {
  func.func @kernel(%arg0: i32, %arg1: memref<1x8x32xbf16, #tpu.memory_space<vmem>>, %arg2: memref<1x8x32xbf16, #tpu.memory_space<vmem>>, %arg3: memref<32x96xbf16, #tpu.memory_space<vmem>>, %arg4: memref<1x96xf32, #tpu.memory_space<vmem>>, %arg5: memref<32x32xbf16, #tpu.memory_space<vmem>>, %arg6: memref<1x32xf32, #tpu.memory_space<vmem>>, %arg7: memref<1x32xf32, #tpu.memory_space<vmem>>, %arg8: memref<1x32xf32, #tpu.memory_space<vmem>>, %arg9: memref<1x1x8xf32, #tpu.memory_space<vmem>>, %arg10: memref<1x8x32xbf16, #tpu.memory_space<vmem>>, %arg11: memref<1x8x32xf32, #tpu.memory_space<vmem>>) attributes {dimension_semantics = [#tpu.dimension_semantics<parallel>], iteration_bounds = array<i64: 2>, scalar_prefetch = 0 : i64, scratch_operands = 1 : i64, tpu.core_type = #tpu.core_type<tc>, window_params = [{transform_indices = @transform_0, window_bounds = array<i64: 1, 8, 32>}, {transform_indices = @transform_1, window_bounds = array<i64: 1, 8, 32>}, {pipeline_mode = #tpu.pipeline_mode<synchronous>, transform_indices = @transform_2, window_bounds = array<i64: 32, 96>}, {pipeline_mode = #tpu.pipeline_mode<synchronous>, transform_indices = @transform_3, window_bounds = array<i64: 1, 96>}, {pipeline_mode = #tpu.pipeline_mode<synchronous>, transform_indices = @transform_4, window_bounds = array<i64: 32, 32>}, {pipeline_mode = #tpu.pipeline_mode<synchronous>, transform_indices = @transform_5, window_bounds = array<i64: 1, 32>}, {pipeline_mode = #tpu.pipeline_mode<synchronous>, transform_indices = @transform_6, window_bounds = array<i64: 1, 32>}, {pipeline_mode = #tpu.pipeline_mode<synchronous>, transform_indices = @transform_7, window_bounds = array<i64: 1, 32>}, {transform_indices = @transform_8, window_bounds = array<i64: 1, 1, 8>}, {transform_indices = @transform_9, window_bounds = array<i64: 1, 8, 32>}]} {
    %c0 = arith.constant 0 : index
    %c0_0 = arith.constant 0 : index
    %c0_1 = arith.constant 0 : index
    %0 = vector.load %arg1[%c0, %c0_0, %c0_1] : memref<1x8x32xbf16, #tpu.memory_space<vmem>>, vector<1x8x32xbf16>
    %c0_2 = arith.constant 0 : index
    %c0_3 = arith.constant 0 : index
    %1 = vector.load %arg3[%c0_2, %c0_3] : memref<32x96xbf16, #tpu.memory_space<vmem>>, vector<32x96xbf16>
    %c0_4 = arith.constant 0 : index
    %c0_5 = arith.constant 0 : index
    %2 = vector.load %arg4[%c0_4, %c0_5] : memref<1x96xf32, #tpu.memory_space<vmem>>, vector<1x96xf32>
    %3 = vector.shape_cast %0 : vector<1x8x32xbf16> to vector<8x32xbf16>
    %c0_6 = arith.constant 0 : index
    %c0_7 = arith.constant 0 : index
    %c0_8 = arith.constant 0 : index
    %4 = vector.load %arg2[%c0_6, %c0_7, %c0_8] : memref<1x8x32xbf16, #tpu.memory_space<vmem>>, vector<1x8x32xbf16>
    %5 = vector.shape_cast %4 : vector<1x8x32xbf16> to vector<8x32xbf16>
    %6 = vector.extract_strided_slice %1 {offsets = [0, 0], sizes = [32, 32], strides = [1, 1]} : vector<32x96xbf16> to vector<32x32xbf16>
    %cst = arith.constant dense<0.000000e+00> : vector<8x32xf32>
    %7 = tpu.matmul %3, %6, %cst {dimension_numbers = #tpu.dot_dimension_numbers<[1], [0], [0], [1], [0, 0, 1, 1], [], []>} : vector<8x32xbf16>, vector<32x32xbf16>, vector<8x32xf32> -> vector<8x32xf32>
    %8 = vector.extract_strided_slice %2 {offsets = [0, 0], sizes = [1, 32], strides = [1, 1]} : vector<1x96xf32> to vector<1x32xf32>
    %9 = vector.broadcast %8 : vector<1x32xf32> to vector<8x32xf32>
    %10 = arith.addf %7, %9 : vector<8x32xf32>
    %11 = vector.extract_strided_slice %1 {offsets = [0, 32], sizes = [32, 64], strides = [1, 1]} : vector<32x96xbf16> to vector<32x64xbf16>
    %cst_9 = arith.constant dense<0.000000e+00> : vector<8x64xf32>
    %12 = tpu.matmul %5, %11, %cst_9 {dimension_numbers = #tpu.dot_dimension_numbers<[1], [0], [0], [1], [0, 0, 1, 1], [], []>} : vector<8x32xbf16>, vector<32x64xbf16>, vector<8x64xf32> -> vector<8x64xf32>
    %13 = vector.extract_strided_slice %2 {offsets = [0, 32], sizes = [1, 64], strides = [1, 1]} : vector<1x96xf32> to vector<1x64xf32>
    %14 = vector.broadcast %13 : vector<1x64xf32> to vector<8x64xf32>
    %15 = arith.addf %12, %14 : vector<8x64xf32>
    %16 = vector.extract_strided_slice %15 {offsets = [0, 0], sizes = [8, 32], strides = [1, 1]} : vector<8x64xf32> to vector<8x32xf32>
    %17 = vector.extract_strided_slice %15 {offsets = [0, 32], sizes = [8, 32], strides = [1, 1]} : vector<8x64xf32> to vector<8x32xf32>
    %cst_10 = arith.constant 0.353553385 : f32
    %18 = vector.broadcast %cst_10 : f32 to vector<8x32xf32>
    %19 = arith.mulf %10, %18 : vector<8x32xf32>
    %20 = arith.truncf %19 : vector<8x32xf32> to vector<8x32xbf16>
    %21 = vector.shape_cast %20 : vector<8x32xbf16> to vector<1x8x32xbf16>
    %22 = arith.truncf %16 : vector<8x32xf32> to vector<8x32xbf16>
    %23 = vector.shape_cast %22 : vector<8x32xbf16> to vector<1x8x32xbf16>
    %24 = arith.truncf %17 : vector<8x32xf32> to vector<8x32xbf16>
    %25 = vector.shape_cast %24 : vector<8x32xbf16> to vector<1x8x32xbf16>
    %c0_11 = arith.constant 0 : index
    %c0_12 = arith.constant 0 : index
    %c0_13 = arith.constant 0 : index
    %26 = vector.load %arg9[%c0_11, %c0_12, %c0_13] : memref<1x1x8xf32, #tpu.memory_space<vmem>>, vector<1x1x8xf32>
    %27 = vector.extract_strided_slice %21 {offsets = [0, 0, 0], sizes = [1, 8, 8], strides = [1, 1, 1]} : vector<1x8x32xbf16> to vector<1x8x8xbf16>
    %28 = vector.extract_strided_slice %23 {offsets = [0, 0, 0], sizes = [1, 8, 8], strides = [1, 1, 1]} : vector<1x8x32xbf16> to vector<1x8x8xbf16>
    "tpu.trace_start"() <{level = 10 : i32, message = "bqd,bkd->bqk"}> : () -> ()
    %cst_14 = arith.constant dense<0.000000e+00> : vector<1x8x8xf32>
    %29 = tpu.matmul %27, %28, %cst_14 {dimension_numbers = #tpu.dot_dimension_numbers<[2], [2], [1], [1], [0, 0, 0, 1, 1, 1], [0], [0]>} : vector<1x8x8xbf16>, vector<1x8x8xbf16>, vector<1x8x8xf32> -> vector<1x8x8xf32>
    %cst_15 = arith.constant 5.000000e-01 : f32
    "tpu.trace_stop"() : () -> ()
    %30 = vector.broadcast %cst_15 : f32 to vector<1x1x8xf32>
    %31 = arith.cmpf ogt, %26, %30 : vector<1x1x8xf32>
    %cst_16 = arith.constant -1.000000e+30 : f32
    %32 = vector.shape_cast %31 : vector<1x1x8xi1> to vector<1x1x8xi1>
    %33 = vector.broadcast %32 : vector<1x1x8xi1> to vector<1x8x8xi1>
    %34 = vector.broadcast %cst_16 : f32 to vector<1x8x8xf32>
    %35 = arith.select %33, %34, %29 : vector<1x8x8xi1>, vector<1x8x8xf32>
    %cst_17 = arith.constant dense<0xFF800000> : vector<1x8xf32>
    %36 = vector.multi_reduction <maximumf>, %35, %cst_17 [2] : vector<1x8x8xf32> to vector<1x8xf32>
    %37 = vector.shape_cast %36 : vector<1x8xf32> to vector<1x8x1xf32>
    %38 = vector.broadcast %37 : vector<1x8x1xf32> to vector<1x8x8xf32>
    %39 = arith.subf %35, %38 : vector<1x8x8xf32>
    %40 = math.exp %39 : vector<1x8x8xf32>
    %cst_18 = arith.constant dense<0.000000e+00> : vector<1x8xf32>
    %41 = vector.multi_reduction <add>, %40, %cst_18 [2] : vector<1x8x8xf32> to vector<1x8xf32>
    %42 = vector.shape_cast %41 : vector<1x8xf32> to vector<1x8x1xf32>
    %43 = tpu.reciprocal %42 {approx = true} : vector<1x8x1xf32> -> vector<1x8x1xf32>
    %44 = vector.broadcast %43 : vector<1x8x1xf32> to vector<1x8x8xf32>
    %45 = arith.mulf %40, %44 : vector<1x8x8xf32>
    %46 = arith.truncf %45 : vector<1x8x8xf32> to vector<1x8x8xbf16>
    %47 = vector.extract_strided_slice %25 {offsets = [0, 0, 0], sizes = [1, 8, 8], strides = [1, 1, 1]} : vector<1x8x32xbf16> to vector<1x8x8xbf16>
    "tpu.trace_start"() <{level = 10 : i32, message = "bqk,bkd->bqd"}> : () -> ()
    %cst_19 = arith.constant dense<0.000000e+00> : vector<1x8x8xf32>
    %48 = tpu.matmul %46, %47, %cst_19 {dimension_numbers = #tpu.dot_dimension_numbers<[2], [1], [1], [2], [0, 0, 0, 1, 1, 2], [0], [0]>} : vector<1x8x8xbf16>, vector<1x8x8xbf16>, vector<1x8x8xf32> -> vector<1x8x8xf32>
    "tpu.trace_stop"() : () -> ()
    %c0_20 = arith.constant 0 : index
    %c0_21 = arith.constant 0 : index
    %c0_22 = arith.constant 0 : index
    %49 = vector.load %arg11[%c0_20, %c0_21, %c0_22] : memref<1x8x32xf32, #tpu.memory_space<vmem>>, vector<1x8x8xf32>
    tpu.vector_store %arg11[%c0_20, %c0_21, %c0_22], %48 {strides = array<i32>} : memref<1x8x32xf32, #tpu.memory_space<vmem>>, vector<1x8x8xf32>,
    %50 = vector.extract_strided_slice %21 {offsets = [0, 0, 8], sizes = [1, 8, 8], strides = [1, 1, 1]} : vector<1x8x32xbf16> to vector<1x8x8xbf16>
    %51 = vector.extract_strided_slice %23 {offsets = [0, 0, 8], sizes = [1, 8, 8], strides = [1, 1, 1]} : vector<1x8x32xbf16> to vector<1x8x8xbf16>
    "tpu.trace_start"() <{level = 10 : i32, message = "bqd,bkd->bqk"}> : () -> ()
    %cst_23 = arith.constant dense<0.000000e+00> : vector<1x8x8xf32>
    %52 = tpu.matmul %50, %51, %cst_23 {dimension_numbers = #tpu.dot_dimension_numbers<[2], [2], [1], [1], [0, 0, 0, 1, 1, 1], [0], [0]>} : vector<1x8x8xbf16>, vector<1x8x8xbf16>, vector<1x8x8xf32> -> vector<1x8x8xf32>
    %cst_24 = arith.constant 5.000000e-01 : f32
    "tpu.trace_stop"() : () -> ()
    %53 = vector.broadcast %cst_24 : f32 to vector<1x1x8xf32>
    %54 = arith.cmpf ogt, %26, %53 : vector<1x1x8xf32>
    %cst_25 = arith.constant -1.000000e+30 : f32
    %55 = vector.shape_cast %54 : vector<1x1x8xi1> to vector<1x1x8xi1>
    %56 = vector.broadcast %55 : vector<1x1x8xi1> to vector<1x8x8xi1>
    %57 = vector.broadcast %cst_25 : f32 to vector<1x8x8xf32>
    %58 = arith.select %56, %57, %52 : vector<1x8x8xi1>, vector<1x8x8xf32>
    %cst_26 = arith.constant dense<0xFF800000> : vector<1x8xf32>
    %59 = vector.multi_reduction <maximumf>, %58, %cst_26 [2] : vector<1x8x8xf32> to vector<1x8xf32>
    %60 = vector.shape_cast %59 : vector<1x8xf32> to vector<1x8x1xf32>
    %61 = vector.broadcast %60 : vector<1x8x1xf32> to vector<1x8x8xf32>
    %62 = arith.subf %58, %61 : vector<1x8x8xf32>
    %63 = math.exp %62 : vector<1x8x8xf32>
    %cst_27 = arith.constant dense<0.000000e+00> : vector<1x8xf32>
    %64 = vector.multi_reduction <add>, %63, %cst_27 [2] : vector<1x8x8xf32> to vector<1x8xf32>
    %65 = vector.shape_cast %64 : vector<1x8xf32> to vector<1x8x1xf32>
    %66 = tpu.reciprocal %65 {approx = true} : vector<1x8x1xf32> -> vector<1x8x1xf32>
    %67 = vector.broadcast %66 : vector<1x8x1xf32> to vector<1x8x8xf32>
    %68 = arith.mulf %63, %67 : vector<1x8x8xf32>
    %69 = arith.truncf %68 : vector<1x8x8xf32> to vector<1x8x8xbf16>
    %70 = vector.extract_strided_slice %25 {offsets = [0, 0, 8], sizes = [1, 8, 8], strides = [1, 1, 1]} : vector<1x8x32xbf16> to vector<1x8x8xbf16>
    "tpu.trace_start"() <{level = 10 : i32, message = "bqk,bkd->bqd"}> : () -> ()
    %cst_28 = arith.constant dense<0.000000e+00> : vector<1x8x8xf32>
    %71 = tpu.matmul %69, %70, %cst_28 {dimension_numbers = #tpu.dot_dimension_numbers<[2], [1], [1], [2], [0, 0, 0, 1, 1, 2], [0], [0]>} : vector<1x8x8xbf16>, vector<1x8x8xbf16>, vector<1x8x8xf32> -> vector<1x8x8xf32>
    "tpu.trace_stop"() : () -> ()
    %c0_29 = arith.constant 0 : index
    %c0_30 = arith.constant 0 : index
    %c8 = arith.constant 8 : index
    %72 = vector.load %arg11[%c0_29, %c0_30, %c8] : memref<1x8x32xf32, #tpu.memory_space<vmem>>, vector<1x8x8xf32>
    tpu.vector_store %arg11[%c0_29, %c0_30, %c8], %71 {strides = array<i32>} : memref<1x8x32xf32, #tpu.memory_space<vmem>>, vector<1x8x8xf32>,
    %73 = vector.extract_strided_slice %21 {offsets = [0, 0, 16], sizes = [1, 8, 8], strides = [1, 1, 1]} : vector<1x8x32xbf16> to vector<1x8x8xbf16>
    %74 = vector.extract_strided_slice %23 {offsets = [0, 0, 16], sizes = [1, 8, 8], strides = [1, 1, 1]} : vector<1x8x32xbf16> to vector<1x8x8xbf16>
    "tpu.trace_start"() <{level = 10 : i32, message = "bqd,bkd->bqk"}> : () -> ()
    %cst_31 = arith.constant dense<0.000000e+00> : vector<1x8x8xf32>
    %75 = tpu.matmul %73, %74, %cst_31 {dimension_numbers = #tpu.dot_dimension_numbers<[2], [2], [1], [1], [0, 0, 0, 1, 1, 1], [0], [0]>} : vector<1x8x8xbf16>, vector<1x8x8xbf16>, vector<1x8x8xf32> -> vector<1x8x8xf32>
    %cst_32 = arith.constant 5.000000e-01 : f32
    "tpu.trace_stop"() : () -> ()
    %76 = vector.broadcast %cst_32 : f32 to vector<1x1x8xf32>
    %77 = arith.cmpf ogt, %26, %76 : vector<1x1x8xf32>
    %cst_33 = arith.constant -1.000000e+30 : f32
    %78 = vector.shape_cast %77 : vector<1x1x8xi1> to vector<1x1x8xi1>
    %79 = vector.broadcast %78 : vector<1x1x8xi1> to vector<1x8x8xi1>
    %80 = vector.broadcast %cst_33 : f32 to vector<1x8x8xf32>
    %81 = arith.select %79, %80, %75 : vector<1x8x8xi1>, vector<1x8x8xf32>
    %cst_34 = arith.constant dense<0xFF800000> : vector<1x8xf32>
    %82 = vector.multi_reduction <maximumf>, %81, %cst_34 [2] : vector<1x8x8xf32> to vector<1x8xf32>
    %83 = vector.shape_cast %82 : vector<1x8xf32> to vector<1x8x1xf32>
    %84 = vector.broadcast %83 : vector<1x8x1xf32> to vector<1x8x8xf32>
    %85 = arith.subf %81, %84 : vector<1x8x8xf32>
    %86 = math.exp %85 : vector<1x8x8xf32>
    %cst_35 = arith.constant dense<0.000000e+00> : vector<1x8xf32>
    %87 = vector.multi_reduction <add>, %86, %cst_35 [2] : vector<1x8x8xf32> to vector<1x8xf32>
    %88 = vector.shape_cast %87 : vector<1x8xf32> to vector<1x8x1xf32>
    %89 = tpu.reciprocal %88 {approx = true} : vector<1x8x1xf32> -> vector<1x8x1xf32>
    %90 = vector.broadcast %89 : vector<1x8x1xf32> to vector<1x8x8xf32>
    %91 = arith.mulf %86, %90 : vector<1x8x8xf32>
    %92 = arith.truncf %91 : vector<1x8x8xf32> to vector<1x8x8xbf16>
    %93 = vector.extract_strided_slice %25 {offsets = [0, 0, 16], sizes = [1, 8, 8], strides = [1, 1, 1]} : vector<1x8x32xbf16> to vector<1x8x8xbf16>
    "tpu.trace_start"() <{level = 10 : i32, message = "bqk,bkd->bqd"}> : () -> ()
    %cst_36 = arith.constant dense<0.000000e+00> : vector<1x8x8xf32>
    %94 = tpu.matmul %92, %93, %cst_36 {dimension_numbers = #tpu.dot_dimension_numbers<[2], [1], [1], [2], [0, 0, 0, 1, 1, 2], [0], [0]>} : vector<1x8x8xbf16>, vector<1x8x8xbf16>, vector<1x8x8xf32> -> vector<1x8x8xf32>
    "tpu.trace_stop"() : () -> ()
    %c0_37 = arith.constant 0 : index
    %c0_38 = arith.constant 0 : index
    %c16 = arith.constant 16 : index
    %95 = vector.load %arg11[%c0_37, %c0_38, %c16] : memref<1x8x32xf32, #tpu.memory_space<vmem>>, vector<1x8x8xf32>
    tpu.vector_store %arg11[%c0_37, %c0_38, %c16], %94 {strides = array<i32>} : memref<1x8x32xf32, #tpu.memory_space<vmem>>, vector<1x8x8xf32>,
    %96 = vector.extract_strided_slice %21 {offsets = [0, 0, 24], sizes = [1, 8, 8], strides = [1, 1, 1]} : vector<1x8x32xbf16> to vector<1x8x8xbf16>
    %97 = vector.extract_strided_slice %23 {offsets = [0, 0, 24], sizes = [1, 8, 8], strides = [1, 1, 1]} : vector<1x8x32xbf16> to vector<1x8x8xbf16>
    "tpu.trace_start"() <{level = 10 : i32, message = "bqd,bkd->bqk"}> : () -> ()
    %cst_39 = arith.constant dense<0.000000e+00> : vector<1x8x8xf32>
    %98 = tpu.matmul %96, %97, %cst_39 {dimension_numbers = #tpu.dot_dimension_numbers<[2], [2], [1], [1], [0, 0, 0, 1, 1, 1], [0], [0]>} : vector<1x8x8xbf16>, vector<1x8x8xbf16>, vector<1x8x8xf32> -> vector<1x8x8xf32>
    %cst_40 = arith.constant 5.000000e-01 : f32
    "tpu.trace_stop"() : () -> ()
    %99 = vector.broadcast %cst_40 : f32 to vector<1x1x8xf32>
    %100 = arith.cmpf ogt, %26, %99 : vector<1x1x8xf32>
    %cst_41 = arith.constant -1.000000e+30 : f32
    %101 = vector.shape_cast %100 : vector<1x1x8xi1> to vector<1x1x8xi1>
    %102 = vector.broadcast %101 : vector<1x1x8xi1> to vector<1x8x8xi1>
    %103 = vector.broadcast %cst_41 : f32 to vector<1x8x8xf32>
    %104 = arith.select %102, %103, %98 : vector<1x8x8xi1>, vector<1x8x8xf32>
    %cst_42 = arith.constant dense<0xFF800000> : vector<1x8xf32>
    %105 = vector.multi_reduction <maximumf>, %104, %cst_42 [2] : vector<1x8x8xf32> to vector<1x8xf32>
    %106 = vector.shape_cast %105 : vector<1x8xf32> to vector<1x8x1xf32>
    %107 = vector.broadcast %106 : vector<1x8x1xf32> to vector<1x8x8xf32>
    %108 = arith.subf %104, %107 : vector<1x8x8xf32>
    %109 = math.exp %108 : vector<1x8x8xf32>
    %cst_43 = arith.constant dense<0.000000e+00> : vector<1x8xf32>
    %110 = vector.multi_reduction <add>, %109, %cst_43 [2] : vector<1x8x8xf32> to vector<1x8xf32>
    %111 = vector.shape_cast %110 : vector<1x8xf32> to vector<1x8x1xf32>
    %112 = tpu.reciprocal %111 {approx = true} : vector<1x8x1xf32> -> vector<1x8x1xf32>
    %113 = vector.broadcast %112 : vector<1x8x1xf32> to vector<1x8x8xf32>
    %114 = arith.mulf %109, %113 : vector<1x8x8xf32>
    %115 = arith.truncf %114 : vector<1x8x8xf32> to vector<1x8x8xbf16>
    %116 = vector.extract_strided_slice %25 {offsets = [0, 0, 24], sizes = [1, 8, 8], strides = [1, 1, 1]} : vector<1x8x32xbf16> to vector<1x8x8xbf16>
    "tpu.trace_start"() <{level = 10 : i32, message = "bqk,bkd->bqd"}> : () -> ()
    %cst_44 = arith.constant dense<0.000000e+00> : vector<1x8x8xf32>
    %117 = tpu.matmul %115, %116, %cst_44 {dimension_numbers = #tpu.dot_dimension_numbers<[2], [1], [1], [2], [0, 0, 0, 1, 1, 2], [0], [0]>} : vector<1x8x8xbf16>, vector<1x8x8xbf16>, vector<1x8x8xf32> -> vector<1x8x8xf32>
    "tpu.trace_stop"() : () -> ()
    %c0_45 = arith.constant 0 : index
    %c0_46 = arith.constant 0 : index
    %c24 = arith.constant 24 : index
    %118 = vector.load %arg11[%c0_45, %c0_46, %c24] : memref<1x8x32xf32, #tpu.memory_space<vmem>>, vector<1x8x8xf32>
    tpu.vector_store %arg11[%c0_45, %c0_46, %c24], %117 {strides = array<i32>} : memref<1x8x32xf32, #tpu.memory_space<vmem>>, vector<1x8x8xf32>,
    %c0_47 = arith.constant 0 : index
    %c0_48 = arith.constant 0 : index
    %c0_49 = arith.constant 0 : index
    %119 = vector.load %arg11[%c0_47, %c0_48, %c0_49] : memref<1x8x32xf32, #tpu.memory_space<vmem>>, vector<1x8x32xf32>
    %120 = vector.shape_cast %119 : vector<1x8x32xf32> to vector<8x32xf32>
    %121 = arith.truncf %120 : vector<8x32xf32> to vector<8x32xbf16>
    %c0_50 = arith.constant 0 : index
    %c0_51 = arith.constant 0 : index
    %122 = vector.load %arg5[%c0_50, %c0_51] : memref<32x32xbf16, #tpu.memory_space<vmem>>, vector<32x32xbf16>
    %cst_52 = arith.constant dense<0.000000e+00> : vector<8x32xf32>
    %123 = tpu.matmul %121, %122, %cst_52 {dimension_numbers = #tpu.dot_dimension_numbers<[1], [0], [0], [1], [0, 0, 1, 1], [], []>} : vector<8x32xbf16>, vector<32x32xbf16>, vector<8x32xf32> -> vector<8x32xf32>
    %c0_53 = arith.constant 0 : index
    %c0_54 = arith.constant 0 : index
    %124 = vector.load %arg6[%c0_53, %c0_54] : memref<1x32xf32, #tpu.memory_space<vmem>>, vector<1x32xf32>
    %125 = vector.broadcast %124 : vector<1x32xf32> to vector<8x32xf32>
    %126 = arith.addf %123, %125 : vector<8x32xf32>
    %127 = arith.extf %3 : vector<8x32xbf16> to vector<8x32xf32>
    %128 = arith.addf %127, %126 : vector<8x32xf32>
    %c0_55 = arith.constant 0 : index
    %c0_56 = arith.constant 0 : index
    %129 = vector.load %arg7[%c0_55, %c0_56] : memref<1x32xf32, #tpu.memory_space<vmem>>, vector<1x32xf32>
    %c0_57 = arith.constant 0 : index
    %c0_58 = arith.constant 0 : index
    %130 = vector.load %arg8[%c0_57, %c0_58] : memref<1x32xf32, #tpu.memory_space<vmem>>, vector<1x32xf32>
    %cst_59 = arith.constant dense<0.000000e+00> : vector<8xf32>
    %131 = vector.multi_reduction <add>, %128, %cst_59 [1] : vector<8x32xf32> to vector<8xf32>
    %132 = vector.shape_cast %131 : vector<8xf32> to vector<8x1xf32>
    %cst_60 = arith.constant 3.200000e+01 : f32
    %133 = vector.broadcast %cst_60 : f32 to vector<8x1xf32>
    %134 = arith.divf %132, %133 : vector<8x1xf32>
    %135 = vector.broadcast %134 : vector<8x1xf32> to vector<8x32xf32>
    %136 = arith.subf %128, %135 : vector<8x32xf32>
    %137 = arith.mulf %136, %136 : vector<8x32xf32>
    %cst_61 = arith.constant dense<0.000000e+00> : vector<8xf32>
    %138 = vector.multi_reduction <add>, %137, %cst_61 [1] : vector<8x32xf32> to vector<8xf32>
    %139 = vector.shape_cast %138 : vector<8xf32> to vector<8x1xf32>
    %cst_62 = arith.constant 3.200000e+01 : f32
    %140 = vector.broadcast %cst_62 : f32 to vector<8x1xf32>
    %141 = arith.divf %139, %140 : vector<8x1xf32>
    %cst_63 = arith.constant 9.99999974E-6 : f32
    %142 = vector.broadcast %cst_63 : f32 to vector<8x1xf32>
    %143 = arith.addf %141, %142 : vector<8x1xf32>
    %144 = math.rsqrt %143 : vector<8x1xf32>
    %145 = vector.broadcast %144 : vector<8x1xf32> to vector<8x32xf32>
    %146 = arith.mulf %136, %145 : vector<8x32xf32>
    %147 = vector.broadcast %129 : vector<1x32xf32> to vector<8x32xf32>
    %148 = arith.mulf %146, %147 : vector<8x32xf32>
    %149 = vector.broadcast %130 : vector<1x32xf32> to vector<8x32xf32>
    %150 = arith.addf %148, %149 : vector<8x32xf32>
    %151 = vector.shape_cast %150 : vector<8x32xf32> to vector<1x8x32xf32>
    %152 = arith.truncf %151 : vector<1x8x32xf32> to vector<1x8x32xbf16>
    %c0_64 = arith.constant 0 : index
    %c0_65 = arith.constant 0 : index
    %c0_66 = arith.constant 0 : index
    %153 = vector.load %arg10[%c0_64, %c0_65, %c0_66] : memref<1x8x32xbf16, #tpu.memory_space<vmem>>, vector<1x8x32xbf16>
    tpu.vector_store %arg10[%c0_64, %c0_65, %c0_66], %152 {strides = array<i32>} : memref<1x8x32xbf16, #tpu.memory_space<vmem>>, vector<1x8x32xbf16>,
    return
  }
  func.func @transform_0(%arg0: i32) -> (i32, i32, i32) {
    %c0_i32 = arith.constant 0 : i32
    %c0_i32_0 = arith.constant 0 : i32
    %c0_i32_1 = arith.constant 0 : i32
    return %arg0, %c0_i32, %c0_i32_0 : i32, i32, i32
  }
  func.func @transform_1(%arg0: i32) -> (i32, i32, i32) {
    %c0_i32 = arith.constant 0 : i32
    %c0_i32_0 = arith.constant 0 : i32
    %c0_i32_1 = arith.constant 0 : i32
    return %arg0, %c0_i32, %c0_i32_0 : i32, i32, i32
  }
  func.func @transform_2(%arg0: i32) -> (i32, i32) {
    %c0_i32 = arith.constant 0 : i32
    %c0_i32_0 = arith.constant 0 : i32
    %c0_i32_1 = arith.constant 0 : i32
    return %c0_i32, %c0_i32_0 : i32, i32
  }
  func.func @transform_3(%arg0: i32) -> (i32, i32) {
    %c0_i32 = arith.constant 0 : i32
    %c0_i32_0 = arith.constant 0 : i32
    %c0_i32_1 = arith.constant 0 : i32
    return %c0_i32, %c0_i32_0 : i32, i32
  }
  func.func @transform_4(%arg0: i32) -> (i32, i32) {
    %c0_i32 = arith.constant 0 : i32
    %c0_i32_0 = arith.constant 0 : i32
    %c0_i32_1 = arith.constant 0 : i32
    return %c0_i32, %c0_i32_0 : i32, i32
  }
  func.func @transform_5(%arg0: i32) -> (i32, i32) {
    %c0_i32 = arith.constant 0 : i32
    %c0_i32_0 = arith.constant 0 : i32
    %c0_i32_1 = arith.constant 0 : i32
    return %c0_i32, %c0_i32_0 : i32, i32
  }
  func.func @transform_6(%arg0: i32) -> (i32, i32) {
    %c0_i32 = arith.constant 0 : i32
    %c0_i32_0 = arith.constant 0 : i32
    %c0_i32_1 = arith.constant 0 : i32
    return %c0_i32, %c0_i32_0 : i32, i32
  }
  func.func @transform_7(%arg0: i32) -> (i32, i32) {
    %c0_i32 = arith.constant 0 : i32
    %c0_i32_0 = arith.constant 0 : i32
    %c0_i32_1 = arith.constant 0 : i32
    return %c0_i32, %c0_i32_0 : i32, i32
  }
  func.func @transform_8(%arg0: i32) -> (i32, i32, i32) {
    %c0_i32 = arith.constant 0 : i32
    %c0_i32_0 = arith.constant 0 : i32
    %c0_i32_1 = arith.constant 0 : i32
    return %arg0, %c0_i32, %c0_i32_0 : i32, i32, i32
  }
  func.func @transform_9(%arg0: i32) -> (i32, i32, i32) {
    %c0_i32 = arith.constant 0 : i32
    %c0_i32_0 = arith.constant 0 : i32
    %c0_i32_1 = arith.constant 0 : i32
    return %arg0, %c0_i32, %c0_i32_0 : i32, i32, i32
  }
}

module attributes {stable_mosaic.version = 11 : i64} {
  func.func @_linear_small_kernel(%arg0: i32, %arg1: memref<16x32xbf16, #tpu.memory_space<vmem>>, %arg2: memref<32x128xbf16, #tpu.memory_space<vmem>>, %arg3: memref<1x128xf32, #tpu.memory_space<vmem>>, %arg4: memref<16x128xf32, #tpu.memory_space<vmem>>) attributes {dimension_semantics = [#tpu.dimension_semantics<arbitrary>], iteration_bounds = array<i64: 1>, scalar_prefetch = 0 : i64, scratch_operands = 0 : i64, tpu.core_type = #tpu.core_type<tc>, window_params = [{pipeline_mode = #tpu.pipeline_mode<synchronous>, transform_indices = @transform_0, window_bounds = array<i64: 16, 32>}, {pipeline_mode = #tpu.pipeline_mode<synchronous>, transform_indices = @transform_1, window_bounds = array<i64: 32, 128>}, {pipeline_mode = #tpu.pipeline_mode<synchronous>, transform_indices = @transform_2, window_bounds = array<i64: 1, 128>}, {pipeline_mode = #tpu.pipeline_mode<synchronous>, transform_indices = @transform_3, window_bounds = array<i64: 16, 128>}]} {
    %c0 = arith.constant 0 : index
    %c0_0 = arith.constant 0 : index
    %0 = vector.load %arg1[%c0, %c0_0] : memref<16x32xbf16, #tpu.memory_space<vmem>>, vector<16x32xbf16>
    %c0_1 = arith.constant 0 : index
    %c0_2 = arith.constant 0 : index
    %1 = vector.load %arg2[%c0_1, %c0_2] : memref<32x128xbf16, #tpu.memory_space<vmem>>, vector<32x128xbf16>
    %cst = arith.constant dense<0.000000e+00> : vector<16x128xf32>
    %2 = tpu.matmul %0, %1, %cst {dimension_numbers = #tpu.dot_dimension_numbers<[1], [0], [0], [1], [0, 0, 1, 1], [], []>} : vector<16x32xbf16>, vector<32x128xbf16>, vector<16x128xf32> -> vector<16x128xf32>
    %c0_3 = arith.constant 0 : index
    %c0_4 = arith.constant 0 : index
    %3 = vector.load %arg3[%c0_3, %c0_4] : memref<1x128xf32, #tpu.memory_space<vmem>>, vector<1x128xf32>
    %4 = vector.broadcast %3 : vector<1x128xf32> to vector<16x128xf32>
    %5 = arith.addf %2, %4 : vector<16x128xf32>
    %c0_5 = arith.constant 0 : index
    %c0_6 = arith.constant 0 : index
    %6 = vector.load %arg4[%c0_5, %c0_6] : memref<16x128xf32, #tpu.memory_space<vmem>>, vector<16x128xf32>
    tpu.vector_store %arg4[%c0_5, %c0_6], %5 {strides = array<i32>} : memref<16x128xf32, #tpu.memory_space<vmem>>, vector<16x128xf32>,
    return
  }
  func.func @transform_0(%arg0: i32) -> (i32, i32) {
    %c0_i32 = arith.constant 0 : i32
    %c0_i32_0 = arith.constant 0 : i32
    %c0_i32_1 = arith.constant 0 : i32
    return %c0_i32, %c0_i32_0 : i32, i32
  }
  func.func @transform_1(%arg0: i32) -> (i32, i32) {
    %c0_i32 = arith.constant 0 : i32
    %c0_i32_0 = arith.constant 0 : i32
    %c0_i32_1 = arith.constant 0 : i32
    return %c0_i32, %c0_i32_0 : i32, i32
  }
  func.func @transform_2(%arg0: i32) -> (i32, i32) {
    %c0_i32 = arith.constant 0 : i32
    %c0_i32_0 = arith.constant 0 : i32
    %c0_i32_1 = arith.constant 0 : i32
    return %c0_i32, %c0_i32_0 : i32, i32
  }
  func.func @transform_3(%arg0: i32) -> (i32, i32) {
    %c0_i32 = arith.constant 0 : i32
    %c0_i32_0 = arith.constant 0 : i32
    %c0_i32_1 = arith.constant 0 : i32
    return %c0_i32, %c0_i32_0 : i32, i32
  }
}

</mosaic_0001>

<llo_original>
// kernel: seq2seq_forward.14
$region0: #{seq2seq_forward.14}
  #allocation0 [shape = 'u32[]', space=smem, size = 0x4, offset = 0x4, fixed_abs, tag = 'smem constant byte address 0x4 - core index']
  #allocation1 [shape = 'u32[144,128]{1,0:T(1,128)}', space=vmem, size = 0x12000, scoped, tag = 'internal scratch']
  %s0 = inlined_call_operand.vmem [shape: bf16[16,32], index: 0, kind: input, shape index: {}]
  %s1 = inlined_call_operand.vmem [shape: bf16[32,64], index: 1, kind: input, shape index: {}]
  %s2 = inlined_call_operand.vmem [shape: f32[1,64], index: 2, kind: input, shape index: {}]
  %s3 = inlined_call_operand.vmem [shape: bf16[64,32], index: 3, kind: input, shape index: {}]
  %s4 = inlined_call_operand.vmem [shape: f32[1,32], index: 4, kind: input, shape index: {}]
  %s5 = inlined_call_operand.vmem [shape: f32[1,32], index: 5, kind: input, shape index: {}]
  %s6 = inlined_call_operand.vmem [shape: f32[1,32], index: 6, kind: input, shape index: {}]
  %s7 = inlined_call_operand.vmem [shape: f32[1,32], index: 7, kind: input, shape index: {}]
  %s8 = inlined_call_operand.vmem [shape: f32[1,32], index: 8, kind: input, shape index: {}]
  %s9 = inlined_call_operand.vmem [shape: bf16[16,32], index: 9, kind: output, shape index: {}]
  %s10 = sld [smem:[#allocation0]]
  $region69: #{seq2seq_forward.14} parent=0
    _
  %s12 = ssub.s32 1, %s10
  %s13 = scalar_select 0, %s12, %s10
  loop: start=0, step=1, limit=4
  $region2: #{seq2seq_forward.14} parent=0 // loop_pre_header
    _
  $region3: #{seq2seq_forward.14} parent=0 // loop_header
    %s15 = sphi 0, %s19
    %p16 = scmp.ge.s32.totalorder %s15, 4
    %s25 = sphi 0, %s27
    %s28 = sphi 0, %s25
    %s29 = sphi 0, %s28
    %s45 = sphi 0, %s29
    %s49 = sphi 0, %s49
    %s51 = sphi 0, %s49
    %s52 = sphi 0, %s51
    %s66 = sphi 0, %s52
    %s70 = sphi 0, %s70
    %s72 = sphi 0, %s70
    %s73 = sphi 0, %s72
    %s87 = sphi 0, %s73
    %s91 = sphi 0, %s91
    %s93 = sphi 0, %s91
    %s94 = sphi 0, %s93
    %s108 = sphi 0, %s94
    %s112 = sphi 0, %s112
    %s114 = sphi 0, %s112
    %s115 = sphi 0, %s114
    %s129 = sphi 0, %s115
    %s133 = sphi 0, %s133
    %s135 = sphi 0, %s133
    %s136 = sphi 0, %s135
    %s150 = sphi 0, %s136
    %s154 = sphi 0, %s154
    %s156 = sphi 0, %s154
    %s157 = sphi 0, %s156
    %s171 = sphi 0, %s157
    %s175 = sphi 0, %s175
    %s177 = sphi 0, %s175
    %s178 = sphi 0, %s177
    %s192 = sphi 0, %s178
    %s196 = sphi 0, %s196
    %s198 = sphi 0, %s196
    %s199 = sphi 0, %s198
    %s213 = sphi 0, %s199
    %s219 = sphi 0, %s221
    %s222 = sphi 0, %s219
    %s223 = sphi 0, %s222
    %s239 = sphi 0, %s223
  $region4: #{seq2seq_forward.14} parent=0 // loop_header_branch
    %18 = sbr.rel (%p16) target = $region8
  $region5: #{seq2seq_forward.14} parent=0 // loop_body
    %s20 = ssub.s32 %s15, 1
    %s21 = ssub.s32 %s15, 2
    %s22 = sadd.s32 %s15, 1
    %s23 = ssub.s32 %s15, %s22
    %p24 = scmp.eq.s32.totalorder %s23, 0
    %s26 = sadd.s32 %s25, 1
    %s27 = scalar_select %p24, %s25, %s26
    %p30 = pneg %p24
    %p31 = scmp.eq.s32.totalorder %s15, 1
    %p32 = por %p30, %p31
    %p33 = scmp.ne.s32.totalorder %s25, %s28
    %p34 = scmp.eq.s32.totalorder %s15, 0
    %p35 = por %p33, %p34
    %p36 = scmp.ne.s32.totalorder %s25, %s28
    %p37 = scmp.eq.s32.totalorder %s20, 1
    %p38 = por %p36, %p37
    %p39 = scmp.ne.s32.totalorder %s28, %s29
    %p40 = scmp.eq.s32.totalorder %s20, 0
    %p41 = por %p39, %p40
    %p42 = scmp.ne.s32.totalorder %s28, %s29
    %p43 = scmp.eq.s32.totalorder %s21, 1
    %p44 = por %p42, %p43
    %p46 = scmp.ne.s32.totalorder %s29, %s45
    %p47 = scmp.eq.s32.totalorder %s21, 0
    %p48 = por %p46, %p47
    %s50 = sadd.s32 %s49, 1
    %p53 = scmp.eq.s32.totalorder %s15, 1
    %p54 = scmp.ne.s32.totalorder %s49, %s51
    %p55 = scmp.eq.s32.totalorder %s15, 0
    %p56 = por %p54, %p55
    %p57 = scmp.ne.s32.totalorder %s49, %s51
    %p58 = scmp.eq.s32.totalorder %s20, 1
    %p59 = por %p57, %p58
    %p60 = scmp.ne.s32.totalorder %s51, %s52
    %p61 = scmp.eq.s32.totalorder %s20, 0
    %p62 = por %p60, %p61
    %p63 = scmp.ne.s32.totalorder %s51, %s52
    %p64 = scmp.eq.s32.totalorder %s21, 1
    %p65 = por %p63, %p64
    %p67 = scmp.ne.s32.totalorder %s52, %s66
    %p68 = scmp.eq.s32.totalorder %s21, 0
    %p69 = por %p67, %p68
    %s71 = sadd.s32 %s70, 1
    %p74 = scmp.eq.s32.totalorder %s15, 1
    %p75 = scmp.ne.s32.totalorder %s70, %s72
    %p76 = scmp.eq.s32.totalorder %s15, 0
    %p77 = por %p75, %p76
    %p78 = scmp.ne.s32.totalorder %s70, %s72
    %p79 = scmp.eq.s32.totalorder %s20, 1
    %p80 = por %p78, %p79
    %p81 = scmp.ne.s32.totalorder %s72, %s73
    %p82 = scmp.eq.s32.totalorder %s20, 0
    %p83 = por %p81, %p82
    %p84 = scmp.ne.s32.totalorder %s72, %s73
    %p85 = scmp.eq.s32.totalorder %s21, 1
    %p86 = por %p84, %p85
    %p88 = scmp.ne.s32.totalorder %s73, %s87
    %p89 = scmp.eq.s32.totalorder %s21, 0
    %p90 = por %p88, %p89
    %s92 = sadd.s32 %s91, 1
    %p95 = scmp.eq.s32.totalorder %s15, 1
    %p96 = scmp.ne.s32.totalorder %s91, %s93
    %p97 = scmp.eq.s32.totalorder %s15, 0
    %p98 = por %p96, %p97
    %p99 = scmp.ne.s32.totalorder %s91, %s93
    %p100 = scmp.eq.s32.totalorder %s20, 1
    %p101 = por %p99, %p100
    %p102 = scmp.ne.s32.totalorder %s93, %s94
    %p103 = scmp.eq.s32.totalorder %s20, 0
    %p104 = por %p102, %p103
    %p105 = scmp.ne.s32.totalorder %s93, %s94
    %p106 = scmp.eq.s32.totalorder %s21, 1
    %p107 = por %p105, %p106
    %p109 = scmp.ne.s32.totalorder %s94, %s108
    %p110 = scmp.eq.s32.totalorder %s21, 0
    %p111 = por %p109, %p110
    %s113 = sadd.s32 %s112, 1
    %p116 = scmp.eq.s32.totalorder %s15, 1
    %p117 = scmp.ne.s32.totalorder %s112, %s114
    %p118 = scmp.eq.s32.totalorder %s15, 0
    %p119 = por %p117, %p118
    %p120 = scmp.ne.s32.totalorder %s112, %s114
    %p121 = scmp.eq.s32.totalorder %s20, 1
    %p122 = por %p120, %p121
    %p123 = scmp.ne.s32.totalorder %s114, %s115
    %p124 = scmp.eq.s32.totalorder %s20, 0
    %p125 = por %p123, %p124
    %p126 = scmp.ne.s32.totalorder %s114, %s115
    %p127 = scmp.eq.s32.totalorder %s21, 1
    %p128 = por %p126, %p127
    %p130 = scmp.ne.s32.totalorder %s115, %s129
    %p131 = scmp.eq.s32.totalorder %s21, 0
    %p132 = por %p130, %p131
    %s134 = sadd.s32 %s133, 1
    %p137 = scmp.eq.s32.totalorder %s15, 1
    %p138 = scmp.ne.s32.totalorder %s133, %s135
    %p139 = scmp.eq.s32.totalorder %s15, 0
    %p140 = por %p138, %p139
    %p141 = scmp.ne.s32.totalorder %s133, %s135
    %p142 = scmp.eq.s32.totalorder %s20, 1
    %p143 = por %p141, %p142
    %p144 = scmp.ne.s32.totalorder %s135, %s136
    %p145 = scmp.eq.s32.totalorder %s20, 0
    %p146 = por %p144, %p145
    %p147 = scmp.ne.s32.totalorder %s135, %s136
    %p148 = scmp.eq.s32.totalorder %s21, 1
    %p149 = por %p147, %p148
    %p151 = scmp.ne.s32.totalorder %s136, %s150
    %p152 = scmp.eq.s32.totalorder %s21, 0
    %p153 = por %p151, %p152
    %s155 = sadd.s32 %s154, 1
    %p158 = scmp.eq.s32.totalorder %s15, 1
    %p159 = scmp.ne.s32.totalorder %s154, %s156
    %p160 = scmp.eq.s32.totalorder %s15, 0
    %p161 = por %p159, %p160
    %p162 = scmp.ne.s32.totalorder %s154, %s156
    %p163 = scmp.eq.s32.totalorder %s20, 1
    %p164 = por %p162, %p163
    %p165 = scmp.ne.s32.totalorder %s156, %s157
    %p166 = scmp.eq.s32.totalorder %s20, 0
    %p167 = por %p165, %p166
    %p168 = scmp.ne.s32.totalorder %s156, %s157
    %p169 = scmp.eq.s32.totalorder %s21, 1
    %p170 = por %p168, %p169
    %p172 = scmp.ne.s32.totalorder %s157, %s171
    %p173 = scmp.eq.s32.totalorder %s21, 0
    %p174 = por %p172, %p173
    %s176 = sadd.s32 %s175, 1
    %p179 = scmp.eq.s32.totalorder %s15, 1
    %p180 = scmp.ne.s32.totalorder %s175, %s177
    %p181 = scmp.eq.s32.totalorder %s15, 0
    %p182 = por %p180, %p181
    %p183 = scmp.ne.s32.totalorder %s175, %s177
    %p184 = scmp.eq.s32.totalorder %s20, 1
    %p185 = por %p183, %p184
    %p186 = scmp.ne.s32.totalorder %s177, %s178
    %p187 = scmp.eq.s32.totalorder %s20, 0
    %p188 = por %p186, %p187
    %p189 = scmp.ne.s32.totalorder %s177, %s178
    %p190 = scmp.eq.s32.totalorder %s21, 1
    %p191 = por %p189, %p190
    %p193 = scmp.ne.s32.totalorder %s178, %s192
    %p194 = scmp.eq.s32.totalorder %s21, 0
    %p195 = por %p193, %p194
    %s197 = sadd.s32 %s196, 1
    %p200 = scmp.eq.s32.totalorder %s15, 1
    %p201 = scmp.ne.s32.totalorder %s196, %s198
    %p202 = scmp.eq.s32.totalorder %s15, 0
    %p203 = por %p201, %p202
    %p204 = scmp.ne.s32.totalorder %s196, %s198
    %p205 = scmp.eq.s32.totalorder %s20, 1
    %p206 = por %p204, %p205
    %p207 = scmp.ne.s32.totalorder %s198, %s199
    %p208 = scmp.eq.s32.totalorder %s20, 0
    %p209 = por %p207, %p208
    %p210 = scmp.ne.s32.totalorder %s198, %s199
    %p211 = scmp.eq.s32.totalorder %s21, 1
    %p212 = por %p210, %p211
    %p214 = scmp.ne.s32.totalorder %s199, %s213
    %p215 = scmp.eq.s32.totalorder %s21, 0
    %p216 = por %p214, %p215
    %s217 = ssub.s32 %s15, %s22
    %p218 = scmp.eq.s32.totalorder %s217, 0
    %s220 = sadd.s32 %s219, 1
    %s221 = scalar_select %p218, %s219, %s220
    %p224 = pneg %p218
    %p225 = scmp.eq.s32.totalorder %s15, 1
    %p226 = por %p224, %p225
    %p227 = scmp.ne.s32.totalorder %s219, %s222
    %p228 = scmp.eq.s32.totalorder %s15, 0
    %p229 = por %p227, %p228
    %p230 = scmp.ne.s32.totalorder %s219, %s222
    %p231 = scmp.eq.s32.totalorder %s20, 1
    %p232 = por %p230, %p231
    %p233 = scmp.ne.s32.totalorder %s222, %s223
    %p234 = scmp.eq.s32.totalorder %s20, 0
    %p235 = por %p233, %p234
    %p236 = scmp.ne.s32.totalorder %s222, %s223
    %p237 = scmp.eq.s32.totalorder %s21, 1
    %p238 = por %p236, %p237
    %p240 = scmp.ne.s32.totalorder %s223, %s239
    %p241 = scmp.eq.s32.totalorder %s21, 0
    %p242 = por %p240, %p241
    %p243 = scmp.le.s32.totalorder 1, %s15
    %p244 = scmp.lt.s32.totalorder %s15, 3
    %p245 = pnand %p243, %p244
    %p246 = pneg %p245
    // Predicated region
    $region9: #{seq2seq_forward.14} parent=5 // pred_check
      _
    $region10: #{seq2seq_forward.14} parent=5 // pred_check_branch
      %248 = sbr.rel (%p245) target = $region12
    $region11: #{seq2seq_forward.14} parent=5 // pred_region
      %s249 = ssub.s32 %s15, 1
      // Predicated region
      $region13: #{seq2seq_forward.14} parent=11 // pred_check
        %p250 = pneg %p62
      $region14: #{seq2seq_forward.14} parent=11 // pred_check_branch
        %252 = sbr.rel (%p250) target = $region16
      $region15: #{seq2seq_forward.14} parent=11 // pred_region
        _
      $region16: #{seq2seq_forward.14} parent=11 // pred_fallthru
        _
      // Predicated region
      $region17: #{seq2seq_forward.14} parent=11 // pred_check
        %p253 = pneg %p83
      $region18: #{seq2seq_forward.14} parent=11 // pred_check_branch
        %255 = sbr.rel (%p253) target = $region20
      $region19: #{seq2seq_forward.14} parent=11 // pred_region
        _
      $region20: #{seq2seq_forward.14} parent=11 // pred_fallthru
        _
      // Predicated region
      $region21: #{seq2seq_forward.14} parent=11 // pred_check
        %p256 = pneg %p104
      $region22: #{seq2seq_forward.14} parent=11 // pred_check_branch
        %258 = sbr.rel (%p256) target = $region24
      $region23: #{seq2seq_forward.14} parent=11 // pred_region
        _
      $region24: #{seq2seq_forward.14} parent=11 // pred_fallthru
        _
      // Predicated region
      $region25: #{seq2seq_forward.14} parent=11 // pred_check
        %p259 = pneg %p125
      $region26: #{seq2seq_forward.14} parent=11 // pred_check_branch
        %261 = sbr.rel (%p259) target = $region28
      $region27: #{seq2seq_forward.14} parent=11 // pred_region
        _
      $region28: #{seq2seq_forward.14} parent=11 // pred_fallthru
        _
      // Predicated region
      $region29: #{seq2seq_forward.14} parent=11 // pred_check
        %p262 = pneg %p146
      $region30: #{seq2seq_forward.14} parent=11 // pred_check_branch
        %264 = sbr.rel (%p262) target = $region32
      $region31: #{seq2seq_forward.14} parent=11 // pred_region
        _
      $region32: #{seq2seq_forward.14} parent=11 // pred_fallthru
        _
      // Predicated region
      $region33: #{seq2seq_forward.14} parent=11 // pred_check
        %p265 = pneg %p167
      $region34: #{seq2seq_forward.14} parent=11 // pred_check_branch
        %267 = sbr.rel (%p265) target = $region36
      $region35: #{seq2seq_forward.14} parent=11 // pred_region
        _
      $region36: #{seq2seq_forward.14} parent=11 // pred_fallthru
        _
      // Predicated region
      $region37: #{seq2seq_forward.14} parent=11 // pred_check
        %p268 = pneg %p188
      $region38: #{seq2seq_forward.14} parent=11 // pred_check_branch
        %270 = sbr.rel (%p268) target = $region40
      $region39: #{seq2seq_forward.14} parent=11 // pred_region
        _
      $region40: #{seq2seq_forward.14} parent=11 // pred_fallthru
        _
      // Predicated region
      $region41: #{seq2seq_forward.14} parent=11 // pred_check
        %p271 = pneg %p209
      $region42: #{seq2seq_forward.14} parent=11 // pred_check_branch
        %273 = sbr.rel (%p271) target = $region44
      $region43: #{seq2seq_forward.14} parent=11 // pred_region
        _
      $region44: #{seq2seq_forward.14} parent=11 // pred_fallthru
        _
    $region12: #{seq2seq_forward.14} parent=5 // pred_fallthru
      _
    %p274 = scmp.lt.s32.totalorder %s15, 2
    // Predicated region
    $region45: #{seq2seq_forward.14} parent=5 // pred_check
      %p275 = pneg %p274
    $region46: #{seq2seq_forward.14} parent=5 // pred_check_branch
      %277 = sbr.rel (%p275) target = $region48
    $region47: #{seq2seq_forward.14} parent=5 // pred_region
      // Predicated region
      $region49: #{seq2seq_forward.14} parent=47 // pred_check
        %p278 = pneg %p35
      $region50: #{seq2seq_forward.14} parent=47 // pred_check_branch
        %280 = sbr.rel (%p278) target = $region52
      $region51: #{seq2seq_forward.14} parent=47 // pred_region
        %p281 = scmp.lt.s32.totalorder %s15, 1
        %s282 = scalar_select %p281, %s15, 1
        %s283 = smul.addr %s282, 4
        %s284 = scalar_lea.vmem %s0, %s283
      $region52: #{seq2seq_forward.14} parent=47 // pred_fallthru
        _
    $region48: #{seq2seq_forward.14} parent=5 // pred_fallthru
      _
    %p285 = scmp.le.s32.totalorder 1, %s15
    %p286 = scmp.lt.s32.totalorder %s15, 3
    %p287 = pnand %p285, %p286
    %p288 = pneg %p287
    // Predicated region
    $region53: #{seq2seq_forward.14} parent=5 // pred_check
      _
    $region54: #{seq2seq_forward.14} parent=5 // pred_check_branch
      %290 = sbr.rel (%p287) target = $region56
    $region55: #{seq2seq_forward.14} parent=5 // pred_region
      %s291 = ssub.s32 %s15, 1
      %p292 = scmp.lt.s32.totalorder %s20, 1
      %s293 = scalar_select %p292, %s20, 1
      %s294 = smul.addr %s293, 4
      %s295 = scalar_lea.vmem %s0, %s294
      %p296 = pneg %p41
      %p297 = pneg %p38
      %p298 = pneg %p62
      %p299 = pneg %p59
      %p300 = pneg %p83
      %p301 = pneg %p80
      %p302 = pneg %p104
      %p303 = pneg %p101
      %p304 = pneg %p125
      %p305 = pneg %p122
      %p306 = pneg %p146
      %p307 = pneg %p143
      %p308 = pneg %p167
      %p309 = pneg %p164
      %p310 = pneg %p188
      %p311 = pneg %p185
      %p312 = pneg %p209
      %p313 = pneg %p206
      %p314 = pneg %p235
      %p315 = pneg %p232
      %p316 = scmp.lt.s32.totalorder %s20, 1
      %s317 = scalar_select %p316, %s20, 1
      %s318 = smul.addr %s317, 4
      %s319 = scalar_lea.vmem %s9, %s318
      %p320 = scmp.lt.s32.totalorder %s20, 1
      %s321 = scalar_select %p320, %s20, 1
      %s322 = smul.addr %s321, 4
      %s323 = scalar_lea.vmem %s0, %s322
      %p324 = scmp.lt.s32.totalorder %s20, 1
      %s325 = scalar_select %p324, %s20, 1
      %s326 = smul.addr %s325, 4
      %s327 = scalar_lea.vmem %s9, %s326
      %v329 = vld [vmem:[%s323] sm:$0xf]
      %v330 = vld [vmem:[%s1] sm:$0xf]
      %v331 = vld [vmem:[%s1 + $0x4] sm:$0xf]
      %v332 = vld [vmem:[%s1 + $0x8] sm:$0xf]
      %v333 = vld [vmem:[%s1 + $0xc] sm:$0xf]
      %v334 = vld [vmem:[%s2] sm:$0x1]
      %v336 = vlaneseq
      %v337 = vshrl.u32 %v336, 7
      %v338 = vsub.s32 0, %v337
      %v339 = vrot.slane %v334, %v338
      %v345 = vunpack.c.l.b16 %v330
      %v346 = vunpack.c.l.b16 %v331
      %v347 = vunpack.c.l.b16 %v332
      %v348 = vunpack.c.l.b16 %v333
      %v349 = vpack.c.b16 %v346, %v345
      %v350 = vpack.c.b16 %v348, %v347
      %vm353 = vcmask 261120
      %v355 = vsel %vm353, %v329, 0
      %357 = vmatprep.subr.bf16.mxu0 0
      %358 = vmatpush1.bf16.msra.mxu0 %v349
      %359 = vmatprep.subr.bf16.mxu0 0
      %360 = vmatpush1.bf16.msra.mxu0 %v350
      %361 = vmatprep.subr.bf16.mxu0 0
      %362 = vmatpush1.bf16.msra.mxu0 0
      %363 = vmatprep.subr.bf16.mxu0 0
      %364 = vmatpush1.bf16.msra.mxu0 0
      %365 = vmatprep.subr.bf16.mxu0 0
      %366 = vmatpush1.bf16.msra.mxu0 0
      %367 = vmatprep.subr.bf16.mxu0 0
      %368 = vmatpush1.bf16.msra.mxu0 0
      %369 = vmatprep.subr.bf16.mxu0 0
      %370 = vmatpush1.bf16.msra.mxu0 0
      %371 = vmatprep.subr.bf16.mxu0 0
      %372 = vmatpush1.bf16.msra.mxu0 0
      %373 = vmatprep.subr.bf16.mxu0 0
      %374 = vmatpush1.bf16.msra.mxu0 0
      %375 = vmatprep.subr.bf16.mxu0 0
      %376 = vmatpush1.bf16.msra.mxu0 0
      %377 = vmatprep.subr.bf16.mxu0 0
      %378 = vmatpush1.bf16.msra.mxu0 0
      %379 = vmatprep.subr.bf16.mxu0 0
      %380 = vmatpush1.bf16.msra.mxu0 0
      %381 = vmatprep.subr.bf16.mxu0 0
      %382 = vmatpush1.bf16.msra.mxu0 0
      %383 = vmatprep.subr.bf16.mxu0 0
      %384 = vmatpush1.bf16.msra.mxu0 0
      %385 = vmatprep.subr.bf16.mxu0 0
      %386 = vmatpush1.bf16.msra.mxu0 0
      %387 = vmatprep.subr.bf16.mxu0 0
      %388 = vmatpush1.bf16.msra.mxu0 0
      %389 = vmatprep.mubr.bf16.mxu0 0
      %390 = vmatmul.mubr.bf16.gmra.mrb[0].mxu0 %v355
      %v391 = vpop.f32.mrb[0].mxu0
      %v392 = vadd.f32 %v339, %v391
      %v393 = vpop.f32.mrb[0].mxu0
      %v394 = vpop.f32.mrb[0].mxu0
      %v395 = vpop.f32.mrb[0].mxu0
      %396 = vdwg.mxu0
      %v397 = vmax.f32 %v392, 0.0
      %v398 = vpack.c.bf16 %v397, %v397
      %v399 = vld [vmem:[%s3] sm:$0xf]
      %v400 = vld [vmem:[%s3 + $0x4] sm:$0xf]
      %v401 = vld [vmem:[%s3 + $0x8] sm:$0xf]
      %v402 = vld [vmem:[%s3 + $0xc] sm:$0xf]
      %v403 = vld [vmem:[%s3 + $0x10] sm:$0xf]
      %v404 = vld [vmem:[%s3 + $0x14] sm:$0xf]
      %v405 = vld [vmem:[%s3 + $0x18] sm:$0xf]
      %v406 = vld [vmem:[%s3 + $0x1c] sm:$0xf]
      %v407 = vld [vmem:[%s4] sm:$0x1]
      %v409 = vlaneseq
      %v410 = vshrl.u32 %v409, 7
      %v411 = vsub.s32 0, %v410
      %v412 = vrot.slane %v407, %v411
      %v422 = vunpack.c.l.b16 %v399
      %v423 = vunpack.c.l.b16 %v400
      %v424 = vunpack.c.l.b16 %v401
      %v425 = vunpack.c.l.b16 %v402
      %v426 = vunpack.c.l.b16 %v403
      %v427 = vunpack.c.l.b16 %v404
      %v428 = vunpack.c.l.b16 %v405
      %v429 = vunpack.c.l.b16 %v406
      %v430 = vpack.c.b16 %v423, %v422
      %v431 = vpack.c.b16 %v425, %v424
      %v432 = vpack.c.b16 %v427, %v426
      %v433 = vpack.c.b16 %v429, %v428
      %vm438 = vcmask 523264
      %v440 = vsel %vm438, %v398, 0
      %442 = vmatprep.subr.bf16.mxu0 0
      %443 = vmatpush1.bf16.msra.mxu0 %v430
      %444 = vmatprep.subr.bf16.mxu0 0
      %445 = vmatpush1.bf16.msra.mxu0 %v431
      %446 = vmatprep.subr.bf16.mxu0 0
      %447 = vmatpush1.bf16.msra.mxu0 %v432
      %448 = vmatprep.subr.bf16.mxu0 0
      %449 = vmatpush1.bf16.msra.mxu0 %v433
      %450 = vmatprep.subr.bf16.mxu0 0
      %451 = vmatpush1.bf16.msra.mxu0 0
      %452 = vmatprep.subr.bf16.mxu0 0
      %453 = vmatpush1.bf16.msra.mxu0 0
      %454 = vmatprep.subr.bf16.mxu0 0
      %455 = vmatpush1.bf16.msra.mxu0 0
      %456 = vmatprep.subr.bf16.mxu0 0
      %457 = vmatpush1.bf16.msra.mxu0 0
      %458 = vmatprep.subr.bf16.mxu0 0
      %459 = vmatpush1.bf16.msra.mxu0 0
      %460 = vmatprep.subr.bf16.mxu0 0
      %461 = vmatpush1.bf16.msra.mxu0 0
      %462 = vmatprep.subr.bf16.mxu0 0
      %463 = vmatpush1.bf16.msra.mxu0 0
      %464 = vmatprep.subr.bf16.mxu0 0
      %465 = vmatpush1.bf16.msra.mxu0 0
      %466 = vmatprep.subr.bf16.mxu0 0
      %467 = vmatpush1.bf16.msra.mxu0 0
      %468 = vmatprep.subr.bf16.mxu0 0
      %469 = vmatpush1.bf16.msra.mxu0 0
      %470 = vmatprep.subr.bf16.mxu0 0
      %471 = vmatpush1.bf16.msra.mxu0 0
      %472 = vmatprep.subr.bf16.mxu0 0
      %473 = vmatpush1.bf16.msra.mxu0 0
      %474 = vmatprep.mubr.bf16.mxu0 0
      %475 = vmatmul.mubr.bf16.gmra.mrb[0].mxu0 %v440
      %v476 = vpop.f32.mrb[0].mxu0
      %v477 = vadd.f32 %v412, %v476
      %v478 = vpop.f32.mrb[0].mxu0
      %v479 = vpop.f32.mrb[0].mxu0
      %v480 = vpop.f32.mrb[0].mxu0
      %481 = vdwg.mxu0
      %v482 = vunpack.c.l.bf16 %v329
      %v483 = vadd.f32 %v482, %v477
      %v484 = vld [vmem:[%s5] sm:$0x1]
      %v485 = vld [vmem:[%s6] sm:$0x1]
      %v486 = vsel %vm353, %v483, 0.0
      %487 = vadd.xlane.f32.xlu0 %v486
      %v488 = vpop.xlane.xlu0 %487
      %v489 = vrcp.pop 32.0
      %v490 = vmul.f32 %v488, %v489
      %v491 = vsub.f32 %v483, %v490
      %v492 = vmul.f32 %v491, %v491
      %v493 = vsel %vm353, %v492, 0.0
      %494 = vadd.xlane.f32.xlu0 %v493
      %v495 = vpop.xlane.xlu0 %494
      %v496 = vmul.f32 %v495, %v489
      %v497 = vadd.f32 %v496, 1e-05
      %v498 = vrsqrt.pop %v497
      %v499 = vmul.f32 %v491, %v498
      %v501 = vlaneseq
      %v502 = vshrl.u32 %v501, 7
      %v503 = vsub.s32 0, %v502
      %v504 = vrot.slane %v484, %v503
      %v506 = vmul.f32 %v499, %v504
      %v508 = vlaneseq
      %v509 = vshrl.u32 %v508, 7
      %v510 = vsub.s32 0, %v509
      %v511 = vrot.slane %v485, %v510
      %v513 = vadd.f32 %v506, %v511
      %v514 = vld [vmem:[%s7] sm:$0x1]
      %v515 = vld [vmem:[%s8] sm:$0x1]
      %v516 = vsel %vm353, %v513, 0.0
      %517 = vadd.xlane.f32.xlu0 %v516
      %v518 = vpop.xlane.xlu0 %517
      %v519 = vmul.f32 %v518, %v489
      %v520 = vsub.f32 %v513, %v519
      %v521 = vmul.f32 %v520, %v520
      %v522 = vsel %vm353, %v521, 0.0
      %523 = vadd.xlane.f32.xlu0 %v522
      %v524 = vpop.xlane.xlu0 %523
      %v525 = vmul.f32 %v524, %v489
      %v526 = vadd.f32 %v525, 1e-05
      %v527 = vrsqrt.pop %v526
      %v528 = vmul.f32 %v520, %v527
      %v530 = vlaneseq
      %v531 = vshrl.u32 %v530, 7
      %v532 = vsub.s32 0, %v531
      %v533 = vrot.slane %v514, %v532
      %v535 = vmul.f32 %v528, %v533
      %v537 = vlaneseq
      %v538 = vshrl.u32 %v537, 7
      %v539 = vsub.s32 0, %v538
      %v540 = vrot.slane %v515, %v539
      %v542 = vadd.f32 %v535, %v540
      %v543 = vpack.c.bf16 %v542, %v542
      %vm544 = vcmask 257024
      %545 = vst.msk [vmem:[%s327] sm:$0xf] %vm544, %v543
      %p546 = scmp.lt.s32.totalorder %s20, 1
      %s547 = scalar_select %p546, %s20, 1
      %s548 = smul.addr %s547, 4
      %s549 = scalar_lea.vmem %s9, %s548
      // Predicated region
      $region57: #{seq2seq_forward.14} parent=55 // pred_check
        %p550 = pneg %p232
      $region58: #{seq2seq_forward.14} parent=55 // pred_check_branch
        %552 = sbr.rel (%p550) target = $region60
      $region59: #{seq2seq_forward.14} parent=55 // pred_region
        _
      $region60: #{seq2seq_forward.14} parent=55 // pred_fallthru
        _
    $region56: #{seq2seq_forward.14} parent=5 // pred_fallthru
      _
    %p553 = scmp.le.s32.totalorder 2, %s15
    // Predicated region
    $region61: #{seq2seq_forward.14} parent=5 // pred_check
      %p554 = pneg %p553
    $region62: #{seq2seq_forward.14} parent=5 // pred_check_branch
      %556 = sbr.rel (%p554) target = $region64
    $region63: #{seq2seq_forward.14} parent=5 // pred_region
      %s557 = ssub.s32 %s15, 2
      // Predicated region
      $region65: #{seq2seq_forward.14} parent=63 // pred_check
        %p558 = pneg %p238
      $region66: #{seq2seq_forward.14} parent=63 // pred_check_branch
        %560 = sbr.rel (%p558) target = $region68
      $region67: #{seq2seq_forward.14} parent=63 // pred_region
        %p561 = scmp.lt.s32.totalorder %s21, 1
        %s562 = scalar_select %p561, %s21, 1
        %s563 = smul.addr %s562, 4
        %s564 = scalar_lea.vmem %s9, %s563
      $region68: #{seq2seq_forward.14} parent=63 // pred_fallthru
        _
    $region64: #{seq2seq_forward.14} parent=5 // pred_fallthru
      _
  $region6: #{seq2seq_forward.14} parent=0 // loop_footer
    %s19 = sadd.s32 1, %s15
  $region7: #{seq2seq_forward.14} parent=0 // loop_footer_branch
    %14 = sbr.rel target = $region3
  $region8: #{seq2seq_forward.14} parent=0 // loop_exit
    _

// kernel: seq2seq_forward.12
$region0: #{seq2seq_forward.12}
  #allocation0 [shape = 'u32[]', space=smem, size = 0x4, offset = 0x4, fixed_abs, tag = 'smem constant byte address 0x4 - core index']
  #allocation1 [shape = 'u32[144,128]{1,0:T(1,128)}', space=vmem, size = 0x12000, scoped, tag = 'internal scratch']
  %s0 = inlined_call_operand.vmem [shape: bf16[16,32], index: 0, kind: input, shape index: {}]
  %s1 = inlined_call_operand.vmem [shape: bf16[32,64], index: 1, kind: input, shape index: {}]
  %s2 = inlined_call_operand.vmem [shape: f32[1,64], index: 2, kind: input, shape index: {}]
  %s3 = inlined_call_operand.vmem [shape: bf16[64,32], index: 3, kind: input, shape index: {}]
  %s4 = inlined_call_operand.vmem [shape: f32[1,32], index: 4, kind: input, shape index: {}]
  %s5 = inlined_call_operand.vmem [shape: f32[1,32], index: 5, kind: input, shape index: {}]
  %s6 = inlined_call_operand.vmem [shape: f32[1,32], index: 6, kind: input, shape index: {}]
  %s7 = inlined_call_operand.vmem [shape: bf16[16,32], index: 7, kind: output, shape index: {}]
  %s8 = sld [smem:[#allocation0]]
  $region61: #{seq2seq_forward.12} parent=0
    _
  %s10 = ssub.s32 1, %s8
  %s11 = scalar_select 0, %s10, %s8
  loop: start=0, step=1, limit=4
  $region2: #{seq2seq_forward.12} parent=0 // loop_pre_header
    _
  $region3: #{seq2seq_forward.12} parent=0 // loop_header
    %s13 = sphi 0, %s17
    %p14 = scmp.ge.s32.totalorder %s13, 4
    %s23 = sphi 0, %s25
    %s26 = sphi 0, %s23
    %s27 = sphi 0, %s26
    %s43 = sphi 0, %s27
    %s47 = sphi 0, %s47
    %s49 = sphi 0, %s47
    %s50 = sphi 0, %s49
    %s64 = sphi 0, %s50
    %s68 = sphi 0, %s68
    %s70 = sphi 0, %s68
    %s71 = sphi 0, %s70
    %s85 = sphi 0, %s71
    %s89 = sphi 0, %s89
    %s91 = sphi 0, %s89
    %s92 = sphi 0, %s91
    %s106 = sphi 0, %s92
    %s110 = sphi 0, %s110
    %s112 = sphi 0, %s110
    %s113 = sphi 0, %s112
    %s127 = sphi 0, %s113
    %s131 = sphi 0, %s131
    %s133 = sphi 0, %s131
    %s134 = sphi 0, %s133
    %s148 = sphi 0, %s134
    %s152 = sphi 0, %s152
    %s154 = sphi 0, %s152
    %s155 = sphi 0, %s154
    %s169 = sphi 0, %s155
    %s175 = sphi 0, %s177
    %s178 = sphi 0, %s175
    %s179 = sphi 0, %s178
    %s195 = sphi 0, %s179
  $region4: #{seq2seq_forward.12} parent=0 // loop_header_branch
    %16 = sbr.rel (%p14) target = $region8
  $region5: #{seq2seq_forward.12} parent=0 // loop_body
    %s18 = ssub.s32 %s13, 1
    %s19 = ssub.s32 %s13, 2
    %s20 = sadd.s32 %s13, 1
    %s21 = ssub.s32 %s13, %s20
    %p22 = scmp.eq.s32.totalorder %s21, 0
    %s24 = sadd.s32 %s23, 1
    %s25 = scalar_select %p22, %s23, %s24
    %p28 = pneg %p22
    %p29 = scmp.eq.s32.totalorder %s13, 1
    %p30 = por %p28, %p29
    %p31 = scmp.ne.s32.totalorder %s23, %s26
    %p32 = scmp.eq.s32.totalorder %s13, 0
    %p33 = por %p31, %p32
    %p34 = scmp.ne.s32.totalorder %s23, %s26
    %p35 = scmp.eq.s32.totalorder %s18, 1
    %p36 = por %p34, %p35
    %p37 = scmp.ne.s32.totalorder %s26, %s27
    %p38 = scmp.eq.s32.totalorder %s18, 0
    %p39 = por %p37, %p38
    %p40 = scmp.ne.s32.totalorder %s26, %s27
    %p41 = scmp.eq.s32.totalorder %s19, 1
    %p42 = por %p40, %p41
    %p44 = scmp.ne.s32.totalorder %s27, %s43
    %p45 = scmp.eq.s32.totalorder %s19, 0
    %p46 = por %p44, %p45
    %s48 = sadd.s32 %s47, 1
    %p51 = scmp.eq.s32.totalorder %s13, 1
    %p52 = scmp.ne.s32.totalorder %s47, %s49
    %p53 = scmp.eq.s32.totalorder %s13, 0
    %p54 = por %p52, %p53
    %p55 = scmp.ne.s32.totalorder %s47, %s49
    %p56 = scmp.eq.s32.totalorder %s18, 1
    %p57 = por %p55, %p56
    %p58 = scmp.ne.s32.totalorder %s49, %s50
    %p59 = scmp.eq.s32.totalorder %s18, 0
    %p60 = por %p58, %p59
    %p61 = scmp.ne.s32.totalorder %s49, %s50
    %p62 = scmp.eq.s32.totalorder %s19, 1
    %p63 = por %p61, %p62
    %p65 = scmp.ne.s32.totalorder %s50, %s64
    %p66 = scmp.eq.s32.totalorder %s19, 0
    %p67 = por %p65, %p66
    %s69 = sadd.s32 %s68, 1
    %p72 = scmp.eq.s32.totalorder %s13, 1
    %p73 = scmp.ne.s32.totalorder %s68, %s70
    %p74 = scmp.eq.s32.totalorder %s13, 0
    %p75 = por %p73, %p74
    %p76 = scmp.ne.s32.totalorder %s68, %s70
    %p77 = scmp.eq.s32.totalorder %s18, 1
    %p78 = por %p76, %p77
    %p79 = scmp.ne.s32.totalorder %s70, %s71
    %p80 = scmp.eq.s32.totalorder %s18, 0
    %p81 = por %p79, %p80
    %p82 = scmp.ne.s32.totalorder %s70, %s71
    %p83 = scmp.eq.s32.totalorder %s19, 1
    %p84 = por %p82, %p83
    %p86 = scmp.ne.s32.totalorder %s71, %s85
    %p87 = scmp.eq.s32.totalorder %s19, 0
    %p88 = por %p86, %p87
    %s90 = sadd.s32 %s89, 1
    %p93 = scmp.eq.s32.totalorder %s13, 1
    %p94 = scmp.ne.s32.totalorder %s89, %s91
    %p95 = scmp.eq.s32.totalorder %s13, 0
    %p96 = por %p94, %p95
    %p97 = scmp.ne.s32.totalorder %s89, %s91
    %p98 = scmp.eq.s32.totalorder %s18, 1
    %p99 = por %p97, %p98
    %p100 = scmp.ne.s32.totalorder %s91, %s92
    %p101 = scmp.eq.s32.totalorder %s18, 0
    %p102 = por %p100, %p101
    %p103 = scmp.ne.s32.totalorder %s91, %s92
    %p104 = scmp.eq.s32.totalorder %s19, 1
    %p105 = por %p103, %p104
    %p107 = scmp.ne.s32.totalorder %s92, %s106
    %p108 = scmp.eq.s32.totalorder %s19, 0
    %p109 = por %p107, %p108
    %s111 = sadd.s32 %s110, 1
    %p114 = scmp.eq.s32.totalorder %s13, 1
    %p115 = scmp.ne.s32.totalorder %s110, %s112
    %p116 = scmp.eq.s32.totalorder %s13, 0
    %p117 = por %p115, %p116
    %p118 = scmp.ne.s32.totalorder %s110, %s112
    %p119 = scmp.eq.s32.totalorder %s18, 1
    %p120 = por %p118, %p119
    %p121 = scmp.ne.s32.totalorder %s112, %s113
    %p122 = scmp.eq.s32.totalorder %s18, 0
    %p123 = por %p121, %p122
    %p124 = scmp.ne.s32.totalorder %s112, %s113
    %p125 = scmp.eq.s32.totalorder %s19, 1
    %p126 = por %p124, %p125
    %p128 = scmp.ne.s32.totalorder %s113, %s127
    %p129 = scmp.eq.s32.totalorder %s19, 0
    %p130 = por %p128, %p129
    %s132 = sadd.s32 %s131, 1
    %p135 = scmp.eq.s32.totalorder %s13, 1
    %p136 = scmp.ne.s32.totalorder %s131, %s133
    %p137 = scmp.eq.s32.totalorder %s13, 0
    %p138 = por %p136, %p137
    %p139 = scmp.ne.s32.totalorder %s131, %s133
    %p140 = scmp.eq.s32.totalorder %s18, 1
    %p141 = por %p139, %p140
    %p142 = scmp.ne.s32.totalorder %s133, %s134
    %p143 = scmp.eq.s32.totalorder %s18, 0
    %p144 = por %p142, %p143
    %p145 = scmp.ne.s32.totalorder %s133, %s134
    %p146 = scmp.eq.s32.totalorder %s19, 1
    %p147 = por %p145, %p146
    %p149 = scmp.ne.s32.totalorder %s134, %s148
    %p150 = scmp.eq.s32.totalorder %s19, 0
    %p151 = por %p149, %p150
    %s153 = sadd.s32 %s152, 1
    %p156 = scmp.eq.s32.totalorder %s13, 1
    %p157 = scmp.ne.s32.totalorder %s152, %s154
    %p158 = scmp.eq.s32.totalorder %s13, 0
    %p159 = por %p157, %p158
    %p160 = scmp.ne.s32.totalorder %s152, %s154
    %p161 = scmp.eq.s32.totalorder %s18, 1
    %p162 = por %p160, %p161
    %p163 = scmp.ne.s32.totalorder %s154, %s155
    %p164 = scmp.eq.s32.totalorder %s18, 0
    %p165 = por %p163, %p164
    %p166 = scmp.ne.s32.totalorder %s154, %s155
    %p167 = scmp.eq.s32.totalorder %s19, 1
    %p168 = por %p166, %p167
    %p170 = scmp.ne.s32.totalorder %s155, %s169
    %p171 = scmp.eq.s32.totalorder %s19, 0
    %p172 = por %p170, %p171
    %s173 = ssub.s32 %s13, %s20
    %p174 = scmp.eq.s32.totalorder %s173, 0
    %s176 = sadd.s32 %s175, 1
    %s177 = scalar_select %p174, %s175, %s176
    %p180 = pneg %p174
    %p181 = scmp.eq.s32.totalorder %s13, 1
    %p182 = por %p180, %p181
    %p183 = scmp.ne.s32.totalorder %s175, %s178
    %p184 = scmp.eq.s32.totalorder %s13, 0
    %p185 = por %p183, %p184
    %p186 = scmp.ne.s32.totalorder %s175, %s178
    %p187 = scmp.eq.s32.totalorder %s18, 1
    %p188 = por %p186, %p187
    %p189 = scmp.ne.s32.totalorder %s178, %s179
    %p190 = scmp.eq.s32.totalorder %s18, 0
    %p191 = por %p189, %p190
    %p192 = scmp.ne.s32.totalorder %s178, %s179
    %p193 = scmp.eq.s32.totalorder %s19, 1
    %p194 = por %p192, %p193
    %p196 = scmp.ne.s32.totalorder %s179, %s195
    %p197 = scmp.eq.s32.totalorder %s19, 0
    %p198 = por %p196, %p197
    %p199 = scmp.le.s32.totalorder 1, %s13
    %p200 = scmp.lt.s32.totalorder %s13, 3
    %p201 = pnand %p199, %p200
    %p202 = pneg %p201
    // Predicated region
    $region9: #{seq2seq_forward.12} parent=5 // pred_check
      _
    $region10: #{seq2seq_forward.12} parent=5 // pred_check_branch
      %204 = sbr.rel (%p201) target = $region12
    $region11: #{seq2seq_forward.12} parent=5 // pred_region
      %s205 = ssub.s32 %s13, 1
      // Predicated region
      $region13: #{seq2seq_forward.12} parent=11 // pred_check
        %p206 = pneg %p60
      $region14: #{seq2seq_forward.12} parent=11 // pred_check_branch
        %208 = sbr.rel (%p206) target = $region16
      $region15: #{seq2seq_forward.12} parent=11 // pred_region
        _
      $region16: #{seq2seq_forward.12} parent=11 // pred_fallthru
        _
      // Predicated region
      $region17: #{seq2seq_forward.12} parent=11 // pred_check
        %p209 = pneg %p81
      $region18: #{seq2seq_forward.12} parent=11 // pred_check_branch
        %211 = sbr.rel (%p209) target = $region20
      $region19: #{seq2seq_forward.12} parent=11 // pred_region
        _
      $region20: #{seq2seq_forward.12} parent=11 // pred_fallthru
        _
      // Predicated region
      $region21: #{seq2seq_forward.12} parent=11 // pred_check
        %p212 = pneg %p102
      $region22: #{seq2seq_forward.12} parent=11 // pred_check_branch
        %214 = sbr.rel (%p212) target = $region24
      $region23: #{seq2seq_forward.12} parent=11 // pred_region
        _
      $region24: #{seq2seq_forward.12} parent=11 // pred_fallthru
        _
      // Predicated region
      $region25: #{seq2seq_forward.12} parent=11 // pred_check
        %p215 = pneg %p123
      $region26: #{seq2seq_forward.12} parent=11 // pred_check_branch
        %217 = sbr.rel (%p215) target = $region28
      $region27: #{seq2seq_forward.12} parent=11 // pred_region
        _
      $region28: #{seq2seq_forward.12} parent=11 // pred_fallthru
        _
      // Predicated region
      $region29: #{seq2seq_forward.12} parent=11 // pred_check
        %p218 = pneg %p144
      $region30: #{seq2seq_forward.12} parent=11 // pred_check_branch
        %220 = sbr.rel (%p218) target = $region32
      $region31: #{seq2seq_forward.12} parent=11 // pred_region
        _
      $region32: #{seq2seq_forward.12} parent=11 // pred_fallthru
        _
      // Predicated region
      $region33: #{seq2seq_forward.12} parent=11 // pred_check
        %p221 = pneg %p165
      $region34: #{seq2seq_forward.12} parent=11 // pred_check_branch
        %223 = sbr.rel (%p221) target = $region36
      $region35: #{seq2seq_forward.12} parent=11 // pred_region
        _
      $region36: #{seq2seq_forward.12} parent=11 // pred_fallthru
        _
    $region12: #{seq2seq_forward.12} parent=5 // pred_fallthru
      _
    %p224 = scmp.lt.s32.totalorder %s13, 2
    // Predicated region
    $region37: #{seq2seq_forward.12} parent=5 // pred_check
      %p225 = pneg %p224
    $region38: #{seq2seq_forward.12} parent=5 // pred_check_branch
      %227 = sbr.rel (%p225) target = $region40
    $region39: #{seq2seq_forward.12} parent=5 // pred_region
      // Predicated region
      $region41: #{seq2seq_forward.12} parent=39 // pred_check
        %p228 = pneg %p33
      $region42: #{seq2seq_forward.12} parent=39 // pred_check_branch
        %230 = sbr.rel (%p228) target = $region44
      $region43: #{seq2seq_forward.12} parent=39 // pred_region
        %p231 = scmp.lt.s32.totalorder %s13, 1
        %s232 = scalar_select %p231, %s13, 1
        %s233 = smul.addr %s232, 4
        %s234 = scalar_lea.vmem %s0, %s233
      $region44: #{seq2seq_forward.12} parent=39 // pred_fallthru
        _
    $region40: #{seq2seq_forward.12} parent=5 // pred_fallthru
      _
    %p235 = scmp.le.s32.totalorder 1, %s13
    %p236 = scmp.lt.s32.totalorder %s13, 3
    %p237 = pnand %p235, %p236
    %p238 = pneg %p237
    // Predicated region
    $region45: #{seq2seq_forward.12} parent=5 // pred_check
      _
    $region46: #{seq2seq_forward.12} parent=5 // pred_check_branch
      %240 = sbr.rel (%p237) target = $region48
    $region47: #{seq2seq_forward.12} parent=5 // pred_region
      %s241 = ssub.s32 %s13, 1
      %p242 = scmp.lt.s32.totalorder %s18, 1
      %s243 = scalar_select %p242, %s18, 1
      %s244 = smul.addr %s243, 4
      %s245 = scalar_lea.vmem %s0, %s244
      %p246 = pneg %p39
      %p247 = pneg %p36
      %p248 = pneg %p60
      %p249 = pneg %p57
      %p250 = pneg %p81
      %p251 = pneg %p78
      %p252 = pneg %p102
      %p253 = pneg %p99
      %p254 = pneg %p123
      %p255 = pneg %p120
      %p256 = pneg %p144
      %p257 = pneg %p141
      %p258 = pneg %p165
      %p259 = pneg %p162
      %p260 = pneg %p191
      %p261 = pneg %p188
      %p262 = scmp.lt.s32.totalorder %s18, 1
      %s263 = scalar_select %p262, %s18, 1
      %s264 = smul.addr %s263, 4
      %s265 = scalar_lea.vmem %s7, %s264
      %p266 = scmp.lt.s32.totalorder %s18, 1
      %s267 = scalar_select %p266, %s18, 1
      %s268 = smul.addr %s267, 4
      %s269 = scalar_lea.vmem %s0, %s268
      %p270 = scmp.lt.s32.totalorder %s18, 1
      %s271 = scalar_select %p270, %s18, 1
      %s272 = smul.addr %s271, 4
      %s273 = scalar_lea.vmem %s7, %s272
      %v275 = vld [vmem:[%s269] sm:$0xf]
      %v276 = vld [vmem:[%s1] sm:$0xf]
      %v277 = vld [vmem:[%s1 + $0x4] sm:$0xf]
      %v278 = vld [vmem:[%s1 + $0x8] sm:$0xf]
      %v279 = vld [vmem:[%s1 + $0xc] sm:$0xf]
      %v280 = vld [vmem:[%s2] sm:$0x1]
      %v282 = vlaneseq
      %v283 = vshrl.u32 %v282, 7
      %v284 = vsub.s32 0, %v283
      %v285 = vrot.slane %v280, %v284
      %v291 = vunpack.c.l.b16 %v276
      %v292 = vunpack.c.l.b16 %v277
      %v293 = vunpack.c.l.b16 %v278
      %v294 = vunpack.c.l.b16 %v279
      %v295 = vpack.c.b16 %v292, %v291
      %v296 = vpack.c.b16 %v294, %v293
      %vm299 = vcmask 261120
      %v301 = vsel %vm299, %v275, 0
      %303 = vmatprep.subr.bf16.mxu0 0
      %304 = vmatpush1.bf16.msra.mxu0 %v295
      %305 = vmatprep.subr.bf16.mxu0 0
      %306 = vmatpush1.bf16.msra.mxu0 %v296
      %307 = vmatprep.subr.bf16.mxu0 0
      %308 = vmatpush1.bf16.msra.mxu0 0
      %309 = vmatprep.subr.bf16.mxu0 0
      %310 = vmatpush1.bf16.msra.mxu0 0
      %311 = vmatprep.subr.bf16.mxu0 0
      %312 = vmatpush1.bf16.msra.mxu0 0
      %313 = vmatprep.subr.bf16.mxu0 0
      %314 = vmatpush1.bf16.msra.mxu0 0
      %315 = vmatprep.subr.bf16.mxu0 0
      %316 = vmatpush1.bf16.msra.mxu0 0
      %317 = vmatprep.subr.bf16.mxu0 0
      %318 = vmatpush1.bf16.msra.mxu0 0
      %319 = vmatprep.subr.bf16.mxu0 0
      %320 = vmatpush1.bf16.msra.mxu0 0
      %321 = vmatprep.subr.bf16.mxu0 0
      %322 = vmatpush1.bf16.msra.mxu0 0
      %323 = vmatprep.subr.bf16.mxu0 0
      %324 = vmatpush1.bf16.msra.mxu0 0
      %325 = vmatprep.subr.bf16.mxu0 0
      %326 = vmatpush1.bf16.msra.mxu0 0
      %327 = vmatprep.subr.bf16.mxu0 0
      %328 = vmatpush1.bf16.msra.mxu0 0
      %329 = vmatprep.subr.bf16.mxu0 0
      %330 = vmatpush1.bf16.msra.mxu0 0
      %331 = vmatprep.subr.bf16.mxu0 0
      %332 = vmatpush1.bf16.msra.mxu0 0
      %333 = vmatprep.subr.bf16.mxu0 0
      %334 = vmatpush1.bf16.msra.mxu0 0
      %335 = vmatprep.mubr.bf16.mxu0 0
      %336 = vmatmul.mubr.bf16.gmra.mrb[0].mxu0 %v301
      %v337 = vpop.f32.mrb[0].mxu0
      %v338 = vadd.f32 %v285, %v337
      %v339 = vpop.f32.mrb[0].mxu0
      %v340 = vpop.f32.mrb[0].mxu0
      %v341 = vpop.f32.mrb[0].mxu0
      %342 = vdwg.mxu0
      %v343 = vmax.f32 %v338, 0.0
      %v344 = vpack.c.bf16 %v343, %v343
      %v345 = vld [vmem:[%s3] sm:$0xf]
      %v346 = vld [vmem:[%s3 + $0x4] sm:$0xf]
      %v347 = vld [vmem:[%s3 + $0x8] sm:$0xf]
      %v348 = vld [vmem:[%s3 + $0xc] sm:$0xf]
      %v349 = vld [vmem:[%s3 + $0x10] sm:$0xf]
      %v350 = vld [vmem:[%s3 + $0x14] sm:$0xf]
      %v351 = vld [vmem:[%s3 + $0x18] sm:$0xf]
      %v352 = vld [vmem:[%s3 + $0x1c] sm:$0xf]
      %v353 = vld [vmem:[%s4] sm:$0x1]
      %v355 = vlaneseq
      %v356 = vshrl.u32 %v355, 7
      %v357 = vsub.s32 0, %v356
      %v358 = vrot.slane %v353, %v357
      %v368 = vunpack.c.l.b16 %v345
      %v369 = vunpack.c.l.b16 %v346
      %v370 = vunpack.c.l.b16 %v347
      %v371 = vunpack.c.l.b16 %v348
      %v372 = vunpack.c.l.b16 %v349
      %v373 = vunpack.c.l.b16 %v350
      %v374 = vunpack.c.l.b16 %v351
      %v375 = vunpack.c.l.b16 %v352
      %v376 = vpack.c.b16 %v369, %v368
      %v377 = vpack.c.b16 %v371, %v370
      %v378 = vpack.c.b16 %v373, %v372
      %v379 = vpack.c.b16 %v375, %v374
      %vm384 = vcmask 523264
      %v386 = vsel %vm384, %v344, 0
      %388 = vmatprep.subr.bf16.mxu0 0
      %389 = vmatpush1.bf16.msra.mxu0 %v376
      %390 = vmatprep.subr.bf16.mxu0 0
      %391 = vmatpush1.bf16.msra.mxu0 %v377
      %392 = vmatprep.subr.bf16.mxu0 0
      %393 = vmatpush1.bf16.msra.mxu0 %v378
      %394 = vmatprep.subr.bf16.mxu0 0
      %395 = vmatpush1.bf16.msra.mxu0 %v379
      %396 = vmatprep.subr.bf16.mxu0 0
      %397 = vmatpush1.bf16.msra.mxu0 0
      %398 = vmatprep.subr.bf16.mxu0 0
      %399 = vmatpush1.bf16.msra.mxu0 0
      %400 = vmatprep.subr.bf16.mxu0 0
      %401 = vmatpush1.bf16.msra.mxu0 0
      %402 = vmatprep.subr.bf16.mxu0 0
      %403 = vmatpush1.bf16.msra.mxu0 0
      %404 = vmatprep.subr.bf16.mxu0 0
      %405 = vmatpush1.bf16.msra.mxu0 0
      %406 = vmatprep.subr.bf16.mxu0 0
      %407 = vmatpush1.bf16.msra.mxu0 0
      %408 = vmatprep.subr.bf16.mxu0 0
      %409 = vmatpush1.bf16.msra.mxu0 0
      %410 = vmatprep.subr.bf16.mxu0 0
      %411 = vmatpush1.bf16.msra.mxu0 0
      %412 = vmatprep.subr.bf16.mxu0 0
      %413 = vmatpush1.bf16.msra.mxu0 0
      %414 = vmatprep.subr.bf16.mxu0 0
      %415 = vmatpush1.bf16.msra.mxu0 0
      %416 = vmatprep.subr.bf16.mxu0 0
      %417 = vmatpush1.bf16.msra.mxu0 0
      %418 = vmatprep.subr.bf16.mxu0 0
      %419 = vmatpush1.bf16.msra.mxu0 0
      %420 = vmatprep.mubr.bf16.mxu0 0
      %421 = vmatmul.mubr.bf16.gmra.mrb[0].mxu0 %v386
      %v422 = vpop.f32.mrb[0].mxu0
      %v423 = vadd.f32 %v358, %v422
      %v424 = vpop.f32.mrb[0].mxu0
      %v425 = vpop.f32.mrb[0].mxu0
      %v426 = vpop.f32.mrb[0].mxu0
      %427 = vdwg.mxu0
      %v428 = vunpack.c.l.bf16 %v275
      %v429 = vadd.f32 %v428, %v423
      %v430 = vld [vmem:[%s5] sm:$0x1]
      %v431 = vld [vmem:[%s6] sm:$0x1]
      %v432 = vsel %vm299, %v429, 0.0
      %433 = vadd.xlane.f32.xlu0 %v432
      %v434 = vpop.xlane.xlu0 %433
      %v435 = vrcp.pop 32.0
      %v436 = vmul.f32 %v434, %v435
      %v437 = vsub.f32 %v429, %v436
      %v438 = vmul.f32 %v437, %v437
      %v439 = vsel %vm299, %v438, 0.0
      %440 = vadd.xlane.f32.xlu0 %v439
      %v441 = vpop.xlane.xlu0 %440
      %v442 = vmul.f32 %v441, %v435
      %v443 = vadd.f32 %v442, 1e-05
      %v444 = vrsqrt.pop %v443
      %v445 = vmul.f32 %v437, %v444
      %v447 = vlaneseq
      %v448 = vshrl.u32 %v447, 7
      %v449 = vsub.s32 0, %v448
      %v450 = vrot.slane %v430, %v449
      %v452 = vmul.f32 %v445, %v450
      %v454 = vlaneseq
      %v455 = vshrl.u32 %v454, 7
      %v456 = vsub.s32 0, %v455
      %v457 = vrot.slane %v431, %v456
      %v459 = vadd.f32 %v452, %v457
      %v460 = vpack.c.bf16 %v459, %v459
      %vm461 = vcmask 257024
      %462 = vst.msk [vmem:[%s273] sm:$0xf] %vm461, %v460
      %p463 = scmp.lt.s32.totalorder %s18, 1
      %s464 = scalar_select %p463, %s18, 1
      %s465 = smul.addr %s464, 4
      %s466 = scalar_lea.vmem %s7, %s465
      // Predicated region
      $region49: #{seq2seq_forward.12} parent=47 // pred_check
        %p467 = pneg %p188
      $region50: #{seq2seq_forward.12} parent=47 // pred_check_branch
        %469 = sbr.rel (%p467) target = $region52
      $region51: #{seq2seq_forward.12} parent=47 // pred_region
        _
      $region52: #{seq2seq_forward.12} parent=47 // pred_fallthru
        _
    $region48: #{seq2seq_forward.12} parent=5 // pred_fallthru
      _
    %p470 = scmp.le.s32.totalorder 2, %s13
    // Predicated region
    $region53: #{seq2seq_forward.12} parent=5 // pred_check
      %p471 = pneg %p470
    $region54: #{seq2seq_forward.12} parent=5 // pred_check_branch
      %473 = sbr.rel (%p471) target = $region56
    $region55: #{seq2seq_forward.12} parent=5 // pred_region
      %s474 = ssub.s32 %s13, 2
      // Predicated region
      $region57: #{seq2seq_forward.12} parent=55 // pred_check
        %p475 = pneg %p194
      $region58: #{seq2seq_forward.12} parent=55 // pred_check_branch
        %477 = sbr.rel (%p475) target = $region60
      $region59: #{seq2seq_forward.12} parent=55 // pred_region
        %p478 = scmp.lt.s32.totalorder %s19, 1
        %s479 = scalar_select %p478, %s19, 1
        %s480 = smul.addr %s479, 4
        %s481 = scalar_lea.vmem %s7, %s480
      $region60: #{seq2seq_forward.12} parent=55 // pred_fallthru
        _
    $region56: #{seq2seq_forward.12} parent=5 // pred_fallthru
      _
  $region6: #{seq2seq_forward.12} parent=0 // loop_footer
    %s17 = sadd.s32 1, %s13
  $region7: #{seq2seq_forward.12} parent=0 // loop_footer_branch
    %12 = sbr.rel target = $region3
  $region8: #{seq2seq_forward.12} parent=0 // loop_exit
    _

// kernel: seq2seq_forward.16
$region0: #{seq2seq_forward.16}
  #allocation0 [shape = 'u32[]', space=smem, size = 0x4, offset = 0x4, fixed_abs, tag = 'smem constant byte address 0x4 - core index']
  #allocation1 [shape = 'u32[144,128]{1,0:T(1,128)}', space=vmem, size = 0x12000, scoped, tag = 'internal scratch']
  #allocation2 [shape = 'f32[1,8,32]{2,1,0:T(8,128)}', space=vmem, size = 0x1000, scoped, tag = 'scratch operand']
  %s0 = inlined_call_operand.vmem [shape: bf16[2,8,32], index: 0, kind: input, shape index: {}]
  %s1 = inlined_call_operand.vmem [shape: bf16[2,8,32], index: 1, kind: input, shape index: {}]
  %s2 = inlined_call_operand.vmem [shape: bf16[32,96], index: 2, kind: input, shape index: {}]
  %s3 = inlined_call_operand.vmem [shape: f32[1,96], index: 3, kind: input, shape index: {}]
  %s4 = inlined_call_operand.vmem [shape: bf16[32,32], index: 4, kind: input, shape index: {}]
  %s5 = inlined_call_operand.vmem [shape: f32[1,32], index: 5, kind: input, shape index: {}]
  %s6 = inlined_call_operand.vmem [shape: f32[1,32], index: 6, kind: input, shape index: {}]
  %s7 = inlined_call_operand.vmem [shape: f32[1,32], index: 7, kind: input, shape index: {}]
  %s8 = inlined_call_operand.vmem [shape: f32[2,1,8], index: 8, kind: input, shape index: {}]
  %s9 = inlined_call_operand.vmem [shape: bf16[2,8,32], index: 9, kind: output, shape index: {}]
  %s10 = sld [smem:[#allocation0]]
  $region69: #{seq2seq_forward.16} parent=0
    _
  %s12 = ssub.s32 1, %s10
  %s13 = scalar_select 0, %s12, %s10
  loop: start=0, step=1, limit=4
  $region2: #{seq2seq_forward.16} parent=0 // loop_pre_header
    _
  $region3: #{seq2seq_forward.16} parent=0 // loop_header
    %s15 = sphi 0, %s19
    %p16 = scmp.ge.s32.totalorder %s15, 4
    %s25 = sphi 0, %s27
    %s28 = sphi 0, %s25
    %s29 = sphi 0, %s28
    %s45 = sphi 0, %s29
    %s51 = sphi 0, %s53
    %s54 = sphi 0, %s51
    %s55 = sphi 0, %s54
    %s71 = sphi 0, %s55
    %s75 = sphi 0, %s75
    %s77 = sphi 0, %s75
    %s78 = sphi 0, %s77
    %s92 = sphi 0, %s78
    %s96 = sphi 0, %s96
    %s98 = sphi 0, %s96
    %s99 = sphi 0, %s98
    %s113 = sphi 0, %s99
    %s117 = sphi 0, %s117
    %s119 = sphi 0, %s117
    %s120 = sphi 0, %s119
    %s134 = sphi 0, %s120
    %s138 = sphi 0, %s138
    %s140 = sphi 0, %s138
    %s141 = sphi 0, %s140
    %s155 = sphi 0, %s141
    %s159 = sphi 0, %s159
    %s161 = sphi 0, %s159
    %s162 = sphi 0, %s161
    %s176 = sphi 0, %s162
    %s180 = sphi 0, %s180
    %s182 = sphi 0, %s180
    %s183 = sphi 0, %s182
    %s197 = sphi 0, %s183
    %s203 = sphi 0, %s205
    %s206 = sphi 0, %s203
    %s207 = sphi 0, %s206
    %s223 = sphi 0, %s207
    %s229 = sphi 0, %s231
    %s232 = sphi 0, %s229
    %s233 = sphi 0, %s232
    %s249 = sphi 0, %s233
  $region4: #{seq2seq_forward.16} parent=0 // loop_header_branch
    %18 = sbr.rel (%p16) target = $region8
  $region5: #{seq2seq_forward.16} parent=0 // loop_body
    %s20 = ssub.s32 %s15, 1
    %s21 = ssub.s32 %s15, 2
    %s22 = sadd.s32 %s15, 1
    %s23 = ssub.s32 %s15, %s22
    %p24 = scmp.eq.s32.totalorder %s23, 0
    %s26 = sadd.s32 %s25, 1
    %s27 = scalar_select %p24, %s25, %s26
    %p30 = pneg %p24
    %p31 = scmp.eq.s32.totalorder %s15, 1
    %p32 = por %p30, %p31
    %p33 = scmp.ne.s32.totalorder %s25, %s28
    %p34 = scmp.eq.s32.totalorder %s15, 0
    %p35 = por %p33, %p34
    %p36 = scmp.ne.s32.totalorder %s25, %s28
    %p37 = scmp.eq.s32.totalorder %s20, 1
    %p38 = por %p36, %p37
    %p39 = scmp.ne.s32.totalorder %s28, %s29
    %p40 = scmp.eq.s32.totalorder %s20, 0
    %p41 = por %p39, %p40
    %p42 = scmp.ne.s32.totalorder %s28, %s29
    %p43 = scmp.eq.s32.totalorder %s21, 1
    %p44 = por %p42, %p43
    %p46 = scmp.ne.s32.totalorder %s29, %s45
    %p47 = scmp.eq.s32.totalorder %s21, 0
    %p48 = por %p46, %p47
    %s49 = ssub.s32 %s15, %s22
    %p50 = scmp.eq.s32.totalorder %s49, 0
    %s52 = sadd.s32 %s51, 1
    %s53 = scalar_select %p50, %s51, %s52
    %p56 = pneg %p50
    %p57 = scmp.eq.s32.totalorder %s15, 1
    %p58 = por %p56, %p57
    %p59 = scmp.ne.s32.totalorder %s51, %s54
    %p60 = scmp.eq.s32.totalorder %s15, 0
    %p61 = por %p59, %p60
    %p62 = scmp.ne.s32.totalorder %s51, %s54
    %p63 = scmp.eq.s32.totalorder %s20, 1
    %p64 = por %p62, %p63
    %p65 = scmp.ne.s32.totalorder %s54, %s55
    %p66 = scmp.eq.s32.totalorder %s20, 0
    %p67 = por %p65, %p66
    %p68 = scmp.ne.s32.totalorder %s54, %s55
    %p69 = scmp.eq.s32.totalorder %s21, 1
    %p70 = por %p68, %p69
    %p72 = scmp.ne.s32.totalorder %s55, %s71
    %p73 = scmp.eq.s32.totalorder %s21, 0
    %p74 = por %p72, %p73
    %s76 = sadd.s32 %s75, 1
    %p79 = scmp.eq.s32.totalorder %s15, 1
    %p80 = scmp.ne.s32.totalorder %s75, %s77
    %p81 = scmp.eq.s32.totalorder %s15, 0
    %p82 = por %p80, %p81
    %p83 = scmp.ne.s32.totalorder %s75, %s77
    %p84 = scmp.eq.s32.totalorder %s20, 1
    %p85 = por %p83, %p84
    %p86 = scmp.ne.s32.totalorder %s77, %s78
    %p87 = scmp.eq.s32.totalorder %s20, 0
    %p88 = por %p86, %p87
    %p89 = scmp.ne.s32.totalorder %s77, %s78
    %p90 = scmp.eq.s32.totalorder %s21, 1
    %p91 = por %p89, %p90
    %p93 = scmp.ne.s32.totalorder %s78, %s92
    %p94 = scmp.eq.s32.totalorder %s21, 0
    %p95 = por %p93, %p94
    %s97 = sadd.s32 %s96, 1
    %p100 = scmp.eq.s32.totalorder %s15, 1
    %p101 = scmp.ne.s32.totalorder %s96, %s98
    %p102 = scmp.eq.s32.totalorder %s15, 0
    %p103 = por %p101, %p102
    %p104 = scmp.ne.s32.totalorder %s96, %s98
    %p105 = scmp.eq.s32.totalorder %s20, 1
    %p106 = por %p104, %p105
    %p107 = scmp.ne.s32.totalorder %s98, %s99
    %p108 = scmp.eq.s32.totalorder %s20, 0
    %p109 = por %p107, %p108
    %p110 = scmp.ne.s32.totalorder %s98, %s99
    %p111 = scmp.eq.s32.totalorder %s21, 1
    %p112 = por %p110, %p111
    %p114 = scmp.ne.s32.totalorder %s99, %s113
    %p115 = scmp.eq.s32.totalorder %s21, 0
    %p116 = por %p114, %p115
    %s118 = sadd.s32 %s117, 1
    %p121 = scmp.eq.s32.totalorder %s15, 1
    %p122 = scmp.ne.s32.totalorder %s117, %s119
    %p123 = scmp.eq.s32.totalorder %s15, 0
    %p124 = por %p122, %p123
    %p125 = scmp.ne.s32.totalorder %s117, %s119
    %p126 = scmp.eq.s32.totalorder %s20, 1
    %p127 = por %p125, %p126
    %p128 = scmp.ne.s32.totalorder %s119, %s120
    %p129 = scmp.eq.s32.totalorder %s20, 0
    %p130 = por %p128, %p129
    %p131 = scmp.ne.s32.totalorder %s119, %s120
    %p132 = scmp.eq.s32.totalorder %s21, 1
    %p133 = por %p131, %p132
    %p135 = scmp.ne.s32.totalorder %s120, %s134
    %p136 = scmp.eq.s32.totalorder %s21, 0
    %p137 = por %p135, %p136
    %s139 = sadd.s32 %s138, 1
    %p142 = scmp.eq.s32.totalorder %s15, 1
    %p143 = scmp.ne.s32.totalorder %s138, %s140
    %p144 = scmp.eq.s32.totalorder %s15, 0
    %p145 = por %p143, %p144
    %p146 = scmp.ne.s32.totalorder %s138, %s140
    %p147 = scmp.eq.s32.totalorder %s20, 1
    %p148 = por %p146, %p147
    %p149 = scmp.ne.s32.totalorder %s140, %s141
    %p150 = scmp.eq.s32.totalorder %s20, 0
    %p151 = por %p149, %p150
    %p152 = scmp.ne.s32.totalorder %s140, %s141
    %p153 = scmp.eq.s32.totalorder %s21, 1
    %p154 = por %p152, %p153
    %p156 = scmp.ne.s32.totalorder %s141, %s155
    %p157 = scmp.eq.s32.totalorder %s21, 0
    %p158 = por %p156, %p157
    %s160 = sadd.s32 %s159, 1
    %p163 = scmp.eq.s32.totalorder %s15, 1
    %p164 = scmp.ne.s32.totalorder %s159, %s161
    %p165 = scmp.eq.s32.totalorder %s15, 0
    %p166 = por %p164, %p165
    %p167 = scmp.ne.s32.totalorder %s159, %s161
    %p168 = scmp.eq.s32.totalorder %s20, 1
    %p169 = por %p167, %p168
    %p170 = scmp.ne.s32.totalorder %s161, %s162
    %p171 = scmp.eq.s32.totalorder %s20, 0
    %p172 = por %p170, %p171
    %p173 = scmp.ne.s32.totalorder %s161, %s162
    %p174 = scmp.eq.s32.totalorder %s21, 1
    %p175 = por %p173, %p174
    %p177 = scmp.ne.s32.totalorder %s162, %s176
    %p178 = scmp.eq.s32.totalorder %s21, 0
    %p179 = por %p177, %p178
    %s181 = sadd.s32 %s180, 1
    %p184 = scmp.eq.s32.totalorder %s15, 1
    %p185 = scmp.ne.s32.totalorder %s180, %s182
    %p186 = scmp.eq.s32.totalorder %s15, 0
    %p187 = por %p185, %p186
    %p188 = scmp.ne.s32.totalorder %s180, %s182
    %p189 = scmp.eq.s32.totalorder %s20, 1
    %p190 = por %p188, %p189
    %p191 = scmp.ne.s32.totalorder %s182, %s183
    %p192 = scmp.eq.s32.totalorder %s20, 0
    %p193 = por %p191, %p192
    %p194 = scmp.ne.s32.totalorder %s182, %s183
    %p195 = scmp.eq.s32.totalorder %s21, 1
    %p196 = por %p194, %p195
    %p198 = scmp.ne.s32.totalorder %s183, %s197
    %p199 = scmp.eq.s32.totalorder %s21, 0
    %p200 = por %p198, %p199
    %s201 = ssub.s32 %s15, %s22
    %p202 = scmp.eq.s32.totalorder %s201, 0
    %s204 = sadd.s32 %s203, 1
    %s205 = scalar_select %p202, %s203, %s204
    %p208 = pneg %p202
    %p209 = scmp.eq.s32.totalorder %s15, 1
    %p210 = por %p208, %p209
    %p211 = scmp.ne.s32.totalorder %s203, %s206
    %p212 = scmp.eq.s32.totalorder %s15, 0
    %p213 = por %p211, %p212
    %p214 = scmp.ne.s32.totalorder %s203, %s206
    %p215 = scmp.eq.s32.totalorder %s20, 1
    %p216 = por %p214, %p215
    %p217 = scmp.ne.s32.totalorder %s206, %s207
    %p218 = scmp.eq.s32.totalorder %s20, 0
    %p219 = por %p217, %p218
    %p220 = scmp.ne.s32.totalorder %s206, %s207
    %p221 = scmp.eq.s32.totalorder %s21, 1
    %p222 = por %p220, %p221
    %p224 = scmp.ne.s32.totalorder %s207, %s223
    %p225 = scmp.eq.s32.totalorder %s21, 0
    %p226 = por %p224, %p225
    %s227 = ssub.s32 %s15, %s22
    %p228 = scmp.eq.s32.totalorder %s227, 0
    %s230 = sadd.s32 %s229, 1
    %s231 = scalar_select %p228, %s229, %s230
    %p234 = pneg %p228
    %p235 = scmp.eq.s32.totalorder %s15, 1
    %p236 = por %p234, %p235
    %p237 = scmp.ne.s32.totalorder %s229, %s232
    %p238 = scmp.eq.s32.totalorder %s15, 0
    %p239 = por %p237, %p238
    %p240 = scmp.ne.s32.totalorder %s229, %s232
    %p241 = scmp.eq.s32.totalorder %s20, 1
    %p242 = por %p240, %p241
    %p243 = scmp.ne.s32.totalorder %s232, %s233
    %p244 = scmp.eq.s32.totalorder %s20, 0
    %p245 = por %p243, %p244
    %p246 = scmp.ne.s32.totalorder %s232, %s233
    %p247 = scmp.eq.s32.totalorder %s21, 1
    %p248 = por %p246, %p247
    %p250 = scmp.ne.s32.totalorder %s233, %s249
    %p251 = scmp.eq.s32.totalorder %s21, 0
    %p252 = por %p250, %p251
    %p253 = scmp.le.s32.totalorder 1, %s15
    %p254 = scmp.lt.s32.totalorder %s15, 3
    %p255 = pnand %p253, %p254
    %p256 = pneg %p255
    // Predicated region
    $region9: #{seq2seq_forward.16} parent=5 // pred_check
      _
    $region10: #{seq2seq_forward.16} parent=5 // pred_check_branch
      %258 = sbr.rel (%p255) target = $region12
    $region11: #{seq2seq_forward.16} parent=5 // pred_region
      %s259 = ssub.s32 %s15, 1
      // Predicated region
      $region13: #{seq2seq_forward.16} parent=11 // pred_check
        %p260 = pneg %p88
      $region14: #{seq2seq_forward.16} parent=11 // pred_check_branch
        %262 = sbr.rel (%p260) target = $region16
      $region15: #{seq2seq_forward.16} parent=11 // pred_region
        _
      $region16: #{seq2seq_forward.16} parent=11 // pred_fallthru
        _
      // Predicated region
      $region17: #{seq2seq_forward.16} parent=11 // pred_check
        %p263 = pneg %p109
      $region18: #{seq2seq_forward.16} parent=11 // pred_check_branch
        %265 = sbr.rel (%p263) target = $region20
      $region19: #{seq2seq_forward.16} parent=11 // pred_region
        _
      $region20: #{seq2seq_forward.16} parent=11 // pred_fallthru
        _
      // Predicated region
      $region21: #{seq2seq_forward.16} parent=11 // pred_check
        %p266 = pneg %p130
      $region22: #{seq2seq_forward.16} parent=11 // pred_check_branch
        %268 = sbr.rel (%p266) target = $region24
      $region23: #{seq2seq_forward.16} parent=11 // pred_region
        _
      $region24: #{seq2seq_forward.16} parent=11 // pred_fallthru
        _
      // Predicated region
      $region25: #{seq2seq_forward.16} parent=11 // pred_check
        %p269 = pneg %p151
      $region26: #{seq2seq_forward.16} parent=11 // pred_check_branch
        %271 = sbr.rel (%p269) target = $region28
      $region27: #{seq2seq_forward.16} parent=11 // pred_region
        _
      $region28: #{seq2seq_forward.16} parent=11 // pred_fallthru
        _
      // Predicated region
      $region29: #{seq2seq_forward.16} parent=11 // pred_check
        %p272 = pneg %p172
      $region30: #{seq2seq_forward.16} parent=11 // pred_check_branch
        %274 = sbr.rel (%p272) target = $region32
      $region31: #{seq2seq_forward.16} parent=11 // pred_region
        _
      $region32: #{seq2seq_forward.16} parent=11 // pred_fallthru
        _
      // Predicated region
      $region33: #{seq2seq_forward.16} parent=11 // pred_check
        %p275 = pneg %p193
      $region34: #{seq2seq_forward.16} parent=11 // pred_check_branch
        %277 = sbr.rel (%p275) target = $region36
      $region35: #{seq2seq_forward.16} parent=11 // pred_region
        _
      $region36: #{seq2seq_forward.16} parent=11 // pred_fallthru
        _
    $region12: #{seq2seq_forward.16} parent=5 // pred_fallthru
      _
    %p278 = scmp.lt.s32.totalorder %s15, 2
    // Predicated region
    $region37: #{seq2seq_forward.16} parent=5 // pred_check
      %p279 = pneg %p278
    $region38: #{seq2seq_forward.16} parent=5 // pred_check_branch
      %281 = sbr.rel (%p279) target = $region40
    $region39: #{seq2seq_forward.16} parent=5 // pred_region
      // Predicated region
      $region41: #{seq2seq_forward.16} parent=39 // pred_check
        %p282 = pneg %p35
      $region42: #{seq2seq_forward.16} parent=39 // pred_check_branch
        %284 = sbr.rel (%p282) target = $region44
      $region43: #{seq2seq_forward.16} parent=39 // pred_region
        %p285 = scmp.lt.s32.totalorder %s15, 1
        %s286 = scalar_select %p285, %s15, 1
        %s287 = smul.addr %s286, 4
        %s288 = scalar_lea.vmem %s0, %s287
      $region44: #{seq2seq_forward.16} parent=39 // pred_fallthru
        _
      // Predicated region
      $region45: #{seq2seq_forward.16} parent=39 // pred_check
        %p289 = pneg %p61
      $region46: #{seq2seq_forward.16} parent=39 // pred_check_branch
        %291 = sbr.rel (%p289) target = $region48
      $region47: #{seq2seq_forward.16} parent=39 // pred_region
        %p292 = scmp.lt.s32.totalorder %s15, 1
        %s293 = scalar_select %p292, %s15, 1
        %s294 = smul.addr %s293, 4
        %s295 = scalar_lea.vmem %s1, %s294
      $region48: #{seq2seq_forward.16} parent=39 // pred_fallthru
        _
      // Predicated region
      $region49: #{seq2seq_forward.16} parent=39 // pred_check
        %p296 = pneg %p213
      $region50: #{seq2seq_forward.16} parent=39 // pred_check_branch
        %298 = sbr.rel (%p296) target = $region52
      $region51: #{seq2seq_forward.16} parent=39 // pred_region
        %p299 = scmp.lt.s32.totalorder %s15, 1
        %s300 = scalar_select %p299, %s15, 1
        %s301 = scalar_lea.vmem %s8, %s300
      $region52: #{seq2seq_forward.16} parent=39 // pred_fallthru
        _
    $region40: #{seq2seq_forward.16} parent=5 // pred_fallthru
      _
    %p302 = scmp.le.s32.totalorder 1, %s15
    %p303 = scmp.lt.s32.totalorder %s15, 3
    %p304 = pnand %p302, %p303
    %p305 = pneg %p304
    // Predicated region
    $region53: #{seq2seq_forward.16} parent=5 // pred_check
      _
    $region54: #{seq2seq_forward.16} parent=5 // pred_check_branch
      %307 = sbr.rel (%p304) target = $region56
    $region55: #{seq2seq_forward.16} parent=5 // pred_region
      %s308 = ssub.s32 %s15, 1
      %p309 = scmp.lt.s32.totalorder %s20, 1
      %s310 = scalar_select %p309, %s20, 1
      %s311 = smul.addr %s310, 4
      %s312 = scalar_lea.vmem %s0, %s311
      %p313 = pneg %p41
      %p314 = pneg %p38
      %p315 = scmp.lt.s32.totalorder %s20, 1
      %s316 = scalar_select %p315, %s20, 1
      %s317 = smul.addr %s316, 4
      %s318 = scalar_lea.vmem %s1, %s317
      %p319 = pneg %p67
      %p320 = pneg %p64
      %p321 = pneg %p88
      %p322 = pneg %p85
      %p323 = pneg %p109
      %p324 = pneg %p106
      %p325 = pneg %p130
      %p326 = pneg %p127
      %p327 = pneg %p151
      %p328 = pneg %p148
      %p329 = pneg %p172
      %p330 = pneg %p169
      %p331 = pneg %p193
      %p332 = pneg %p190
      %p333 = scmp.lt.s32.totalorder %s20, 1
      %s334 = scalar_select %p333, %s20, 1
      %s335 = scalar_lea.vmem %s8, %s334
      %p336 = pneg %p219
      %p337 = pneg %p216
      %p338 = pneg %p245
      %p339 = pneg %p242
      %p340 = scmp.lt.s32.totalorder %s20, 1
      %s341 = scalar_select %p340, %s20, 1
      %s342 = smul.addr %s341, 4
      %s343 = scalar_lea.vmem %s9, %s342
      %p344 = scmp.lt.s32.totalorder %s20, 1
      %s345 = scalar_select %p344, %s20, 1
      %s346 = smul.addr %s345, 4
      %s347 = scalar_lea.vmem %s0, %s346
      %p348 = scmp.lt.s32.totalorder %s20, 1
      %s349 = scalar_select %p348, %s20, 1
      %s350 = smul.addr %s349, 4
      %s351 = scalar_lea.vmem %s1, %s350
      %p352 = scmp.lt.s32.totalorder %s20, 1
      %s353 = scalar_select %p352, %s20, 1
      %s354 = scalar_lea.vmem %s8, %s353
      %p355 = scmp.lt.s32.totalorder %s20, 1
      %s356 = scalar_select %p355, %s20, 1
      %s357 = smul.addr %s356, 4
      %s358 = scalar_lea.vmem %s9, %s357
      %v360 = vld [vmem:[%s347] sm:$0xf]
      %v361 = vld [vmem:[%s2] sm:$0xf]
      %v362 = vld [vmem:[%s2 + $0x4] sm:$0xf]
      %v363 = vld [vmem:[%s2 + $0x8] sm:$0xf]
      %v364 = vld [vmem:[%s2 + $0xc] sm:$0xf]
      %v365 = vld [vmem:[%s3] sm:$0x1]
      %v366 = vld [vmem:[%s351] sm:$0xf]
      %v368 = vlaneseq
      %v369 = vshrl.u32 %v368, 7
      %v370 = vsub.s32 0, %v369
      %v371 = vrot.slane %v365, %v370
      %v377 = vunpack.c.l.b16 %v361
      %v378 = vunpack.c.l.b16 %v362
      %v379 = vunpack.c.l.b16 %v363
      %v380 = vunpack.c.l.b16 %v364
      %v381 = vpack.c.b16 %v378, %v377
      %v382 = vpack.c.b16 %v380, %v379
      %vm385 = vcmask 261120
      %v387 = vsel %vm385, %v360, 0
      %389 = vmatprep.subr.bf16.mxu0 0
      %390 = vmatpush1.bf16.msra.mxu0 %v381
      %391 = vmatprep.subr.bf16.mxu0 0
      %392 = vmatpush1.bf16.msra.mxu0 %v382
      %393 = vmatprep.subr.bf16.mxu0 0
      %394 = vmatpush1.bf16.msra.mxu0 0
      %395 = vmatprep.subr.bf16.mxu0 0
      %396 = vmatpush1.bf16.msra.mxu0 0
      %397 = vmatprep.subr.bf16.mxu0 0
      %398 = vmatpush1.bf16.msra.mxu0 0
      %399 = vmatprep.subr.bf16.mxu0 0
      %400 = vmatpush1.bf16.msra.mxu0 0
      %401 = vmatprep.subr.bf16.mxu0 0
      %402 = vmatpush1.bf16.msra.mxu0 0
      %403 = vmatprep.subr.bf16.mxu0 0
      %404 = vmatpush1.bf16.msra.mxu0 0
      %405 = vmatprep.subr.bf16.mxu0 0
      %406 = vmatpush1.bf16.msra.mxu0 0
      %407 = vmatprep.subr.bf16.mxu0 0
      %408 = vmatpush1.bf16.msra.mxu0 0
      %409 = vmatprep.subr.bf16.mxu0 0
      %410 = vmatpush1.bf16.msra.mxu0 0
      %411 = vmatprep.subr.bf16.mxu0 0
      %412 = vmatpush1.bf16.msra.mxu0 0
      %413 = vmatprep.subr.bf16.mxu0 0
      %414 = vmatpush1.bf16.msra.mxu0 0
      %415 = vmatprep.subr.bf16.mxu0 0
      %416 = vmatpush1.bf16.msra.mxu0 0
      %417 = vmatprep.subr.bf16.mxu0 0
      %418 = vmatpush1.bf16.msra.mxu0 0
      %419 = vmatprep.subr.bf16.mxu0 0
      %420 = vmatpush1.bf16.msra.mxu0 0
      %421 = vmatprep.mubr.bf16.mxu0 0
      %422 = vmatmul.mubr.bf16.gmra.mrb[0].mxu0 %v387
      %v423 = vpop.f32.mrb[0].mxu0
      %v424 = vadd.f32 %v371, %v423
      %v425 = vpop.f32.mrb[0].mxu0
      %v426 = vpop.f32.mrb[0].mxu0
      %v427 = vpop.f32.mrb[0].mxu0
      %428 = vdwg.mxu0
      %429 = vrot.lane.b32.xlu0 %v381, 96
      %v430 = vpop.permute.xlu0 %429
      %431 = vrot.lane.b32.xlu0 %v382, 96
      %v432 = vpop.permute.xlu0 %431
      %435 = vrot.lane.b32.xlu0 %v371, 96
      %v436 = vpop.permute.xlu0 %435
      %v439 = vsel %vm385, %v366, 0
      %441 = vmatprep.subr.bf16.mxu0 0
      %442 = vmatpush1.bf16.msra.mxu0 %v430
      %443 = vmatprep.subr.bf16.mxu0 0
      %444 = vmatpush1.bf16.msra.mxu0 %v432
      %445 = vmatprep.subr.bf16.mxu0 0
      %446 = vmatpush1.bf16.msra.mxu0 0
      %447 = vmatprep.subr.bf16.mxu0 0
      %448 = vmatpush1.bf16.msra.mxu0 0
      %449 = vmatprep.subr.bf16.mxu0 0
      %450 = vmatpush1.bf16.msra.mxu0 0
      %451 = vmatprep.subr.bf16.mxu0 0
      %452 = vmatpush1.bf16.msra.mxu0 0
      %453 = vmatprep.subr.bf16.mxu0 0
      %454 = vmatpush1.bf16.msra.mxu0 0
      %455 = vmatprep.subr.bf16.mxu0 0
      %456 = vmatpush1.bf16.msra.mxu0 0
      %457 = vmatprep.subr.bf16.mxu0 0
      %458 = vmatpush1.bf16.msra.mxu0 0
      %459 = vmatprep.subr.bf16.mxu0 0
      %460 = vmatpush1.bf16.msra.mxu0 0
      %461 = vmatprep.subr.bf16.mxu0 0
      %462 = vmatpush1.bf16.msra.mxu0 0
      %463 = vmatprep.subr.bf16.mxu0 0
      %464 = vmatpush1.bf16.msra.mxu0 0
      %465 = vmatprep.subr.bf16.mxu0 0
      %466 = vmatpush1.bf16.msra.mxu0 0
      %467 = vmatprep.subr.bf16.mxu0 0
      %468 = vmatpush1.bf16.msra.mxu0 0
      %469 = vmatprep.subr.bf16.mxu0 0
      %470 = vmatpush1.bf16.msra.mxu0 0
      %471 = vmatprep.subr.bf16.mxu0 0
      %472 = vmatpush1.bf16.msra.mxu0 0
      %473 = vmatprep.mubr.bf16.mxu0 0
      %474 = vmatmul.mubr.bf16.gmra.mrb[0].mxu0 %v439
      %v475 = vpop.f32.mrb[0].mxu0
      %v476 = vadd.f32 %v436, %v475
      %v477 = vpop.f32.mrb[0].mxu0
      %v478 = vpop.f32.mrb[0].mxu0
      %v479 = vpop.f32.mrb[0].mxu0
      %480 = vdwg.mxu0
      %v481 = vmul.f32 %v424, 0.35355338
      %v482 = vpack.c.bf16 %v481, %v481
      %v483 = vpack.c.bf16 %v476, %v476
      %v484 = vld [vmem:[%s354] sm:$0x1]
      %vm485 = vcmask 64512
      %v487 = vsel %vm485, %v482, 0
      %v490 = vsel %vm485, %v483, 0
      %492 = vmatprep.subr.bf16.mxu0 0
      %493 = vmatpush1.bf16.xpose.msra.mxu0 %v490
      %494 = vmatprep.subr.bf16.mxu0 0
      %495 = vmatpush1.bf16.xpose.msra.mxu0 0
      %496 = vmatprep.subr.bf16.mxu0 0
      %497 = vmatpush1.bf16.xpose.msra.mxu0 0
      %498 = vmatprep.subr.bf16.mxu0 0
      %499 = vmatpush1.bf16.xpose.msra.mxu0 0
      %500 = vmatprep.subr.bf16.mxu0 0
      %501 = vmatpush1.bf16.xpose.msra.mxu0 0
      %502 = vmatprep.subr.bf16.mxu0 0
      %503 = vmatpush1.bf16.xpose.msra.mxu0 0
      %504 = vmatprep.subr.bf16.mxu0 0
      %505 = vmatpush1.bf16.xpose.msra.mxu0 0
      %506 = vmatprep.subr.bf16.mxu0 0
      %507 = vmatpush1.bf16.xpose.msra.mxu0 0
      %508 = vmatprep.subr.bf16.mxu0 0
      %509 = vmatpush1.bf16.xpose.msra.mxu0 0
      %510 = vmatprep.subr.bf16.mxu0 0
      %511 = vmatpush1.bf16.xpose.msra.mxu0 0
      %512 = vmatprep.subr.bf16.mxu0 0
      %513 = vmatpush1.bf16.xpose.msra.mxu0 0
      %514 = vmatprep.subr.bf16.mxu0 0
      %515 = vmatpush1.bf16.xpose.msra.mxu0 0
      %516 = vmatprep.subr.bf16.mxu0 0
      %517 = vmatpush1.bf16.xpose.msra.mxu0 0
      %518 = vmatprep.subr.bf16.mxu0 0
      %519 = vmatpush1.bf16.xpose.msra.mxu0 0
      %520 = vmatprep.subr.bf16.mxu0 0
      %521 = vmatpush1.bf16.xpose.msra.mxu0 0
      %522 = vmatprep.subr.bf16.mxu0 0
      %523 = vmatpush1.bf16.xpose.msra.mxu0 0
      %524 = vmatprep.mubr.bf16.mxu0 0
      %525 = vmatmul.mubr.bf16.gmra.mrb[0].mxu0 %v487
      %v526 = vpop.f32.mrb[0].mxu0
      %v527 = vadd.f32 0.0, %v526
      %v528 = vpop.f32.mrb[0].mxu0
      %v529 = vpop.f32.mrb[0].mxu0
      %v530 = vpop.f32.mrb[0].mxu0
      %531 = vdwg.mxu0
      %vm532 = vcmp.gt.f32.partialorder %v484, 0.5
      %v533 = vsel %vm532, 1, 0
      %v534 = vlaneseq
      %v535 = vshrl.u32 %v534, 7
      %v536 = vsub.s32 0, %v535
      %v537 = vrot.slane %v533, %v536
      %vm538 = vcmp.eq.s32.totalorder %v537, 1
      %v539 = vsel %vm538, -1e+30, %v527
      %v540 = vsel %vm485, %v539, -inf
      %541 = vmax.xlane.f32.xlu0 %v540
      %v542 = vpop.xlane.xlu0 %541
      %v543 = vsub.f32 %v539, %v542
      %v544 = vmul.f32 %v543, 1.442695
      %v545 = vpow.pop %v544
      %v546 = vsel %vm485, %v545, 0.0
      %547 = vadd.xlane.f32.xlu0 %v546
      %v548 = vpop.xlane.xlu0 %547
      %v549 = vrcp.pop %v548
      %v550 = vmul.f32 %v545, %v549
      %v551 = vpack.c.bf16 %v550, %v550
      %553 = vrot.lane.b32.xlu0 %v483, 96
      %v554 = vpop.permute.xlu0 %553
      %v556 = vsel %vm485, %v551, 0
      %vm558 = vcmask 1043456
      %v560 = vsel %vm558, %v554, 0
      %562 = vmatprep.subr.bf16.mxu0 0
      %563 = vmatpush1.bf16.msra.mxu0 %v560
      %564 = vmatprep.subr.bf16.mxu0 0
      %565 = vmatpush1.bf16.msra.mxu0 0
      %566 = vmatprep.subr.bf16.mxu0 0
      %567 = vmatpush1.bf16.msra.mxu0 0
      %568 = vmatprep.subr.bf16.mxu0 0
      %569 = vmatpush1.bf16.msra.mxu0 0
      %570 = vmatprep.subr.bf16.mxu0 0
      %571 = vmatpush1.bf16.msra.mxu0 0
      %572 = vmatprep.subr.bf16.mxu0 0
      %573 = vmatpush1.bf16.msra.mxu0 0
      %574 = vmatprep.subr.bf16.mxu0 0
      %575 = vmatpush1.bf16.msra.mxu0 0
      %576 = vmatprep.subr.bf16.mxu0 0
      %577 = vmatpush1.bf16.msra.mxu0 0
      %578 = vmatprep.subr.bf16.mxu0 0
      %579 = vmatpush1.bf16.msra.mxu0 0
      %580 = vmatprep.subr.bf16.mxu0 0
      %581 = vmatpush1.bf16.msra.mxu0 0
      %582 = vmatprep.subr.bf16.mxu0 0
      %583 = vmatpush1.bf16.msra.mxu0 0
      %584 = vmatprep.subr.bf16.mxu0 0
      %585 = vmatpush1.bf16.msra.mxu0 0
      %586 = vmatprep.subr.bf16.mxu0 0
      %587 = vmatpush1.bf16.msra.mxu0 0
      %588 = vmatprep.subr.bf16.mxu0 0
      %589 = vmatpush1.bf16.msra.mxu0 0
      %590 = vmatprep.subr.bf16.mxu0 0
      %591 = vmatpush1.bf16.msra.mxu0 0
      %592 = vmatprep.subr.bf16.mxu0 0
      %593 = vmatpush1.bf16.msra.mxu0 0
      %594 = vmatprep.mubr.bf16.mxu0 0
      %595 = vmatmul.mubr.bf16.gmra.mrb[0].mxu0 %v556
      %v596 = vpop.f32.mrb[0].mxu0
      %v597 = vadd.f32 0.0, %v596
      %v598 = vpop.f32.mrb[0].mxu0
      %v599 = vpop.f32.mrb[0].mxu0
      %v600 = vpop.f32.mrb[0].mxu0
      %601 = vdwg.mxu0
      %602 = vst.msk [vmem:[#allocation2] sm:$0xff] %vm485, %v597
      %604 = vrot.lane.b32.xlu0 %v482, 120
      %v605 = vpop.permute.xlu0 %604
      %606 = vrot.lane.b32.xlu0 %v483, 120
      %v607 = vpop.permute.xlu0 %606
      %v609 = vsel %vm485, %v605, 0
      %v612 = vsel %vm485, %v607, 0
      %614 = vmatprep.subr.bf16.mxu0 0
      %615 = vmatpush1.bf16.xpose.msra.mxu0 %v612
      %616 = vmatprep.subr.bf16.mxu0 0
      %617 = vmatpush1.bf16.xpose.msra.mxu0 0
      %618 = vmatprep.subr.bf16.mxu0 0
      %619 = vmatpush1.bf16.xpose.msra.mxu0 0
      %620 = vmatprep.subr.bf16.mxu0 0
      %621 = vmatpush1.bf16.xpose.msra.mxu0 0
      %622 = vmatprep.subr.bf16.mxu0 0
      %623 = vmatpush1.bf16.xpose.msra.mxu0 0
      %624 = vmatprep.subr.bf16.mxu0 0
      %625 = vmatpush1.bf16.xpose.msra.mxu0 0
      %626 = vmatprep.subr.bf16.mxu0 0
      %627 = vmatpush1.bf16.xpose.msra.mxu0 0
      %628 = vmatprep.subr.bf16.mxu0 0
      %629 = vmatpush1.bf16.xpose.msra.mxu0 0
      %630 = vmatprep.subr.bf16.mxu0 0
      %631 = vmatpush1.bf16.xpose.msra.mxu0 0
      %632 = vmatprep.subr.bf16.mxu0 0
      %633 = vmatpush1.bf16.xpose.msra.mxu0 0
      %634 = vmatprep.subr.bf16.mxu0 0
      %635 = vmatpush1.bf16.xpose.msra.mxu0 0
      %636 = vmatprep.subr.bf16.mxu0 0
      %637 = vmatpush1.bf16.xpose.msra.mxu0 0
      %638 = vmatprep.subr.bf16.mxu0 0
      %639 = vmatpush1.bf16.xpose.msra.mxu0 0
      %640 = vmatprep.subr.bf16.mxu0 0
      %641 = vmatpush1.bf16.xpose.msra.mxu0 0
      %642 = vmatprep.subr.bf16.mxu0 0
      %643 = vmatpush1.bf16.xpose.msra.mxu0 0
      %644 = vmatprep.subr.bf16.mxu0 0
      %645 = vmatpush1.bf16.xpose.msra.mxu0 0
      %646 = vmatprep.mubr.bf16.mxu0 0
      %647 = vmatmul.mubr.bf16.gmra.mrb[0].mxu0 %v609
      %v648 = vpop.f32.mrb[0].mxu0
      %v649 = vadd.f32 0.0, %v648
      %v650 = vpop.f32.mrb[0].mxu0
      %v651 = vpop.f32.mrb[0].mxu0
      %v652 = vpop.f32.mrb[0].mxu0
      %653 = vdwg.mxu0
      %v654 = vsel %vm538, -1e+30, %v649
      %v655 = vsel %vm485, %v654, -inf
      %656 = vmax.xlane.f32.xlu0 %v655
      %v657 = vpop.xlane.xlu0 %656
      %v658 = vsub.f32 %v654, %v657
      %v659 = vmul.f32 %v658, 1.442695
      %v660 = vpow.pop %v659
      %v661 = vsel %vm485, %v660, 0.0
      %662 = vadd.xlane.f32.xlu0 %v661
      %v663 = vpop.xlane.xlu0 %662
      %v664 = vrcp.pop %v663
      %v665 = vmul.f32 %v660, %v664
      %v666 = vpack.c.bf16 %v665, %v665
      %667 = vrot.lane.b32.xlu0 %v483, 88
      %v668 = vpop.permute.xlu0 %667
      %v670 = vsel %vm485, %v666, 0
      %v673 = vsel %vm558, %v668, 0
      %675 = vmatprep.subr.bf16.mxu0 0
      %676 = vmatpush1.bf16.msra.mxu0 %v673
      %677 = vmatprep.subr.bf16.mxu0 0
      %678 = vmatpush1.bf16.msra.mxu0 0
      %679 = vmatprep.subr.bf16.mxu0 0
      %680 = vmatpush1.bf16.msra.mxu0 0
      %681 = vmatprep.subr.bf16.mxu0 0
      %682 = vmatpush1.bf16.msra.mxu0 0
      %683 = vmatprep.subr.bf16.mxu0 0
      %684 = vmatpush1.bf16.msra.mxu0 0
      %685 = vmatprep.subr.bf16.mxu0 0
      %686 = vmatpush1.bf16.msra.mxu0 0
      %687 = vmatprep.subr.bf16.mxu0 0
      %688 = vmatpush1.bf16.msra.mxu0 0
      %689 = vmatprep.subr.bf16.mxu0 0
      %690 = vmatpush1.bf16.msra.mxu0 0
      %691 = vmatprep.subr.bf16.mxu0 0
      %692 = vmatpush1.bf16.msra.mxu0 0
      %693 = vmatprep.subr.bf16.mxu0 0
      %694 = vmatpush1.bf16.msra.mxu0 0
      %695 = vmatprep.subr.bf16.mxu0 0
      %696 = vmatpush1.bf16.msra.mxu0 0
      %697 = vmatprep.subr.bf16.mxu0 0
      %698 = vmatpush1.bf16.msra.mxu0 0
      %699 = vmatprep.subr.bf16.mxu0 0
      %700 = vmatpush1.bf16.msra.mxu0 0
      %701 = vmatprep.subr.bf16.mxu0 0
      %702 = vmatpush1.bf16.msra.mxu0 0
      %703 = vmatprep.subr.bf16.mxu0 0
      %704 = vmatpush1.bf16.msra.mxu0 0
      %705 = vmatprep.subr.bf16.mxu0 0
      %706 = vmatpush1.bf16.msra.mxu0 0
      %707 = vmatprep.mubr.bf16.mxu0 0
      %708 = vmatmul.mubr.bf16.gmra.mrb[0].mxu0 %v670
      %v709 = vpop.f32.mrb[0].mxu0
      %v710 = vadd.f32 0.0, %v709
      %v711 = vpop.f32.mrb[0].mxu0
      %v712 = vpop.f32.mrb[0].mxu0
      %v713 = vpop.f32.mrb[0].mxu0
      %714 = vdwg.mxu0
      %716 = vrot.lane.b32.xlu0 %v710, 8
      %v717 = vpop.permute.xlu0 %716
      %vm719 = vcmask 130112
      %720 = vst.msk [vmem:[#allocation2] sm:$0xff] %vm719, %v717
      %721 = vrot.lane.b32.xlu0 %v482, 112
      %v722 = vpop.permute.xlu0 %721
      %723 = vrot.lane.b32.xlu0 %v483, 112
      %v724 = vpop.permute.xlu0 %723
      %v726 = vsel %vm485, %v722, 0
      %v729 = vsel %vm485, %v724, 0
      %731 = vmatprep.subr.bf16.mxu0 0
      %732 = vmatpush1.bf16.xpose.msra.mxu0 %v729
      %733 = vmatprep.subr.bf16.mxu0 0
      %734 = vmatpush1.bf16.xpose.msra.mxu0 0
      %735 = vmatprep.subr.bf16.mxu0 0
      %736 = vmatpush1.bf16.xpose.msra.mxu0 0
      %737 = vmatprep.subr.bf16.mxu0 0
      %738 = vmatpush1.bf16.xpose.msra.mxu0 0
      %739 = vmatprep.subr.bf16.mxu0 0
      %740 = vmatpush1.bf16.xpose.msra.mxu0 0
      %741 = vmatprep.subr.bf16.mxu0 0
      %742 = vmatpush1.bf16.xpose.msra.mxu0 0
      %743 = vmatprep.subr.bf16.mxu0 0
      %744 = vmatpush1.bf16.xpose.msra.mxu0 0
      %745 = vmatprep.subr.bf16.mxu0 0
      %746 = vmatpush1.bf16.xpose.msra.mxu0 0
      %747 = vmatprep.subr.bf16.mxu0 0
      %748 = vmatpush1.bf16.xpose.msra.mxu0 0
      %749 = vmatprep.subr.bf16.mxu0 0
      %750 = vmatpush1.bf16.xpose.msra.mxu0 0
      %751 = vmatprep.subr.bf16.mxu0 0
      %752 = vmatpush1.bf16.xpose.msra.mxu0 0
      %753 = vmatprep.subr.bf16.mxu0 0
      %754 = vmatpush1.bf16.xpose.msra.mxu0 0
      %755 = vmatprep.subr.bf16.mxu0 0
      %756 = vmatpush1.bf16.xpose.msra.mxu0 0
      %757 = vmatprep.subr.bf16.mxu0 0
      %758 = vmatpush1.bf16.xpose.msra.mxu0 0
      %759 = vmatprep.subr.bf16.mxu0 0
      %760 = vmatpush1.bf16.xpose.msra.mxu0 0
      %761 = vmatprep.subr.bf16.mxu0 0
      %762 = vmatpush1.bf16.xpose.msra.mxu0 0
      %763 = vmatprep.mubr.bf16.mxu0 0
      %764 = vmatmul.mubr.bf16.gmra.mrb[0].mxu0 %v726
      %v765 = vpop.f32.mrb[0].mxu0
      %v766 = vadd.f32 0.0, %v765
      %v767 = vpop.f32.mrb[0].mxu0
      %v768 = vpop.f32.mrb[0].mxu0
      %v769 = vpop.f32.mrb[0].mxu0
      %770 = vdwg.mxu0
      %v771 = vsel %vm538, -1e+30, %v766
      %v772 = vsel %vm485, %v771, -inf
      %773 = vmax.xlane.f32.xlu0 %v772
      %v774 = vpop.xlane.xlu0 %773
      %v775 = vsub.f32 %v771, %v774
      %v776 = vmul.f32 %v775, 1.442695
      %v777 = vpow.pop %v776
      %v778 = vsel %vm485, %v777, 0.0
      %779 = vadd.xlane.f32.xlu0 %v778
      %v780 = vpop.xlane.xlu0 %779
      %v781 = vrcp.pop %v780
      %v782 = vmul.f32 %v777, %v781
      %v783 = vpack.c.bf16 %v782, %v782
      %784 = vrot.lane.b32.xlu0 %v483, 80
      %v785 = vpop.permute.xlu0 %784
      %v787 = vsel %vm485, %v783, 0
      %v790 = vsel %vm558, %v785, 0
      %792 = vmatprep.subr.bf16.mxu0 0
      %793 = vmatpush1.bf16.msra.mxu0 %v790
      %794 = vmatprep.subr.bf16.mxu0 0
      %795 = vmatpush1.bf16.msra.mxu0 0
      %796 = vmatprep.subr.bf16.mxu0 0
      %797 = vmatpush1.bf16.msra.mxu0 0
      %798 = vmatprep.subr.bf16.mxu0 0
      %799 = vmatpush1.bf16.msra.mxu0 0
      %800 = vmatprep.subr.bf16.mxu0 0
      %801 = vmatpush1.bf16.msra.mxu0 0
      %802 = vmatprep.subr.bf16.mxu0 0
      %803 = vmatpush1.bf16.msra.mxu0 0
      %804 = vmatprep.subr.bf16.mxu0 0
      %805 = vmatpush1.bf16.msra.mxu0 0
      %806 = vmatprep.subr.bf16.mxu0 0
      %807 = vmatpush1.bf16.msra.mxu0 0
      %808 = vmatprep.subr.bf16.mxu0 0
      %809 = vmatpush1.bf16.msra.mxu0 0
      %810 = vmatprep.subr.bf16.mxu0 0
      %811 = vmatpush1.bf16.msra.mxu0 0
      %812 = vmatprep.subr.bf16.mxu0 0
      %813 = vmatpush1.bf16.msra.mxu0 0
      %814 = vmatprep.subr.bf16.mxu0 0
      %815 = vmatpush1.bf16.msra.mxu0 0
      %816 = vmatprep.subr.bf16.mxu0 0
      %817 = vmatpush1.bf16.msra.mxu0 0
      %818 = vmatprep.subr.bf16.mxu0 0
      %819 = vmatpush1.bf16.msra.mxu0 0
      %820 = vmatprep.subr.bf16.mxu0 0
      %821 = vmatpush1.bf16.msra.mxu0 0
      %822 = vmatprep.subr.bf16.mxu0 0
      %823 = vmatpush1.bf16.msra.mxu0 0
      %824 = vmatprep.mubr.bf16.mxu0 0
      %825 = vmatmul.mubr.bf16.gmra.mrb[0].mxu0 %v787
      %v826 = vpop.f32.mrb[0].mxu0
      %v827 = vadd.f32 0.0, %v826
      %v828 = vpop.f32.mrb[0].mxu0
      %v829 = vpop.f32.mrb[0].mxu0
      %v830 = vpop.f32.mrb[0].mxu0
      %831 = vdwg.mxu0
      %833 = vrot.lane.b32.xlu0 %v827, 16
      %v834 = vpop.permute.xlu0 %833
      %vm836 = vcmask 195712
      %837 = vst.msk [vmem:[#allocation2] sm:$0xff] %vm836, %v834
      %838 = vrot.lane.b32.xlu0 %v482, 104
      %v839 = vpop.permute.xlu0 %838
      %840 = vrot.lane.b32.xlu0 %v483, 104
      %v841 = vpop.permute.xlu0 %840
      %v843 = vsel %vm485, %v839, 0
      %v846 = vsel %vm485, %v841, 0
      %848 = vmatprep.subr.bf16.mxu0 0
      %849 = vmatpush1.bf16.xpose.msra.mxu0 %v846
      %850 = vmatprep.subr.bf16.mxu0 0
      %851 = vmatpush1.bf16.xpose.msra.mxu0 0
      %852 = vmatprep.subr.bf16.mxu0 0
      %853 = vmatpush1.bf16.xpose.msra.mxu0 0
      %854 = vmatprep.subr.bf16.mxu0 0
      %855 = vmatpush1.bf16.xpose.msra.mxu0 0
      %856 = vmatprep.subr.bf16.mxu0 0
      %857 = vmatpush1.bf16.xpose.msra.mxu0 0
      %858 = vmatprep.subr.bf16.mxu0 0
      %859 = vmatpush1.bf16.xpose.msra.mxu0 0
      %860 = vmatprep.subr.bf16.mxu0 0
      %861 = vmatpush1.bf16.xpose.msra.mxu0 0
      %862 = vmatprep.subr.bf16.mxu0 0
      %863 = vmatpush1.bf16.xpose.msra.mxu0 0
      %864 = vmatprep.subr.bf16.mxu0 0
      %865 = vmatpush1.bf16.xpose.msra.mxu0 0
      %866 = vmatprep.subr.bf16.mxu0 0
      %867 = vmatpush1.bf16.xpose.msra.mxu0 0
      %868 = vmatprep.subr.bf16.mxu0 0
      %869 = vmatpush1.bf16.xpose.msra.mxu0 0
      %870 = vmatprep.subr.bf16.mxu0 0
      %871 = vmatpush1.bf16.xpose.msra.mxu0 0
      %872 = vmatprep.subr.bf16.mxu0 0
      %873 = vmatpush1.bf16.xpose.msra.mxu0 0
      %874 = vmatprep.subr.bf16.mxu0 0
      %875 = vmatpush1.bf16.xpose.msra.mxu0 0
      %876 = vmatprep.subr.bf16.mxu0 0
      %877 = vmatpush1.bf16.xpose.msra.mxu0 0
      %878 = vmatprep.subr.bf16.mxu0 0
      %879 = vmatpush1.bf16.xpose.msra.mxu0 0
      %880 = vmatprep.mubr.bf16.mxu0 0
      %881 = vmatmul.mubr.bf16.gmra.mrb[0].mxu0 %v843
      %v882 = vpop.f32.mrb[0].mxu0
      %v883 = vadd.f32 0.0, %v882
      %v884 = vpop.f32.mrb[0].mxu0
      %v885 = vpop.f32.mrb[0].mxu0
      %v886 = vpop.f32.mrb[0].mxu0
      %887 = vdwg.mxu0
      %v888 = vsel %vm538, -1e+30, %v883
      %v889 = vsel %vm485, %v888, -inf
      %890 = vmax.xlane.f32.xlu0 %v889
      %v891 = vpop.xlane.xlu0 %890
      %v892 = vsub.f32 %v888, %v891
      %v893 = vmul.f32 %v892, 1.442695
      %v894 = vpow.pop %v893
      %v895 = vsel %vm485, %v894, 0.0
      %896 = vadd.xlane.f32.xlu0 %v895
      %v897 = vpop.xlane.xlu0 %896
      %v898 = vrcp.pop %v897
      %v899 = vmul.f32 %v894, %v898
      %v900 = vpack.c.bf16 %v899, %v899
      %901 = vrot.lane.b32.xlu0 %v483, 72
      %v902 = vpop.permute.xlu0 %901
      %v904 = vsel %vm485, %v900, 0
      %v907 = vsel %vm558, %v902, 0
      %909 = vmatprep.subr.bf16.mxu0 0
      %910 = vmatpush1.bf16.msra.mxu0 %v907
      %911 = vmatprep.subr.bf16.mxu0 0
      %912 = vmatpush1.bf16.msra.mxu0 0
      %913 = vmatprep.subr.bf16.mxu0 0
      %914 = vmatpush1.bf16.msra.mxu0 0
      %915 = vmatprep.subr.bf16.mxu0 0
      %916 = vmatpush1.bf16.msra.mxu0 0
      %917 = vmatprep.subr.bf16.mxu0 0
      %918 = vmatpush1.bf16.msra.mxu0 0
      %919 = vmatprep.subr.bf16.mxu0 0
      %920 = vmatpush1.bf16.msra.mxu0 0
      %921 = vmatprep.subr.bf16.mxu0 0
      %922 = vmatpush1.bf16.msra.mxu0 0
      %923 = vmatprep.subr.bf16.mxu0 0
      %924 = vmatpush1.bf16.msra.mxu0 0
      %925 = vmatprep.subr.bf16.mxu0 0
      %926 = vmatpush1.bf16.msra.mxu0 0
      %927 = vmatprep.subr.bf16.mxu0 0
      %928 = vmatpush1.bf16.msra.mxu0 0
      %929 = vmatprep.subr.bf16.mxu0 0
      %930 = vmatpush1.bf16.msra.mxu0 0
      %931 = vmatprep.subr.bf16.mxu0 0
      %932 = vmatpush1.bf16.msra.mxu0 0
      %933 = vmatprep.subr.bf16.mxu0 0
      %934 = vmatpush1.bf16.msra.mxu0 0
      %935 = vmatprep.subr.bf16.mxu0 0
      %936 = vmatpush1.bf16.msra.mxu0 0
      %937 = vmatprep.subr.bf16.mxu0 0
      %938 = vmatpush1.bf16.msra.mxu0 0
      %939 = vmatprep.subr.bf16.mxu0 0
      %940 = vmatpush1.bf16.msra.mxu0 0
      %941 = vmatprep.mubr.bf16.mxu0 0
      %942 = vmatmul.mubr.bf16.gmra.mrb[0].mxu0 %v904
      %v943 = vpop.f32.mrb[0].mxu0
      %v944 = vadd.f32 0.0, %v943
      %v945 = vpop.f32.mrb[0].mxu0
      %v946 = vpop.f32.mrb[0].mxu0
      %v947 = vpop.f32.mrb[0].mxu0
      %948 = vdwg.mxu0
      %950 = vrot.lane.b32.xlu0 %v944, 24
      %v951 = vpop.permute.xlu0 %950
      %vm953 = vcmask 261312
      %954 = vst.msk [vmem:[#allocation2] sm:$0xff] %vm953, %v951
      %v955 = vld [vmem:[#allocation2] sm:$0xff]
      %v956 = vpack.c.bf16 %v955, %v955
      %v957 = vld [vmem:[%s4] sm:$0xf]
      %v958 = vld [vmem:[%s4 + $0x4] sm:$0xf]
      %v959 = vld [vmem:[%s4 + $0x8] sm:$0xf]
      %v960 = vld [vmem:[%s4 + $0xc] sm:$0xf]
      %v961 = vld [vmem:[%s5] sm:$0x1]
      %v963 = vlaneseq
      %v964 = vshrl.u32 %v963, 7
      %v965 = vsub.s32 0, %v964
      %v966 = vrot.slane %v961, %v965
      %v972 = vunpack.c.l.b16 %v957
      %v973 = vunpack.c.l.b16 %v958
      %v974 = vunpack.c.l.b16 %v959
      %v975 = vunpack.c.l.b16 %v960
      %v976 = vpack.c.b16 %v973, %v972
      %v977 = vpack.c.b16 %v975, %v974
      %v981 = vsel %vm385, %v956, 0
      %983 = vmatprep.subr.bf16.mxu0 0
      %984 = vmatpush1.bf16.msra.mxu0 %v976
      %985 = vmatprep.subr.bf16.mxu0 0
      %986 = vmatpush1.bf16.msra.mxu0 %v977
      %987 = vmatprep.subr.bf16.mxu0 0
      %988 = vmatpush1.bf16.msra.mxu0 0
      %989 = vmatprep.subr.bf16.mxu0 0
      %990 = vmatpush1.bf16.msra.mxu0 0
      %991 = vmatprep.subr.bf16.mxu0 0
      %992 = vmatpush1.bf16.msra.mxu0 0
      %993 = vmatprep.subr.bf16.mxu0 0
      %994 = vmatpush1.bf16.msra.mxu0 0
      %995 = vmatprep.subr.bf16.mxu0 0
      %996 = vmatpush1.bf16.msra.mxu0 0
      %997 = vmatprep.subr.bf16.mxu0 0
      %998 = vmatpush1.bf16.msra.mxu0 0
      %999 = vmatprep.subr.bf16.mxu0 0
      %1000 = vmatpush1.bf16.msra.mxu0 0
      %1001 = vmatprep.subr.bf16.mxu0 0
      %1002 = vmatpush1.bf16.msra.mxu0 0
      %1003 = vmatprep.subr.bf16.mxu0 0
      %1004 = vmatpush1.bf16.msra.mxu0 0
      %1005 = vmatprep.subr.bf16.mxu0 0
      %1006 = vmatpush1.bf16.msra.mxu0 0
      %1007 = vmatprep.subr.bf16.mxu0 0
      %1008 = vmatpush1.bf16.msra.mxu0 0
      %1009 = vmatprep.subr.bf16.mxu0 0
      %1010 = vmatpush1.bf16.msra.mxu0 0
      %1011 = vmatprep.subr.bf16.mxu0 0
      %1012 = vmatpush1.bf16.msra.mxu0 0
      %1013 = vmatprep.subr.bf16.mxu0 0
      %1014 = vmatpush1.bf16.msra.mxu0 0
      %1015 = vmatprep.mubr.bf16.mxu0 0
      %1016 = vmatmul.mubr.bf16.gmra.mrb[0].mxu0 %v981
      %v1017 = vpop.f32.mrb[0].mxu0
      %v1018 = vadd.f32 %v966, %v1017
      %v1019 = vpop.f32.mrb[0].mxu0
      %v1020 = vpop.f32.mrb[0].mxu0
      %v1021 = vpop.f32.mrb[0].mxu0
      %1022 = vdwg.mxu0
      %v1023 = vunpack.c.l.bf16 %v360
      %v1024 = vadd.f32 %v1023, %v1018
      %v1025 = vld [vmem:[%s6] sm:$0x1]
      %v1026 = vld [vmem:[%s7] sm:$0x1]
      %v1027 = vsel %vm385, %v1024, 0.0
      %1028 = vadd.xlane.f32.xlu0 %v1027
      %v1029 = vpop.xlane.xlu0 %1028
      %v1030 = vrcp.pop 32.0
      %v1031 = vmul.f32 %v1029, %v1030
      %v1032 = vsub.f32 %v1024, %v1031
      %v1033 = vmul.f32 %v1032, %v1032
      %v1034 = vsel %vm385, %v1033, 0.0
      %1035 = vadd.xlane.f32.xlu0 %v1034
      %v1036 = vpop.xlane.xlu0 %1035
      %v1037 = vmul.f32 %v1036, %v1030
      %v1038 = vadd.f32 %v1037, 1e-05
      %v1039 = vrsqrt.pop %v1038
      %v1040 = vmul.f32 %v1032, %v1039
      %v1042 = vlaneseq
      %v1043 = vshrl.u32 %v1042, 7
      %v1044 = vsub.s32 0, %v1043
      %v1045 = vrot.slane %v1025, %v1044
      %v1047 = vmul.f32 %v1040, %v1045
      %v1049 = vlaneseq
      %v1050 = vshrl.u32 %v1049, 7
      %v1051 = vsub.s32 0, %v1050
      %v1052 = vrot.slane %v1026, %v1051
      %v1054 = vadd.f32 %v1047, %v1052
      %v1055 = vpack.c.bf16 %v1054, %v1054
      %vm1056 = vcmask 257024
      %1057 = vst.msk [vmem:[%s358] sm:$0xf] %vm1056, %v1055
      %p1058 = scmp.lt.s32.totalorder %s20, 1
      %s1059 = scalar_select %p1058, %s20, 1
      %s1060 = smul.addr %s1059, 4
      %s1061 = scalar_lea.vmem %s9, %s1060
      // Predicated region
      $region57: #{seq2seq_forward.16} parent=55 // pred_check
        %p1062 = pneg %p242
      $region58: #{seq2seq_forward.16} parent=55 // pred_check_branch
        %1064 = sbr.rel (%p1062) target = $region60
      $region59: #{seq2seq_forward.16} parent=55 // pred_region
        _
      $region60: #{seq2seq_forward.16} parent=55 // pred_fallthru
        _
    $region56: #{seq2seq_forward.16} parent=5 // pred_fallthru
      _
    %p1065 = scmp.le.s32.totalorder 2, %s15
    // Predicated region
    $region61: #{seq2seq_forward.16} parent=5 // pred_check
      %p1066 = pneg %p1065
    $region62: #{seq2seq_forward.16} parent=5 // pred_check_branch
      %1068 = sbr.rel (%p1066) target = $region64
    $region63: #{seq2seq_forward.16} parent=5 // pred_region
      %s1069 = ssub.s32 %s15, 2
      // Predicated region
      $region65: #{seq2seq_forward.16} parent=63 // pred_check
        %p1070 = pneg %p248
      $region66: #{seq2seq_forward.16} parent=63 // pred_check_branch
        %1072 = sbr.rel (%p1070) target = $region68
      $region67: #{seq2seq_forward.16} parent=63 // pred_region
        %p1073 = scmp.lt.s32.totalorder %s21, 1
        %s1074 = scalar_select %p1073, %s21, 1
        %s1075 = smul.addr %s1074, 4
        %s1076 = scalar_lea.vmem %s9, %s1075
      $region68: #{seq2seq_forward.16} parent=63 // pred_fallthru
        _
    $region64: #{seq2seq_forward.16} parent=5 // pred_fallthru
      _
  $region6: #{seq2seq_forward.16} parent=0 // loop_footer
    %s19 = sadd.s32 1, %s15
  $region7: #{seq2seq_forward.16} parent=0 // loop_footer_branch
    %14 = sbr.rel target = $region3
  $region8: #{seq2seq_forward.16} parent=0 // loop_exit
    _

// kernel: seq2seq_forward.11
$region0: #{seq2seq_forward.11}
  #allocation0 [shape = 'u32[]', space=smem, size = 0x4, offset = 0x4, fixed_abs, tag = 'smem constant byte address 0x4 - core index']
  #allocation1 [shape = 'u32[144,128]{1,0:T(1,128)}', space=vmem, size = 0x12000, scoped, tag = 'internal scratch']
  #allocation2 [shape = 'f32[1,8,32]{2,1,0:T(8,128)}', space=vmem, size = 0x1000, scoped, tag = 'scratch operand']
  %s0 = inlined_call_operand.vmem [shape: bf16[2,8,32], index: 0, kind: input, shape index: {}]
  %s1 = inlined_call_operand.vmem [shape: bf16[32,96], index: 1, kind: input, shape index: {}]
  %s2 = inlined_call_operand.vmem [shape: f32[1,96], index: 2, kind: input, shape index: {}]
  %s3 = inlined_call_operand.vmem [shape: bf16[32,32], index: 3, kind: input, shape index: {}]
  %s4 = inlined_call_operand.vmem [shape: f32[1,32], index: 4, kind: input, shape index: {}]
  %s5 = inlined_call_operand.vmem [shape: f32[1,32], index: 5, kind: input, shape index: {}]
  %s6 = inlined_call_operand.vmem [shape: f32[1,32], index: 6, kind: input, shape index: {}]
  %s7 = inlined_call_operand.vmem [shape: f32[8,8], index: 7, kind: input, shape index: {}]
  %s8 = inlined_call_operand.vmem [shape: f32[2,1,8], index: 8, kind: input, shape index: {}]
  %s9 = inlined_call_operand.vmem [shape: bf16[2,8,32], index: 9, kind: output, shape index: {}]
  %s10 = sld [smem:[#allocation0]]
  $region69: #{seq2seq_forward.11} parent=0
    _
  %s12 = ssub.s32 1, %s10
  %s13 = scalar_select 0, %s12, %s10
  loop: start=0, step=1, limit=4
  $region2: #{seq2seq_forward.11} parent=0 // loop_pre_header
    _
  $region3: #{seq2seq_forward.11} parent=0 // loop_header
    %s15 = sphi 0, %s19
    %p16 = scmp.ge.s32.totalorder %s15, 4
    %s25 = sphi 0, %s27
    %s28 = sphi 0, %s25
    %s29 = sphi 0, %s28
    %s45 = sphi 0, %s29
    %s49 = sphi 0, %s49
    %s51 = sphi 0, %s49
    %s52 = sphi 0, %s51
    %s66 = sphi 0, %s52
    %s70 = sphi 0, %s70
    %s72 = sphi 0, %s70
    %s73 = sphi 0, %s72
    %s87 = sphi 0, %s73
    %s91 = sphi 0, %s91
    %s93 = sphi 0, %s91
    %s94 = sphi 0, %s93
    %s108 = sphi 0, %s94
    %s112 = sphi 0, %s112
    %s114 = sphi 0, %s112
    %s115 = sphi 0, %s114
    %s129 = sphi 0, %s115
    %s133 = sphi 0, %s133
    %s135 = sphi 0, %s133
    %s136 = sphi 0, %s135
    %s150 = sphi 0, %s136
    %s154 = sphi 0, %s154
    %s156 = sphi 0, %s154
    %s157 = sphi 0, %s156
    %s171 = sphi 0, %s157
    %s175 = sphi 0, %s175
    %s177 = sphi 0, %s175
    %s178 = sphi 0, %s177
    %s192 = sphi 0, %s178
    %s198 = sphi 0, %s200
    %s201 = sphi 0, %s198
    %s202 = sphi 0, %s201
    %s218 = sphi 0, %s202
    %s224 = sphi 0, %s226
    %s227 = sphi 0, %s224
    %s228 = sphi 0, %s227
    %s244 = sphi 0, %s228
  $region4: #{seq2seq_forward.11} parent=0 // loop_header_branch
    %18 = sbr.rel (%p16) target = $region8
  $region5: #{seq2seq_forward.11} parent=0 // loop_body
    %s20 = ssub.s32 %s15, 1
    %s21 = ssub.s32 %s15, 2
    %s22 = sadd.s32 %s15, 1
    %s23 = ssub.s32 %s15, %s22
    %p24 = scmp.eq.s32.totalorder %s23, 0
    %s26 = sadd.s32 %s25, 1
    %s27 = scalar_select %p24, %s25, %s26
    %p30 = pneg %p24
    %p31 = scmp.eq.s32.totalorder %s15, 1
    %p32 = por %p30, %p31
    %p33 = scmp.ne.s32.totalorder %s25, %s28
    %p34 = scmp.eq.s32.totalorder %s15, 0
    %p35 = por %p33, %p34
    %p36 = scmp.ne.s32.totalorder %s25, %s28
    %p37 = scmp.eq.s32.totalorder %s20, 1
    %p38 = por %p36, %p37
    %p39 = scmp.ne.s32.totalorder %s28, %s29
    %p40 = scmp.eq.s32.totalorder %s20, 0
    %p41 = por %p39, %p40
    %p42 = scmp.ne.s32.totalorder %s28, %s29
    %p43 = scmp.eq.s32.totalorder %s21, 1
    %p44 = por %p42, %p43
    %p46 = scmp.ne.s32.totalorder %s29, %s45
    %p47 = scmp.eq.s32.totalorder %s21, 0
    %p48 = por %p46, %p47
    %s50 = sadd.s32 %s49, 1
    %p53 = scmp.eq.s32.totalorder %s15, 1
    %p54 = scmp.ne.s32.totalorder %s49, %s51
    %p55 = scmp.eq.s32.totalorder %s15, 0
    %p56 = por %p54, %p55
    %p57 = scmp.ne.s32.totalorder %s49, %s51
    %p58 = scmp.eq.s32.totalorder %s20, 1
    %p59 = por %p57, %p58
    %p60 = scmp.ne.s32.totalorder %s51, %s52
    %p61 = scmp.eq.s32.totalorder %s20, 0
    %p62 = por %p60, %p61
    %p63 = scmp.ne.s32.totalorder %s51, %s52
    %p64 = scmp.eq.s32.totalorder %s21, 1
    %p65 = por %p63, %p64
    %p67 = scmp.ne.s32.totalorder %s52, %s66
    %p68 = scmp.eq.s32.totalorder %s21, 0
    %p69 = por %p67, %p68
    %s71 = sadd.s32 %s70, 1
    %p74 = scmp.eq.s32.totalorder %s15, 1
    %p75 = scmp.ne.s32.totalorder %s70, %s72
    %p76 = scmp.eq.s32.totalorder %s15, 0
    %p77 = por %p75, %p76
    %p78 = scmp.ne.s32.totalorder %s70, %s72
    %p79 = scmp.eq.s32.totalorder %s20, 1
    %p80 = por %p78, %p79
    %p81 = scmp.ne.s32.totalorder %s72, %s73
    %p82 = scmp.eq.s32.totalorder %s20, 0
    %p83 = por %p81, %p82
    %p84 = scmp.ne.s32.totalorder %s72, %s73
    %p85 = scmp.eq.s32.totalorder %s21, 1
    %p86 = por %p84, %p85
    %p88 = scmp.ne.s32.totalorder %s73, %s87
    %p89 = scmp.eq.s32.totalorder %s21, 0
    %p90 = por %p88, %p89
    %s92 = sadd.s32 %s91, 1
    %p95 = scmp.eq.s32.totalorder %s15, 1
    %p96 = scmp.ne.s32.totalorder %s91, %s93
    %p97 = scmp.eq.s32.totalorder %s15, 0
    %p98 = por %p96, %p97
    %p99 = scmp.ne.s32.totalorder %s91, %s93
    %p100 = scmp.eq.s32.totalorder %s20, 1
    %p101 = por %p99, %p100
    %p102 = scmp.ne.s32.totalorder %s93, %s94
    %p103 = scmp.eq.s32.totalorder %s20, 0
    %p104 = por %p102, %p103
    %p105 = scmp.ne.s32.totalorder %s93, %s94
    %p106 = scmp.eq.s32.totalorder %s21, 1
    %p107 = por %p105, %p106
    %p109 = scmp.ne.s32.totalorder %s94, %s108
    %p110 = scmp.eq.s32.totalorder %s21, 0
    %p111 = por %p109, %p110
    %s113 = sadd.s32 %s112, 1
    %p116 = scmp.eq.s32.totalorder %s15, 1
    %p117 = scmp.ne.s32.totalorder %s112, %s114
    %p118 = scmp.eq.s32.totalorder %s15, 0
    %p119 = por %p117, %p118
    %p120 = scmp.ne.s32.totalorder %s112, %s114
    %p121 = scmp.eq.s32.totalorder %s20, 1
    %p122 = por %p120, %p121
    %p123 = scmp.ne.s32.totalorder %s114, %s115
    %p124 = scmp.eq.s32.totalorder %s20, 0
    %p125 = por %p123, %p124
    %p126 = scmp.ne.s32.totalorder %s114, %s115
    %p127 = scmp.eq.s32.totalorder %s21, 1
    %p128 = por %p126, %p127
    %p130 = scmp.ne.s32.totalorder %s115, %s129
    %p131 = scmp.eq.s32.totalorder %s21, 0
    %p132 = por %p130, %p131
    %s134 = sadd.s32 %s133, 1
    %p137 = scmp.eq.s32.totalorder %s15, 1
    %p138 = scmp.ne.s32.totalorder %s133, %s135
    %p139 = scmp.eq.s32.totalorder %s15, 0
    %p140 = por %p138, %p139
    %p141 = scmp.ne.s32.totalorder %s133, %s135
    %p142 = scmp.eq.s32.totalorder %s20, 1
    %p143 = por %p141, %p142
    %p144 = scmp.ne.s32.totalorder %s135, %s136
    %p145 = scmp.eq.s32.totalorder %s20, 0
    %p146 = por %p144, %p145
    %p147 = scmp.ne.s32.totalorder %s135, %s136
    %p148 = scmp.eq.s32.totalorder %s21, 1
    %p149 = por %p147, %p148
    %p151 = scmp.ne.s32.totalorder %s136, %s150
    %p152 = scmp.eq.s32.totalorder %s21, 0
    %p153 = por %p151, %p152
    %s155 = sadd.s32 %s154, 1
    %p158 = scmp.eq.s32.totalorder %s15, 1
    %p159 = scmp.ne.s32.totalorder %s154, %s156
    %p160 = scmp.eq.s32.totalorder %s15, 0
    %p161 = por %p159, %p160
    %p162 = scmp.ne.s32.totalorder %s154, %s156
    %p163 = scmp.eq.s32.totalorder %s20, 1
    %p164 = por %p162, %p163
    %p165 = scmp.ne.s32.totalorder %s156, %s157
    %p166 = scmp.eq.s32.totalorder %s20, 0
    %p167 = por %p165, %p166
    %p168 = scmp.ne.s32.totalorder %s156, %s157
    %p169 = scmp.eq.s32.totalorder %s21, 1
    %p170 = por %p168, %p169
    %p172 = scmp.ne.s32.totalorder %s157, %s171
    %p173 = scmp.eq.s32.totalorder %s21, 0
    %p174 = por %p172, %p173
    %s176 = sadd.s32 %s175, 1
    %p179 = scmp.eq.s32.totalorder %s15, 1
    %p180 = scmp.ne.s32.totalorder %s175, %s177
    %p181 = scmp.eq.s32.totalorder %s15, 0
    %p182 = por %p180, %p181
    %p183 = scmp.ne.s32.totalorder %s175, %s177
    %p184 = scmp.eq.s32.totalorder %s20, 1
    %p185 = por %p183, %p184
    %p186 = scmp.ne.s32.totalorder %s177, %s178
    %p187 = scmp.eq.s32.totalorder %s20, 0
    %p188 = por %p186, %p187
    %p189 = scmp.ne.s32.totalorder %s177, %s178
    %p190 = scmp.eq.s32.totalorder %s21, 1
    %p191 = por %p189, %p190
    %p193 = scmp.ne.s32.totalorder %s178, %s192
    %p194 = scmp.eq.s32.totalorder %s21, 0
    %p195 = por %p193, %p194
    %s196 = ssub.s32 %s15, %s22
    %p197 = scmp.eq.s32.totalorder %s196, 0
    %s199 = sadd.s32 %s198, 1
    %s200 = scalar_select %p197, %s198, %s199
    %p203 = pneg %p197
    %p204 = scmp.eq.s32.totalorder %s15, 1
    %p205 = por %p203, %p204
    %p206 = scmp.ne.s32.totalorder %s198, %s201
    %p207 = scmp.eq.s32.totalorder %s15, 0
    %p208 = por %p206, %p207
    %p209 = scmp.ne.s32.totalorder %s198, %s201
    %p210 = scmp.eq.s32.totalorder %s20, 1
    %p211 = por %p209, %p210
    %p212 = scmp.ne.s32.totalorder %s201, %s202
    %p213 = scmp.eq.s32.totalorder %s20, 0
    %p214 = por %p212, %p213
    %p215 = scmp.ne.s32.totalorder %s201, %s202
    %p216 = scmp.eq.s32.totalorder %s21, 1
    %p217 = por %p215, %p216
    %p219 = scmp.ne.s32.totalorder %s202, %s218
    %p220 = scmp.eq.s32.totalorder %s21, 0
    %p221 = por %p219, %p220
    %s222 = ssub.s32 %s15, %s22
    %p223 = scmp.eq.s32.totalorder %s222, 0
    %s225 = sadd.s32 %s224, 1
    %s226 = scalar_select %p223, %s224, %s225
    %p229 = pneg %p223
    %p230 = scmp.eq.s32.totalorder %s15, 1
    %p231 = por %p229, %p230
    %p232 = scmp.ne.s32.totalorder %s224, %s227
    %p233 = scmp.eq.s32.totalorder %s15, 0
    %p234 = por %p232, %p233
    %p235 = scmp.ne.s32.totalorder %s224, %s227
    %p236 = scmp.eq.s32.totalorder %s20, 1
    %p237 = por %p235, %p236
    %p238 = scmp.ne.s32.totalorder %s227, %s228
    %p239 = scmp.eq.s32.totalorder %s20, 0
    %p240 = por %p238, %p239
    %p241 = scmp.ne.s32.totalorder %s227, %s228
    %p242 = scmp.eq.s32.totalorder %s21, 1
    %p243 = por %p241, %p242
    %p245 = scmp.ne.s32.totalorder %s228, %s244
    %p246 = scmp.eq.s32.totalorder %s21, 0
    %p247 = por %p245, %p246
    %p248 = scmp.le.s32.totalorder 1, %s15
    %p249 = scmp.lt.s32.totalorder %s15, 3
    %p250 = pnand %p248, %p249
    %p251 = pneg %p250
    // Predicated region
    $region9: #{seq2seq_forward.11} parent=5 // pred_check
      _
    $region10: #{seq2seq_forward.11} parent=5 // pred_check_branch
      %253 = sbr.rel (%p250) target = $region12
    $region11: #{seq2seq_forward.11} parent=5 // pred_region
      %s254 = ssub.s32 %s15, 1
      // Predicated region
      $region13: #{seq2seq_forward.11} parent=11 // pred_check
        %p255 = pneg %p62
      $region14: #{seq2seq_forward.11} parent=11 // pred_check_branch
        %257 = sbr.rel (%p255) target = $region16
      $region15: #{seq2seq_forward.11} parent=11 // pred_region
        _
      $region16: #{seq2seq_forward.11} parent=11 // pred_fallthru
        _
      // Predicated region
      $region17: #{seq2seq_forward.11} parent=11 // pred_check
        %p258 = pneg %p83
      $region18: #{seq2seq_forward.11} parent=11 // pred_check_branch
        %260 = sbr.rel (%p258) target = $region20
      $region19: #{seq2seq_forward.11} parent=11 // pred_region
        _
      $region20: #{seq2seq_forward.11} parent=11 // pred_fallthru
        _
      // Predicated region
      $region21: #{seq2seq_forward.11} parent=11 // pred_check
        %p261 = pneg %p104
      $region22: #{seq2seq_forward.11} parent=11 // pred_check_branch
        %263 = sbr.rel (%p261) target = $region24
      $region23: #{seq2seq_forward.11} parent=11 // pred_region
        _
      $region24: #{seq2seq_forward.11} parent=11 // pred_fallthru
        _
      // Predicated region
      $region25: #{seq2seq_forward.11} parent=11 // pred_check
        %p264 = pneg %p125
      $region26: #{seq2seq_forward.11} parent=11 // pred_check_branch
        %266 = sbr.rel (%p264) target = $region28
      $region27: #{seq2seq_forward.11} parent=11 // pred_region
        _
      $region28: #{seq2seq_forward.11} parent=11 // pred_fallthru
        _
      // Predicated region
      $region29: #{seq2seq_forward.11} parent=11 // pred_check
        %p267 = pneg %p146
      $region30: #{seq2seq_forward.11} parent=11 // pred_check_branch
        %269 = sbr.rel (%p267) target = $region32
      $region31: #{seq2seq_forward.11} parent=11 // pred_region
        _
      $region32: #{seq2seq_forward.11} parent=11 // pred_fallthru
        _
      // Predicated region
      $region33: #{seq2seq_forward.11} parent=11 // pred_check
        %p270 = pneg %p167
      $region34: #{seq2seq_forward.11} parent=11 // pred_check_branch
        %272 = sbr.rel (%p270) target = $region36
      $region35: #{seq2seq_forward.11} parent=11 // pred_region
        _
      $region36: #{seq2seq_forward.11} parent=11 // pred_fallthru
        _
      // Predicated region
      $region37: #{seq2seq_forward.11} parent=11 // pred_check
        %p273 = pneg %p188
      $region38: #{seq2seq_forward.11} parent=11 // pred_check_branch
        %275 = sbr.rel (%p273) target = $region40
      $region39: #{seq2seq_forward.11} parent=11 // pred_region
        _
      $region40: #{seq2seq_forward.11} parent=11 // pred_fallthru
        _
    $region12: #{seq2seq_forward.11} parent=5 // pred_fallthru
      _
    %p276 = scmp.lt.s32.totalorder %s15, 2
    // Predicated region
    $region41: #{seq2seq_forward.11} parent=5 // pred_check
      %p277 = pneg %p276
    $region42: #{seq2seq_forward.11} parent=5 // pred_check_branch
      %279 = sbr.rel (%p277) target = $region44
    $region43: #{seq2seq_forward.11} parent=5 // pred_region
      // Predicated region
      $region45: #{seq2seq_forward.11} parent=43 // pred_check
        %p280 = pneg %p35
      $region46: #{seq2seq_forward.11} parent=43 // pred_check_branch
        %282 = sbr.rel (%p280) target = $region48
      $region47: #{seq2seq_forward.11} parent=43 // pred_region
        %p283 = scmp.lt.s32.totalorder %s15, 1
        %s284 = scalar_select %p283, %s15, 1
        %s285 = smul.addr %s284, 4
        %s286 = scalar_lea.vmem %s0, %s285
      $region48: #{seq2seq_forward.11} parent=43 // pred_fallthru
        _
      // Predicated region
      $region49: #{seq2seq_forward.11} parent=43 // pred_check
        %p287 = pneg %p208
      $region50: #{seq2seq_forward.11} parent=43 // pred_check_branch
        %289 = sbr.rel (%p287) target = $region52
      $region51: #{seq2seq_forward.11} parent=43 // pred_region
        %p290 = scmp.lt.s32.totalorder %s15, 1
        %s291 = scalar_select %p290, %s15, 1
        %s292 = scalar_lea.vmem %s8, %s291
      $region52: #{seq2seq_forward.11} parent=43 // pred_fallthru
        _
    $region44: #{seq2seq_forward.11} parent=5 // pred_fallthru
      _
    %p293 = scmp.le.s32.totalorder 1, %s15
    %p294 = scmp.lt.s32.totalorder %s15, 3
    %p295 = pnand %p293, %p294
    %p296 = pneg %p295
    // Predicated region
    $region53: #{seq2seq_forward.11} parent=5 // pred_check
      _
    $region54: #{seq2seq_forward.11} parent=5 // pred_check_branch
      %298 = sbr.rel (%p295) target = $region56
    $region55: #{seq2seq_forward.11} parent=5 // pred_region
      %s299 = ssub.s32 %s15, 1
      %p300 = scmp.lt.s32.totalorder %s20, 1
      %s301 = scalar_select %p300, %s20, 1
      %s302 = smul.addr %s301, 4
      %s303 = scalar_lea.vmem %s0, %s302
      %p304 = pneg %p41
      %p305 = pneg %p38
      %p306 = pneg %p62
      %p307 = pneg %p59
      %p308 = pneg %p83
      %p309 = pneg %p80
      %p310 = pneg %p104
      %p311 = pneg %p101
      %p312 = pneg %p125
      %p313 = pneg %p122
      %p314 = pneg %p146
      %p315 = pneg %p143
      %p316 = pneg %p167
      %p317 = pneg %p164
      %p318 = pneg %p188
      %p319 = pneg %p185
      %p320 = scmp.lt.s32.totalorder %s20, 1
      %s321 = scalar_select %p320, %s20, 1
      %s322 = scalar_lea.vmem %s8, %s321
      %p323 = pneg %p214
      %p324 = pneg %p211
      %p325 = pneg %p240
      %p326 = pneg %p237
      %p327 = scmp.lt.s32.totalorder %s20, 1
      %s328 = scalar_select %p327, %s20, 1
      %s329 = smul.addr %s328, 4
      %s330 = scalar_lea.vmem %s9, %s329
      %p331 = scmp.lt.s32.totalorder %s20, 1
      %s332 = scalar_select %p331, %s20, 1
      %s333 = smul.addr %s332, 4
      %s334 = scalar_lea.vmem %s0, %s333
      %p335 = scmp.lt.s32.totalorder %s20, 1
      %s336 = scalar_select %p335, %s20, 1
      %s337 = scalar_lea.vmem %s8, %s336
      %p338 = scmp.lt.s32.totalorder %s20, 1
      %s339 = scalar_select %p338, %s20, 1
      %s340 = smul.addr %s339, 4
      %s341 = scalar_lea.vmem %s9, %s340
      %v343 = vld [vmem:[%s334] sm:$0xf]
      %v344 = vld [vmem:[%s1] sm:$0xf]
      %v345 = vld [vmem:[%s1 + $0x4] sm:$0xf]
      %v346 = vld [vmem:[%s1 + $0x8] sm:$0xf]
      %v347 = vld [vmem:[%s1 + $0xc] sm:$0xf]
      %v348 = vld [vmem:[%s2] sm:$0x1]
      %v350 = vlaneseq
      %v351 = vshrl.u32 %v350, 7
      %v352 = vsub.s32 0, %v351
      %v353 = vrot.slane %v348, %v352
      %v359 = vunpack.c.l.b16 %v344
      %v360 = vunpack.c.l.b16 %v345
      %v361 = vunpack.c.l.b16 %v346
      %v362 = vunpack.c.l.b16 %v347
      %v363 = vpack.c.b16 %v360, %v359
      %v364 = vpack.c.b16 %v362, %v361
      %vm367 = vcmask 261120
      %v369 = vsel %vm367, %v343, 0
      %371 = vmatprep.subr.bf16.mxu0 0
      %372 = vmatpush1.bf16.msra.mxu0 %v363
      %373 = vmatprep.subr.bf16.mxu0 0
      %374 = vmatpush1.bf16.msra.mxu0 %v364
      %375 = vmatprep.subr.bf16.mxu0 0
      %376 = vmatpush1.bf16.msra.mxu0 0
      %377 = vmatprep.subr.bf16.mxu0 0
      %378 = vmatpush1.bf16.msra.mxu0 0
      %379 = vmatprep.subr.bf16.mxu0 0
      %380 = vmatpush1.bf16.msra.mxu0 0
      %381 = vmatprep.subr.bf16.mxu0 0
      %382 = vmatpush1.bf16.msra.mxu0 0
      %383 = vmatprep.subr.bf16.mxu0 0
      %384 = vmatpush1.bf16.msra.mxu0 0
      %385 = vmatprep.subr.bf16.mxu0 0
      %386 = vmatpush1.bf16.msra.mxu0 0
      %387 = vmatprep.subr.bf16.mxu0 0
      %388 = vmatpush1.bf16.msra.mxu0 0
      %389 = vmatprep.subr.bf16.mxu0 0
      %390 = vmatpush1.bf16.msra.mxu0 0
      %391 = vmatprep.subr.bf16.mxu0 0
      %392 = vmatpush1.bf16.msra.mxu0 0
      %393 = vmatprep.subr.bf16.mxu0 0
      %394 = vmatpush1.bf16.msra.mxu0 0
      %395 = vmatprep.subr.bf16.mxu0 0
      %396 = vmatpush1.bf16.msra.mxu0 0
      %397 = vmatprep.subr.bf16.mxu0 0
      %398 = vmatpush1.bf16.msra.mxu0 0
      %399 = vmatprep.subr.bf16.mxu0 0
      %400 = vmatpush1.bf16.msra.mxu0 0
      %401 = vmatprep.subr.bf16.mxu0 0
      %402 = vmatpush1.bf16.msra.mxu0 0
      %403 = vmatprep.mubr.bf16.mxu0 0
      %404 = vmatmul.mubr.bf16.gmra.mrb[0].mxu0 %v369
      %v405 = vpop.f32.mrb[0].mxu0
      %v406 = vadd.f32 %v353, %v405
      %v407 = vpop.f32.mrb[0].mxu0
      %v408 = vpop.f32.mrb[0].mxu0
      %v409 = vpop.f32.mrb[0].mxu0
      %410 = vdwg.mxu0
      %v411 = vmul.f32 %v406, 0.35355338
      %v412 = vpack.c.bf16 %v411, %v411
      %v413 = vpack.c.bf16 %v406, %v406
      %v414 = vld [vmem:[%s7] sm:$0xff]
      %v415 = vld [vmem:[%s337] sm:$0x1]
      %417 = vrot.lane.b32.xlu0 %v413, 96
      %v418 = vpop.permute.xlu0 %417
      %vm419 = vcmask 64512
      %v421 = vsel %vm419, %v412, 0
      %v424 = vsel %vm419, %v418, 0
      %426 = vmatprep.subr.bf16.mxu0 0
      %427 = vmatpush1.bf16.xpose.msra.mxu0 %v424
      %428 = vmatprep.subr.bf16.mxu0 0
      %429 = vmatpush1.bf16.xpose.msra.mxu0 0
      %430 = vmatprep.subr.bf16.mxu0 0
      %431 = vmatpush1.bf16.xpose.msra.mxu0 0
      %432 = vmatprep.subr.bf16.mxu0 0
      %433 = vmatpush1.bf16.xpose.msra.mxu0 0
      %434 = vmatprep.subr.bf16.mxu0 0
      %435 = vmatpush1.bf16.xpose.msra.mxu0 0
      %436 = vmatprep.subr.bf16.mxu0 0
      %437 = vmatpush1.bf16.xpose.msra.mxu0 0
      %438 = vmatprep.subr.bf16.mxu0 0
      %439 = vmatpush1.bf16.xpose.msra.mxu0 0
      %440 = vmatprep.subr.bf16.mxu0 0
      %441 = vmatpush1.bf16.xpose.msra.mxu0 0
      %442 = vmatprep.subr.bf16.mxu0 0
      %443 = vmatpush1.bf16.xpose.msra.mxu0 0
      %444 = vmatprep.subr.bf16.mxu0 0
      %445 = vmatpush1.bf16.xpose.msra.mxu0 0
      %446 = vmatprep.subr.bf16.mxu0 0
      %447 = vmatpush1.bf16.xpose.msra.mxu0 0
      %448 = vmatprep.subr.bf16.mxu0 0
      %449 = vmatpush1.bf16.xpose.msra.mxu0 0
      %450 = vmatprep.subr.bf16.mxu0 0
      %451 = vmatpush1.bf16.xpose.msra.mxu0 0
      %452 = vmatprep.subr.bf16.mxu0 0
      %453 = vmatpush1.bf16.xpose.msra.mxu0 0
      %454 = vmatprep.subr.bf16.mxu0 0
      %455 = vmatpush1.bf16.xpose.msra.mxu0 0
      %456 = vmatprep.subr.bf16.mxu0 0
      %457 = vmatpush1.bf16.xpose.msra.mxu0 0
      %458 = vmatprep.mubr.bf16.mxu0 0
      %459 = vmatmul.mubr.bf16.gmra.mrb[0].mxu0 %v421
      %v460 = vpop.f32.mrb[0].mxu0
      %v461 = vadd.f32 %v414, %v460
      %v462 = vpop.f32.mrb[0].mxu0
      %v463 = vpop.f32.mrb[0].mxu0
      %v464 = vpop.f32.mrb[0].mxu0
      %465 = vdwg.mxu0
      %vm466 = vcmp.gt.f32.partialorder %v415, 0.5
      %v467 = vsel %vm466, 1, 0
      %v468 = vlaneseq
      %v469 = vshrl.u32 %v468, 7
      %v470 = vsub.s32 0, %v469
      %v471 = vrot.slane %v467, %v470
      %vm472 = vcmp.eq.s32.totalorder %v471, 1
      %v473 = vsel %vm472, -1e+30, %v461
      %v474 = vsel %vm419, %v473, -inf
      %475 = vmax.xlane.f32.xlu0 %v474
      %v476 = vpop.xlane.xlu0 %475
      %v477 = vsub.f32 %v473, %v476
      %v478 = vmul.f32 %v477, 1.442695
      %v479 = vpow.pop %v478
      %v480 = vsel %vm419, %v479, 0.0
      %481 = vadd.xlane.f32.xlu0 %v480
      %v482 = vpop.xlane.xlu0 %481
      %v483 = vrcp.pop %v482
      %v484 = vmul.f32 %v479, %v483
      %v485 = vpack.c.bf16 %v484, %v484
      %486 = vrot.lane.b32.xlu0 %v413, 64
      %v487 = vpop.permute.xlu0 %486
      %v489 = vsel %vm419, %v485, 0
      %vm491 = vcmask 1043456
      %v493 = vsel %vm491, %v487, 0
      %495 = vmatprep.subr.bf16.mxu0 0
      %496 = vmatpush1.bf16.msra.mxu0 %v493
      %497 = vmatprep.subr.bf16.mxu0 0
      %498 = vmatpush1.bf16.msra.mxu0 0
      %499 = vmatprep.subr.bf16.mxu0 0
      %500 = vmatpush1.bf16.msra.mxu0 0
      %501 = vmatprep.subr.bf16.mxu0 0
      %502 = vmatpush1.bf16.msra.mxu0 0
      %503 = vmatprep.subr.bf16.mxu0 0
      %504 = vmatpush1.bf16.msra.mxu0 0
      %505 = vmatprep.subr.bf16.mxu0 0
      %506 = vmatpush1.bf16.msra.mxu0 0
      %507 = vmatprep.subr.bf16.mxu0 0
      %508 = vmatpush1.bf16.msra.mxu0 0
      %509 = vmatprep.subr.bf16.mxu0 0
      %510 = vmatpush1.bf16.msra.mxu0 0
      %511 = vmatprep.subr.bf16.mxu0 0
      %512 = vmatpush1.bf16.msra.mxu0 0
      %513 = vmatprep.subr.bf16.mxu0 0
      %514 = vmatpush1.bf16.msra.mxu0 0
      %515 = vmatprep.subr.bf16.mxu0 0
      %516 = vmatpush1.bf16.msra.mxu0 0
      %517 = vmatprep.subr.bf16.mxu0 0
      %518 = vmatpush1.bf16.msra.mxu0 0
      %519 = vmatprep.subr.bf16.mxu0 0
      %520 = vmatpush1.bf16.msra.mxu0 0
      %521 = vmatprep.subr.bf16.mxu0 0
      %522 = vmatpush1.bf16.msra.mxu0 0
      %523 = vmatprep.subr.bf16.mxu0 0
      %524 = vmatpush1.bf16.msra.mxu0 0
      %525 = vmatprep.subr.bf16.mxu0 0
      %526 = vmatpush1.bf16.msra.mxu0 0
      %527 = vmatprep.mubr.bf16.mxu0 0
      %528 = vmatmul.mubr.bf16.gmra.mrb[0].mxu0 %v489
      %v529 = vpop.f32.mrb[0].mxu0
      %v530 = vadd.f32 0.0, %v529
      %v531 = vpop.f32.mrb[0].mxu0
      %v532 = vpop.f32.mrb[0].mxu0
      %v533 = vpop.f32.mrb[0].mxu0
      %534 = vdwg.mxu0
      %535 = vst.msk [vmem:[#allocation2] sm:$0xff] %vm419, %v530
      %537 = vrot.lane.b32.xlu0 %v412, 120
      %v538 = vpop.permute.xlu0 %537
      %539 = vrot.lane.b32.xlu0 %v413, 88
      %v540 = vpop.permute.xlu0 %539
      %v542 = vsel %vm419, %v538, 0
      %v545 = vsel %vm419, %v540, 0
      %547 = vmatprep.subr.bf16.mxu0 0
      %548 = vmatpush1.bf16.xpose.msra.mxu0 %v545
      %549 = vmatprep.subr.bf16.mxu0 0
      %550 = vmatpush1.bf16.xpose.msra.mxu0 0
      %551 = vmatprep.subr.bf16.mxu0 0
      %552 = vmatpush1.bf16.xpose.msra.mxu0 0
      %553 = vmatprep.subr.bf16.mxu0 0
      %554 = vmatpush1.bf16.xpose.msra.mxu0 0
      %555 = vmatprep.subr.bf16.mxu0 0
      %556 = vmatpush1.bf16.xpose.msra.mxu0 0
      %557 = vmatprep.subr.bf16.mxu0 0
      %558 = vmatpush1.bf16.xpose.msra.mxu0 0
      %559 = vmatprep.subr.bf16.mxu0 0
      %560 = vmatpush1.bf16.xpose.msra.mxu0 0
      %561 = vmatprep.subr.bf16.mxu0 0
      %562 = vmatpush1.bf16.xpose.msra.mxu0 0
      %563 = vmatprep.subr.bf16.mxu0 0
      %564 = vmatpush1.bf16.xpose.msra.mxu0 0
      %565 = vmatprep.subr.bf16.mxu0 0
      %566 = vmatpush1.bf16.xpose.msra.mxu0 0
      %567 = vmatprep.subr.bf16.mxu0 0
      %568 = vmatpush1.bf16.xpose.msra.mxu0 0
      %569 = vmatprep.subr.bf16.mxu0 0
      %570 = vmatpush1.bf16.xpose.msra.mxu0 0
      %571 = vmatprep.subr.bf16.mxu0 0
      %572 = vmatpush1.bf16.xpose.msra.mxu0 0
      %573 = vmatprep.subr.bf16.mxu0 0
      %574 = vmatpush1.bf16.xpose.msra.mxu0 0
      %575 = vmatprep.subr.bf16.mxu0 0
      %576 = vmatpush1.bf16.xpose.msra.mxu0 0
      %577 = vmatprep.subr.bf16.mxu0 0
      %578 = vmatpush1.bf16.xpose.msra.mxu0 0
      %579 = vmatprep.mubr.bf16.mxu0 0
      %580 = vmatmul.mubr.bf16.gmra.mrb[0].mxu0 %v542
      %v581 = vpop.f32.mrb[0].mxu0
      %v582 = vadd.f32 %v414, %v581
      %v583 = vpop.f32.mrb[0].mxu0
      %v584 = vpop.f32.mrb[0].mxu0
      %v585 = vpop.f32.mrb[0].mxu0
      %586 = vdwg.mxu0
      %v587 = vsel %vm472, -1e+30, %v582
      %v588 = vsel %vm419, %v587, -inf
      %589 = vmax.xlane.f32.xlu0 %v588
      %v590 = vpop.xlane.xlu0 %589
      %v591 = vsub.f32 %v587, %v590
      %v592 = vmul.f32 %v591, 1.442695
      %v593 = vpow.pop %v592
      %v594 = vsel %vm419, %v593, 0.0
      %595 = vadd.xlane.f32.xlu0 %v594
      %v596 = vpop.xlane.xlu0 %595
      %v597 = vrcp.pop %v596
      %v598 = vmul.f32 %v593, %v597
      %v599 = vpack.c.bf16 %v598, %v598
      %600 = vrot.lane.b32.xlu0 %v413, 56
      %v601 = vpop.permute.xlu0 %600
      %v603 = vsel %vm419, %v599, 0
      %v606 = vsel %vm491, %v601, 0
      %608 = vmatprep.subr.bf16.mxu0 0
      %609 = vmatpush1.bf16.msra.mxu0 %v606
      %610 = vmatprep.subr.bf16.mxu0 0
      %611 = vmatpush1.bf16.msra.mxu0 0
      %612 = vmatprep.subr.bf16.mxu0 0
      %613 = vmatpush1.bf16.msra.mxu0 0
      %614 = vmatprep.subr.bf16.mxu0 0
      %615 = vmatpush1.bf16.msra.mxu0 0
      %616 = vmatprep.subr.bf16.mxu0 0
      %617 = vmatpush1.bf16.msra.mxu0 0
      %618 = vmatprep.subr.bf16.mxu0 0
      %619 = vmatpush1.bf16.msra.mxu0 0
      %620 = vmatprep.subr.bf16.mxu0 0
      %621 = vmatpush1.bf16.msra.mxu0 0
      %622 = vmatprep.subr.bf16.mxu0 0
      %623 = vmatpush1.bf16.msra.mxu0 0
      %624 = vmatprep.subr.bf16.mxu0 0
      %625 = vmatpush1.bf16.msra.mxu0 0
      %626 = vmatprep.subr.bf16.mxu0 0
      %627 = vmatpush1.bf16.msra.mxu0 0
      %628 = vmatprep.subr.bf16.mxu0 0
      %629 = vmatpush1.bf16.msra.mxu0 0
      %630 = vmatprep.subr.bf16.mxu0 0
      %631 = vmatpush1.bf16.msra.mxu0 0
      %632 = vmatprep.subr.bf16.mxu0 0
      %633 = vmatpush1.bf16.msra.mxu0 0
      %634 = vmatprep.subr.bf16.mxu0 0
      %635 = vmatpush1.bf16.msra.mxu0 0
      %636 = vmatprep.subr.bf16.mxu0 0
      %637 = vmatpush1.bf16.msra.mxu0 0
      %638 = vmatprep.subr.bf16.mxu0 0
      %639 = vmatpush1.bf16.msra.mxu0 0
      %640 = vmatprep.mubr.bf16.mxu0 0
      %641 = vmatmul.mubr.bf16.gmra.mrb[0].mxu0 %v603
      %v642 = vpop.f32.mrb[0].mxu0
      %v643 = vadd.f32 0.0, %v642
      %v644 = vpop.f32.mrb[0].mxu0
      %v645 = vpop.f32.mrb[0].mxu0
      %v646 = vpop.f32.mrb[0].mxu0
      %647 = vdwg.mxu0
      %649 = vrot.lane.b32.xlu0 %v643, 8
      %v650 = vpop.permute.xlu0 %649
      %vm652 = vcmask 130112
      %653 = vst.msk [vmem:[#allocation2] sm:$0xff] %vm652, %v650
      %654 = vrot.lane.b32.xlu0 %v412, 112
      %v655 = vpop.permute.xlu0 %654
      %656 = vrot.lane.b32.xlu0 %v413, 80
      %v657 = vpop.permute.xlu0 %656
      %v659 = vsel %vm419, %v655, 0
      %v662 = vsel %vm419, %v657, 0
      %664 = vmatprep.subr.bf16.mxu0 0
      %665 = vmatpush1.bf16.xpose.msra.mxu0 %v662
      %666 = vmatprep.subr.bf16.mxu0 0
      %667 = vmatpush1.bf16.xpose.msra.mxu0 0
      %668 = vmatprep.subr.bf16.mxu0 0
      %669 = vmatpush1.bf16.xpose.msra.mxu0 0
      %670 = vmatprep.subr.bf16.mxu0 0
      %671 = vmatpush1.bf16.xpose.msra.mxu0 0
      %672 = vmatprep.subr.bf16.mxu0 0
      %673 = vmatpush1.bf16.xpose.msra.mxu0 0
      %674 = vmatprep.subr.bf16.mxu0 0
      %675 = vmatpush1.bf16.xpose.msra.mxu0 0
      %676 = vmatprep.subr.bf16.mxu0 0
      %677 = vmatpush1.bf16.xpose.msra.mxu0 0
      %678 = vmatprep.subr.bf16.mxu0 0
      %679 = vmatpush1.bf16.xpose.msra.mxu0 0
      %680 = vmatprep.subr.bf16.mxu0 0
      %681 = vmatpush1.bf16.xpose.msra.mxu0 0
      %682 = vmatprep.subr.bf16.mxu0 0
      %683 = vmatpush1.bf16.xpose.msra.mxu0 0
      %684 = vmatprep.subr.bf16.mxu0 0
      %685 = vmatpush1.bf16.xpose.msra.mxu0 0
      %686 = vmatprep.subr.bf16.mxu0 0
      %687 = vmatpush1.bf16.xpose.msra.mxu0 0
      %688 = vmatprep.subr.bf16.mxu0 0
      %689 = vmatpush1.bf16.xpose.msra.mxu0 0
      %690 = vmatprep.subr.bf16.mxu0 0
      %691 = vmatpush1.bf16.xpose.msra.mxu0 0
      %692 = vmatprep.subr.bf16.mxu0 0
      %693 = vmatpush1.bf16.xpose.msra.mxu0 0
      %694 = vmatprep.subr.bf16.mxu0 0
      %695 = vmatpush1.bf16.xpose.msra.mxu0 0
      %696 = vmatprep.mubr.bf16.mxu0 0
      %697 = vmatmul.mubr.bf16.gmra.mrb[0].mxu0 %v659
      %v698 = vpop.f32.mrb[0].mxu0
      %v699 = vadd.f32 %v414, %v698
      %v700 = vpop.f32.mrb[0].mxu0
      %v701 = vpop.f32.mrb[0].mxu0
      %v702 = vpop.f32.mrb[0].mxu0
      %703 = vdwg.mxu0
      %v704 = vsel %vm472, -1e+30, %v699
      %v705 = vsel %vm419, %v704, -inf
      %706 = vmax.xlane.f32.xlu0 %v705
      %v707 = vpop.xlane.xlu0 %706
      %v708 = vsub.f32 %v704, %v707
      %v709 = vmul.f32 %v708, 1.442695
      %v710 = vpow.pop %v709
      %v711 = vsel %vm419, %v710, 0.0
      %712 = vadd.xlane.f32.xlu0 %v711
      %v713 = vpop.xlane.xlu0 %712
      %v714 = vrcp.pop %v713
      %v715 = vmul.f32 %v710, %v714
      %v716 = vpack.c.bf16 %v715, %v715
      %717 = vrot.lane.b32.xlu0 %v413, 48
      %v718 = vpop.permute.xlu0 %717
      %v720 = vsel %vm419, %v716, 0
      %v723 = vsel %vm491, %v718, 0
      %725 = vmatprep.subr.bf16.mxu0 0
      %726 = vmatpush1.bf16.msra.mxu0 %v723
      %727 = vmatprep.subr.bf16.mxu0 0
      %728 = vmatpush1.bf16.msra.mxu0 0
      %729 = vmatprep.subr.bf16.mxu0 0
      %730 = vmatpush1.bf16.msra.mxu0 0
      %731 = vmatprep.subr.bf16.mxu0 0
      %732 = vmatpush1.bf16.msra.mxu0 0
      %733 = vmatprep.subr.bf16.mxu0 0
      %734 = vmatpush1.bf16.msra.mxu0 0
      %735 = vmatprep.subr.bf16.mxu0 0
      %736 = vmatpush1.bf16.msra.mxu0 0
      %737 = vmatprep.subr.bf16.mxu0 0
      %738 = vmatpush1.bf16.msra.mxu0 0
      %739 = vmatprep.subr.bf16.mxu0 0
      %740 = vmatpush1.bf16.msra.mxu0 0
      %741 = vmatprep.subr.bf16.mxu0 0
      %742 = vmatpush1.bf16.msra.mxu0 0
      %743 = vmatprep.subr.bf16.mxu0 0
      %744 = vmatpush1.bf16.msra.mxu0 0
      %745 = vmatprep.subr.bf16.mxu0 0
      %746 = vmatpush1.bf16.msra.mxu0 0
      %747 = vmatprep.subr.bf16.mxu0 0
      %748 = vmatpush1.bf16.msra.mxu0 0
      %749 = vmatprep.subr.bf16.mxu0 0
      %750 = vmatpush1.bf16.msra.mxu0 0
      %751 = vmatprep.subr.bf16.mxu0 0
      %752 = vmatpush1.bf16.msra.mxu0 0
      %753 = vmatprep.subr.bf16.mxu0 0
      %754 = vmatpush1.bf16.msra.mxu0 0
      %755 = vmatprep.subr.bf16.mxu0 0
      %756 = vmatpush1.bf16.msra.mxu0 0
      %757 = vmatprep.mubr.bf16.mxu0 0
      %758 = vmatmul.mubr.bf16.gmra.mrb[0].mxu0 %v720
      %v759 = vpop.f32.mrb[0].mxu0
      %v760 = vadd.f32 0.0, %v759
      %v761 = vpop.f32.mrb[0].mxu0
      %v762 = vpop.f32.mrb[0].mxu0
      %v763 = vpop.f32.mrb[0].mxu0
      %764 = vdwg.mxu0
      %766 = vrot.lane.b32.xlu0 %v760, 16
      %v767 = vpop.permute.xlu0 %766
      %vm769 = vcmask 195712
      %770 = vst.msk [vmem:[#allocation2] sm:$0xff] %vm769, %v767
      %771 = vrot.lane.b32.xlu0 %v412, 104
      %v772 = vpop.permute.xlu0 %771
      %773 = vrot.lane.b32.xlu0 %v413, 72
      %v774 = vpop.permute.xlu0 %773
      %v776 = vsel %vm419, %v772, 0
      %v779 = vsel %vm419, %v774, 0
      %781 = vmatprep.subr.bf16.mxu0 0
      %782 = vmatpush1.bf16.xpose.msra.mxu0 %v779
      %783 = vmatprep.subr.bf16.mxu0 0
      %784 = vmatpush1.bf16.xpose.msra.mxu0 0
      %785 = vmatprep.subr.bf16.mxu0 0
      %786 = vmatpush1.bf16.xpose.msra.mxu0 0
      %787 = vmatprep.subr.bf16.mxu0 0
      %788 = vmatpush1.bf16.xpose.msra.mxu0 0
      %789 = vmatprep.subr.bf16.mxu0 0
      %790 = vmatpush1.bf16.xpose.msra.mxu0 0
      %791 = vmatprep.subr.bf16.mxu0 0
      %792 = vmatpush1.bf16.xpose.msra.mxu0 0
      %793 = vmatprep.subr.bf16.mxu0 0
      %794 = vmatpush1.bf16.xpose.msra.mxu0 0
      %795 = vmatprep.subr.bf16.mxu0 0
      %796 = vmatpush1.bf16.xpose.msra.mxu0 0
      %797 = vmatprep.subr.bf16.mxu0 0
      %798 = vmatpush1.bf16.xpose.msra.mxu0 0
      %799 = vmatprep.subr.bf16.mxu0 0
      %800 = vmatpush1.bf16.xpose.msra.mxu0 0
      %801 = vmatprep.subr.bf16.mxu0 0
      %802 = vmatpush1.bf16.xpose.msra.mxu0 0
      %803 = vmatprep.subr.bf16.mxu0 0
      %804 = vmatpush1.bf16.xpose.msra.mxu0 0
      %805 = vmatprep.subr.bf16.mxu0 0
      %806 = vmatpush1.bf16.xpose.msra.mxu0 0
      %807 = vmatprep.subr.bf16.mxu0 0
      %808 = vmatpush1.bf16.xpose.msra.mxu0 0
      %809 = vmatprep.subr.bf16.mxu0 0
      %810 = vmatpush1.bf16.xpose.msra.mxu0 0
      %811 = vmatprep.subr.bf16.mxu0 0
      %812 = vmatpush1.bf16.xpose.msra.mxu0 0
      %813 = vmatprep.mubr.bf16.mxu0 0
      %814 = vmatmul.mubr.bf16.gmra.mrb[0].mxu0 %v776
      %v815 = vpop.f32.mrb[0].mxu0
      %v816 = vadd.f32 %v414, %v815
      %v817 = vpop.f32.mrb[0].mxu0
      %v818 = vpop.f32.mrb[0].mxu0
      %v819 = vpop.f32.mrb[0].mxu0
      %820 = vdwg.mxu0
      %v821 = vsel %vm472, -1e+30, %v816
      %v822 = vsel %vm419, %v821, -inf
      %823 = vmax.xlane.f32.xlu0 %v822
      %v824 = vpop.xlane.xlu0 %823
      %v825 = vsub.f32 %v821, %v824
      %v826 = vmul.f32 %v825, 1.442695
      %v827 = vpow.pop %v826
      %v828 = vsel %vm419, %v827, 0.0
      %829 = vadd.xlane.f32.xlu0 %v828
      %v830 = vpop.xlane.xlu0 %829
      %v831 = vrcp.pop %v830
      %v832 = vmul.f32 %v827, %v831
      %v833 = vpack.c.bf16 %v832, %v832
      %834 = vrot.lane.b32.xlu0 %v413, 40
      %v835 = vpop.permute.xlu0 %834
      %v837 = vsel %vm419, %v833, 0
      %v840 = vsel %vm491, %v835, 0
      %842 = vmatprep.subr.bf16.mxu0 0
      %843 = vmatpush1.bf16.msra.mxu0 %v840
      %844 = vmatprep.subr.bf16.mxu0 0
      %845 = vmatpush1.bf16.msra.mxu0 0
      %846 = vmatprep.subr.bf16.mxu0 0
      %847 = vmatpush1.bf16.msra.mxu0 0
      %848 = vmatprep.subr.bf16.mxu0 0
      %849 = vmatpush1.bf16.msra.mxu0 0
      %850 = vmatprep.subr.bf16.mxu0 0
      %851 = vmatpush1.bf16.msra.mxu0 0
      %852 = vmatprep.subr.bf16.mxu0 0
      %853 = vmatpush1.bf16.msra.mxu0 0
      %854 = vmatprep.subr.bf16.mxu0 0
      %855 = vmatpush1.bf16.msra.mxu0 0
      %856 = vmatprep.subr.bf16.mxu0 0
      %857 = vmatpush1.bf16.msra.mxu0 0
      %858 = vmatprep.subr.bf16.mxu0 0
      %859 = vmatpush1.bf16.msra.mxu0 0
      %860 = vmatprep.subr.bf16.mxu0 0
      %861 = vmatpush1.bf16.msra.mxu0 0
      %862 = vmatprep.subr.bf16.mxu0 0
      %863 = vmatpush1.bf16.msra.mxu0 0
      %864 = vmatprep.subr.bf16.mxu0 0
      %865 = vmatpush1.bf16.msra.mxu0 0
      %866 = vmatprep.subr.bf16.mxu0 0
      %867 = vmatpush1.bf16.msra.mxu0 0
      %868 = vmatprep.subr.bf16.mxu0 0
      %869 = vmatpush1.bf16.msra.mxu0 0
      %870 = vmatprep.subr.bf16.mxu0 0
      %871 = vmatpush1.bf16.msra.mxu0 0
      %872 = vmatprep.subr.bf16.mxu0 0
      %873 = vmatpush1.bf16.msra.mxu0 0
      %874 = vmatprep.mubr.bf16.mxu0 0
      %875 = vmatmul.mubr.bf16.gmra.mrb[0].mxu0 %v837
      %v876 = vpop.f32.mrb[0].mxu0
      %v877 = vadd.f32 0.0, %v876
      %v878 = vpop.f32.mrb[0].mxu0
      %v879 = vpop.f32.mrb[0].mxu0
      %v880 = vpop.f32.mrb[0].mxu0
      %881 = vdwg.mxu0
      %883 = vrot.lane.b32.xlu0 %v877, 24
      %v884 = vpop.permute.xlu0 %883
      %vm886 = vcmask 261312
      %887 = vst.msk [vmem:[#allocation2] sm:$0xff] %vm886, %v884
      %v888 = vld [vmem:[#allocation2] sm:$0xff]
      %v889 = vpack.c.bf16 %v888, %v888
      %v890 = vld [vmem:[%s3] sm:$0xf]
      %v891 = vld [vmem:[%s3 + $0x4] sm:$0xf]
      %v892 = vld [vmem:[%s3 + $0x8] sm:$0xf]
      %v893 = vld [vmem:[%s3 + $0xc] sm:$0xf]
      %v894 = vld [vmem:[%s4] sm:$0x1]
      %v896 = vlaneseq
      %v897 = vshrl.u32 %v896, 7
      %v898 = vsub.s32 0, %v897
      %v899 = vrot.slane %v894, %v898
      %v905 = vunpack.c.l.b16 %v890
      %v906 = vunpack.c.l.b16 %v891
      %v907 = vunpack.c.l.b16 %v892
      %v908 = vunpack.c.l.b16 %v893
      %v909 = vpack.c.b16 %v906, %v905
      %v910 = vpack.c.b16 %v908, %v907
      %v914 = vsel %vm367, %v889, 0
      %916 = vmatprep.subr.bf16.mxu0 0
      %917 = vmatpush1.bf16.msra.mxu0 %v909
      %918 = vmatprep.subr.bf16.mxu0 0
      %919 = vmatpush1.bf16.msra.mxu0 %v910
      %920 = vmatprep.subr.bf16.mxu0 0
      %921 = vmatpush1.bf16.msra.mxu0 0
      %922 = vmatprep.subr.bf16.mxu0 0
      %923 = vmatpush1.bf16.msra.mxu0 0
      %924 = vmatprep.subr.bf16.mxu0 0
      %925 = vmatpush1.bf16.msra.mxu0 0
      %926 = vmatprep.subr.bf16.mxu0 0
      %927 = vmatpush1.bf16.msra.mxu0 0
      %928 = vmatprep.subr.bf16.mxu0 0
      %929 = vmatpush1.bf16.msra.mxu0 0
      %930 = vmatprep.subr.bf16.mxu0 0
      %931 = vmatpush1.bf16.msra.mxu0 0
      %932 = vmatprep.subr.bf16.mxu0 0
      %933 = vmatpush1.bf16.msra.mxu0 0
      %934 = vmatprep.subr.bf16.mxu0 0
      %935 = vmatpush1.bf16.msra.mxu0 0
      %936 = vmatprep.subr.bf16.mxu0 0
      %937 = vmatpush1.bf16.msra.mxu0 0
      %938 = vmatprep.subr.bf16.mxu0 0
      %939 = vmatpush1.bf16.msra.mxu0 0
      %940 = vmatprep.subr.bf16.mxu0 0
      %941 = vmatpush1.bf16.msra.mxu0 0
      %942 = vmatprep.subr.bf16.mxu0 0
      %943 = vmatpush1.bf16.msra.mxu0 0
      %944 = vmatprep.subr.bf16.mxu0 0
      %945 = vmatpush1.bf16.msra.mxu0 0
      %946 = vmatprep.subr.bf16.mxu0 0
      %947 = vmatpush1.bf16.msra.mxu0 0
      %948 = vmatprep.mubr.bf16.mxu0 0
      %949 = vmatmul.mubr.bf16.gmra.mrb[0].mxu0 %v914
      %v950 = vpop.f32.mrb[0].mxu0
      %v951 = vadd.f32 %v899, %v950
      %v952 = vpop.f32.mrb[0].mxu0
      %v953 = vpop.f32.mrb[0].mxu0
      %v954 = vpop.f32.mrb[0].mxu0
      %955 = vdwg.mxu0
      %v956 = vunpack.c.l.bf16 %v343
      %v957 = vadd.f32 %v956, %v951
      %v958 = vld [vmem:[%s5] sm:$0x1]
      %v959 = vld [vmem:[%s6] sm:$0x1]
      %v960 = vsel %vm367, %v957, 0.0
      %961 = vadd.xlane.f32.xlu0 %v960
      %v962 = vpop.xlane.xlu0 %961
      %v963 = vrcp.pop 32.0
      %v964 = vmul.f32 %v962, %v963
      %v965 = vsub.f32 %v957, %v964
      %v966 = vmul.f32 %v965, %v965
      %v967 = vsel %vm367, %v966, 0.0
      %968 = vadd.xlane.f32.xlu0 %v967
      %v969 = vpop.xlane.xlu0 %968
      %v970 = vmul.f32 %v969, %v963
      %v971 = vadd.f32 %v970, 1e-05
      %v972 = vrsqrt.pop %v971
      %v973 = vmul.f32 %v965, %v972
      %v975 = vlaneseq
      %v976 = vshrl.u32 %v975, 7
      %v977 = vsub.s32 0, %v976
      %v978 = vrot.slane %v958, %v977
      %v980 = vmul.f32 %v973, %v978
      %v982 = vlaneseq
      %v983 = vshrl.u32 %v982, 7
      %v984 = vsub.s32 0, %v983
      %v985 = vrot.slane %v959, %v984
      %v987 = vadd.f32 %v980, %v985
      %v988 = vpack.c.bf16 %v987, %v987
      %vm989 = vcmask 257024
      %990 = vst.msk [vmem:[%s341] sm:$0xf] %vm989, %v988
      %p991 = scmp.lt.s32.totalorder %s20, 1
      %s992 = scalar_select %p991, %s20, 1
      %s993 = smul.addr %s992, 4
      %s994 = scalar_lea.vmem %s9, %s993
      // Predicated region
      $region57: #{seq2seq_forward.11} parent=55 // pred_check
        %p995 = pneg %p237
      $region58: #{seq2seq_forward.11} parent=55 // pred_check_branch
        %997 = sbr.rel (%p995) target = $region60
      $region59: #{seq2seq_forward.11} parent=55 // pred_region
        _
      $region60: #{seq2seq_forward.11} parent=55 // pred_fallthru
        _
    $region56: #{seq2seq_forward.11} parent=5 // pred_fallthru
      _
    %p998 = scmp.le.s32.totalorder 2, %s15
    // Predicated region
    $region61: #{seq2seq_forward.11} parent=5 // pred_check
      %p999 = pneg %p998
    $region62: #{seq2seq_forward.11} parent=5 // pred_check_branch
      %1001 = sbr.rel (%p999) target = $region64
    $region63: #{seq2seq_forward.11} parent=5 // pred_region
      %s1002 = ssub.s32 %s15, 2
      // Predicated region
      $region65: #{seq2seq_forward.11} parent=63 // pred_check
        %p1003 = pneg %p243
      $region66: #{seq2seq_forward.11} parent=63 // pred_check_branch
        %1005 = sbr.rel (%p1003) target = $region68
      $region67: #{seq2seq_forward.11} parent=63 // pred_region
        %p1006 = scmp.lt.s32.totalorder %s21, 1
        %s1007 = scalar_select %p1006, %s21, 1
        %s1008 = smul.addr %s1007, 4
        %s1009 = scalar_lea.vmem %s9, %s1008
      $region68: #{seq2seq_forward.11} parent=63 // pred_fallthru
        _
    $region64: #{seq2seq_forward.11} parent=5 // pred_fallthru
      _
  $region6: #{seq2seq_forward.11} parent=0 // loop_footer
    %s19 = sadd.s32 1, %s15
  $region7: #{seq2seq_forward.11} parent=0 // loop_footer_branch
    %14 = sbr.rel target = $region3
  $region8: #{seq2seq_forward.11} parent=0 // loop_exit
    _

// kernel: seq2seq_forward.21
$region0: #{seq2seq_forward.21}
  #allocation0 [shape = 'u32[]', space=smem, size = 0x4, offset = 0x4, fixed_abs, tag = 'smem constant byte address 0x4 - core index']
  #allocation1 [shape = 'u32[144,128]{1,0:T(1,128)}', space=vmem, size = 0x12000, scoped, tag = 'internal scratch']
  %s0 = inlined_call_operand.vmem [shape: bf16[16,32], index: 0, kind: input, shape index: {}]
  %s1 = inlined_call_operand.vmem [shape: bf16[32,128], index: 1, kind: input, shape index: {}]
  %s2 = inlined_call_operand.vmem [shape: f32[1,128], index: 2, kind: input, shape index: {}]
  %s3 = inlined_call_operand.vmem [shape: f32[16,128], index: 3, kind: output, shape index: {}]
  %s4 = sld [smem:[#allocation0]]
  $region22: #{seq2seq_forward.21} parent=0
    _
  %s6 = ssub.s32 1, %s4
  %s7 = scalar_select 0, %s6, %s4
  // Predicated region
  $region2: #{seq2seq_forward.21} parent=0 // pred_check
    _
  $region3: #{seq2seq_forward.21} parent=0 // pred_check_branch
    %9 = sbr.rel (0) target = $region5
  $region4: #{seq2seq_forward.21} parent=0 // pred_region
    _
  $region5: #{seq2seq_forward.21} parent=0 // pred_fallthru
    _
  // Predicated region
  $region6: #{seq2seq_forward.21} parent=0 // pred_check
    _
  $region7: #{seq2seq_forward.21} parent=0 // pred_check_branch
    %11 = sbr.rel (0) target = $region9
  $region8: #{seq2seq_forward.21} parent=0 // pred_region
    _
  $region9: #{seq2seq_forward.21} parent=0 // pred_fallthru
    _
  // Predicated region
  $region10: #{seq2seq_forward.21} parent=0 // pred_check
    _
  $region11: #{seq2seq_forward.21} parent=0 // pred_check_branch
    %13 = sbr.rel (0) target = $region13
  $region12: #{seq2seq_forward.21} parent=0 // pred_region
    _
  $region13: #{seq2seq_forward.21} parent=0 // pred_fallthru
    _
  %v15 = vld [vmem:[%s0] sm:$0xf]
  %v16 = vld [vmem:[%s0 + $0x4] sm:$0xf]
  %v17 = vld [vmem:[%s1] sm:$0xf]
  %v18 = vld [vmem:[%s1 + $0x4] sm:$0xf]
  %v19 = vld [vmem:[%s1 + $0x8] sm:$0xf]
  %v20 = vld [vmem:[%s1 + $0xc] sm:$0xf]
  %v21 = vld [vmem:[%s2] sm:$0x1]
  %v23 = vlaneseq
  %v24 = vshrl.u32 %v23, 7
  %v25 = vsub.s32 0, %v24
  %v26 = vrot.slane %v21, %v25
  %v30 = vunpack.c.l.b16 %v15
  %v31 = vunpack.c.l.b16 %v16
  %v32 = vpack.c.b16 %v31, %v30
  %v37 = vunpack.c.l.b16 %v17
  %v38 = vunpack.c.l.b16 %v18
  %v39 = vunpack.c.l.b16 %v19
  %v40 = vunpack.c.l.b16 %v20
  %v41 = vpack.c.b16 %v38, %v37
  %v42 = vpack.c.b16 %v40, %v39
  %vm45 = vcmask 261120
  %v47 = vsel %vm45, %v32, 0
  %49 = vmatprep.subr.bf16.mxu0 0
  %50 = vmatpush1.bf16.msra.mxu0 %v41
  %51 = vmatprep.subr.bf16.mxu0 0
  %52 = vmatpush1.bf16.msra.mxu0 %v42
  %53 = vmatprep.subr.bf16.mxu0 0
  %54 = vmatpush1.bf16.msra.mxu0 0
  %55 = vmatprep.subr.bf16.mxu0 0
  %56 = vmatpush1.bf16.msra.mxu0 0
  %57 = vmatprep.subr.bf16.mxu0 0
  %58 = vmatpush1.bf16.msra.mxu0 0
  %59 = vmatprep.subr.bf16.mxu0 0
  %60 = vmatpush1.bf16.msra.mxu0 0
  %61 = vmatprep.subr.bf16.mxu0 0
  %62 = vmatpush1.bf16.msra.mxu0 0
  %63 = vmatprep.subr.bf16.mxu0 0
  %64 = vmatpush1.bf16.msra.mxu0 0
  %65 = vmatprep.subr.bf16.mxu0 0
  %66 = vmatpush1.bf16.msra.mxu0 0
  %67 = vmatprep.subr.bf16.mxu0 0
  %68 = vmatpush1.bf16.msra.mxu0 0
  %69 = vmatprep.subr.bf16.mxu0 0
  %70 = vmatpush1.bf16.msra.mxu0 0
  %71 = vmatprep.subr.bf16.mxu0 0
  %72 = vmatpush1.bf16.msra.mxu0 0
  %73 = vmatprep.subr.bf16.mxu0 0
  %74 = vmatpush1.bf16.msra.mxu0 0
  %75 = vmatprep.subr.bf16.mxu0 0
  %76 = vmatpush1.bf16.msra.mxu0 0
  %77 = vmatprep.subr.bf16.mxu0 0
  %78 = vmatpush1.bf16.msra.mxu0 0
  %79 = vmatprep.subr.bf16.mxu0 0
  %80 = vmatpush1.bf16.msra.mxu0 0
  %81 = vmatprep.mubr.bf16.mxu0 0
  %82 = vmatmul.mubr.bf16.gmra.mrb[0].mxu0 %v47
  %v83 = vpop.f32.mrb[0].mxu0
  %v84 = vadd.f32 %v26, %v83
  %v85 = vpop.f32.mrb[0].mxu0
  %v86 = vpop.f32.mrb[0].mxu0
  %v87 = vadd.f32 %v26, %v86
  %v88 = vpop.f32.mrb[0].mxu0
  %89 = vdwg.mxu0
  %90 = vst [vmem:[%s3] sm:$0xff] %v84
  %91 = vst [vmem:[%s3 + $0x8] sm:$0xff] %v87
  // Predicated region
  $region14: #{seq2seq_forward.21} parent=0 // pred_check
    _
  $region15: #{seq2seq_forward.21} parent=0 // pred_check_branch
    %93 = sbr.rel (0) target = $region17
  $region16: #{seq2seq_forward.21} parent=0 // pred_region
    _
  $region17: #{seq2seq_forward.21} parent=0 // pred_fallthru
    _
  // Predicated region
  $region18: #{seq2seq_forward.21} parent=0 // pred_check
    _
  $region19: #{seq2seq_forward.21} parent=0 // pred_check_branch
    %95 = sbr.rel (0) target = $region21
  $region20: #{seq2seq_forward.21} parent=0 // pred_region
    _
  $region21: #{seq2seq_forward.21} parent=0 // pred_fallthru
    _

</llo_original>
